<compile_context>
chip_gen: v7x
topology: tpu7x:2x2x1
jax: 0.10.0
libtpu: 0.0.40
codegen_flags: <defaults>
</compile_context>

<pallas_src>
import functools
import math

import jax
import jax.numpy as jnp
from jax.experimental import pallas as pl
from jax.experimental.pallas import tpu as pltpu


# ----------------------------------------------------------------------------
# In-kernel math helpers (f32 elementwise)
# ----------------------------------------------------------------------------
_GELU_C = math.sqrt(2.0 / math.pi)


def _gelu(x):
    # TODO(synk): HF BERT uses exact erf-GELU; tanh approximation (~1e-3 close)
    # is used to avoid relying on an erf lowering in Mosaic.
    return 0.5 * x * (1.0 + jnp.tanh(_GELU_C * (x + 0.044715 * x * x * x)))


def _layernorm(x, g, b, eps=1e-12):
    mu = jnp.mean(x, axis=-1, keepdims=True)
    var = jnp.mean(jnp.square(x - mu), axis=-1, keepdims=True)
    return (x - mu) * jax.lax.rsqrt(var + eps) * g + b


# ----------------------------------------------------------------------------
# Fused whole-model kernel (grid axis = encoder layer)
# ----------------------------------------------------------------------------
def _make_bert_kernel(B, S, nh, hd):
    H = nh * hd
    M = B * S
    bf16 = jnp.bfloat16

    def kernel(we_ref, te_ref, pe_ref, eg_ref, eb_ref, mask_ref,
               qkv_w_ref, qkv_b_ref, ao_w_ref, ao_b_ref, ln1_g_ref, ln1_b_ref,
               i_w_ref, i_b_ref, o_w_ref, o_b_ref, ln2_g_ref, ln2_b_ref,
               pool_w_ref, pool_b_ref,
               out_ref, pooled_ref,
               h_scr):
        l = pl.program_id(0)
        n_layers = pl.num_programs(0)

        # ---- l == 0: fused embedding sum + embedding LayerNorm -------------
        @pl.when(l == 0)
        def _():
            pe = pe_ref[...]                                   # (S, H)
            pe_full = jnp.concatenate([pe] * B, axis=0)        # broadcast over batch
            e = we_ref[...] + te_ref[...] + pe_full            # (M, H)
            h_scr[...] = _layernorm(e, eg_ref[...], eb_ref[...])

        x = h_scr[...]                                          # (M, H) f32

        # ---- fused Q|K|V projection: one (M,H)x(H,3H) bf16 MXU matmul ------
        qkv = jnp.dot(x.astype(bf16), qkv_w_ref[...],
                      preferred_element_type=jnp.float32) + qkv_b_ref[...]
        mask = mask_ref[...]                                    # (B, S) additive

        # ---- multi-head self-attention, all values vreg-resident -----------
        # Statically unrolled (tiny B, nh); 1/sqrt(hd) already folded into W_q.
        ctx_parts = []
        for b in range(B):
            rows = qkv[b * S:(b + 1) * S]                       # (S, 3H)
            m_b = mask[b:b + 1, :]                              # (1, S)
            head_parts = []
            for h in range(nh):
                q = rows[:, h * hd:(h + 1) * hd]                # (S, hd)
                k = rows[:, H + h * hd:H + (h + 1) * hd]
                v = rows[:, 2 * H + h * hd:2 * H + (h + 1) * hd]
                # contract last dims -> no explicit transpose of k
                s = jax.lax.dot_general(
                    q.astype(bf16), k.astype(bf16),
                    (((1,), (1,)), ((), ())),
                    preferred_element_type=jnp.float32)         # (S, S)
                s = s + m_b
                s = s - jnp.max(s, axis=-1, keepdims=True)
                p = jnp.exp(s)
                p = p * pl.reciprocal(jnp.sum(p, axis=-1, keepdims=True),
                                      approx=False)
                head_parts.append(
                    jnp.dot(p.astype(bf16), v.astype(bf16),
                            preferred_element_type=jnp.float32))  # (S, hd)
            ctx_parts.append(jnp.concatenate(head_parts, axis=-1))  # (S, H)
        ctx = jnp.concatenate(ctx_parts, axis=0)                 # (M, H)

        # ---- attention output dense + residual + LayerNorm ------------------
        attn = jnp.dot(ctx.astype(bf16), ao_w_ref[...],
                       preferred_element_type=jnp.float32) + ao_b_ref[...]
        x1 = _layernorm(attn + x, ln1_g_ref[...], ln1_b_ref[...])

        # ---- FFN: dense + GELU + dense + residual + LayerNorm ---------------
        inter = _gelu(jnp.dot(x1.astype(bf16), i_w_ref[...],
                              preferred_element_type=jnp.float32) + i_b_ref[...])
        ffn = jnp.dot(inter.astype(bf16), o_w_ref[...],
                      preferred_element_type=jnp.float32) + o_b_ref[...]
        h_new = _layernorm(ffn + x1, ln2_g_ref[...], ln2_b_ref[...])

        h_scr[...] = h_new                                       # carry to layer l+1

        # ---- last layer: write hidden state + fused, batched pooler ---------
        @pl.when(l == n_layers - 1)
        def _():
            out_ref[...] = h_new
            # gather the B [CLS] rows (row b*S) into one (B, H) tile -> single
            # batched matmul + tanh + one dense store.
            cls = jnp.concatenate(
                [h_new[b * S:b * S + 1, :] for b in range(B)], axis=0)
            pooled_ref[...] = jnp.tanh(
                jnp.dot(cls.astype(bf16), pool_w_ref[...],
                        preferred_element_type=jnp.float32) + pool_b_ref[...])

    return kernel


# ----------------------------------------------------------------------------
# BlockSpec helpers
# ----------------------------------------------------------------------------
def _const_spec(shape):
    """Block = full array, same block every grid step (resident, loaded once)."""
    zeros = (0,) * len(shape)
    return pl.BlockSpec(tuple(shape), lambda l: zeros)


def _layer_spec(per_layer_shape):
    """Stacked (L, ...) weight: layer dim squeezed, block index follows grid l."""
    zeros = (0,) * len(per_layer_shape)
    return pl.BlockSpec((None,) + tuple(per_layer_shape), lambda l: (l,) + zeros)


# ----------------------------------------------------------------------------
# Model definition / parameters
# ----------------------------------------------------------------------------
class Config:
    vocab_size = 50
    type_vocab_size = 2
    max_position_embeddings = 16
    hidden_size = 32
    num_heads = 4
    head_dim = 8
    intermediate_size = 64
    num_layers = 2


def init_params(cfg, seed=0):
    """Checkpoint-like per-layer f32 parameters (deterministic)."""
    key = jax.random.PRNGKey(seed)
    scale = 0.02

    def nrm(k, shape):
        return scale * jax.random.normal(k, shape, dtype=jnp.float32)

    H, I = cfg.hidden_size, cfg.intermediate_size
    keys = iter(jax.random.split(key, 4 + cfg.num_layers * 4))
    p = {
        "word_emb": nrm(next(keys), (cfg.vocab_size, H)),
        "pos_emb": nrm(next(keys), (cfg.max_position_embeddings, H)),
        "type_emb": nrm(next(keys), (cfg.type_vocab_size, H)),
        "emb_ln_g": jnp.ones((1, H), jnp.float32),
        "emb_ln_b": jnp.zeros((1, H), jnp.float32),
        "pool_w": nrm(next(keys), (H, H)),
        "pool_b": jnp.zeros((1, H), jnp.float32),
        "layers": [],
    }
    for _ in range(cfg.num_layers):
        p["layers"].append({
            "qkv_w": nrm(next(keys), (H, 3 * H)),   # Q|K|V merged
            "qkv_b": jnp.zeros((1, 3 * H), jnp.float32),
            "ao_w": nrm(next(keys), (H, H)),
            "ao_b": jnp.zeros((1, H), jnp.float32),
            "ln1_g": jnp.ones((1, H), jnp.float32),
            "ln1_b": jnp.zeros((1, H), jnp.float32),
            "i_w": nrm(next(keys), (H, I)),
            "i_b": jnp.zeros((1, I), jnp.float32),
            "o_w": nrm(next(keys), (I, H)),
            "o_b": jnp.zeros((1, H), jnp.float32),
            "ln2_g": jnp.ones((1, H), jnp.float32),
            "ln2_b": jnp.zeros((1, H), jnp.float32),
        })
    return p


def pack_params(params, cfg):
    """Stack per-layer weights to (L, ...), fold 1/sqrt(hd) into the Q columns,
    cast MXU weights to bf16 (LayerNorm params / biases / embeddings stay f32)."""
    H = cfg.hidden_size
    scale = 1.0 / math.sqrt(cfg.head_dim)

    def stack(key):
        return jnp.stack([lyr[key] for lyr in params["layers"]], axis=0)

    qkv_w = stack("qkv_w")
    qkv_b = stack("qkv_b")
    qkv_w = qkv_w.at[:, :, :H].multiply(scale)   # fold attention scale into Q
    qkv_b = qkv_b.at[:, :, :H].multiply(scale)

    return {
        "word_emb": params["word_emb"],
        "pos_emb": params["pos_emb"],
        "type_emb": params["type_emb"],
        "emb_ln_g": params["emb_ln_g"],
        "emb_ln_b": params["emb_ln_b"],
        "qkv_w": qkv_w.astype(jnp.bfloat16),
        "qkv_b": qkv_b,
        "ao_w": stack("ao_w").astype(jnp.bfloat16),
        "ao_b": stack("ao_b"),
        "ln1_g": stack("ln1_g"),
        "ln1_b": stack("ln1_b"),
        "i_w": stack("i_w").astype(jnp.bfloat16),
        "i_b": stack("i_b"),
        "o_w": stack("o_w").astype(jnp.bfloat16),
        "o_b": stack("o_b"),
        "ln2_g": stack("ln2_g"),
        "ln2_b": stack("ln2_b"),
        "pool_w": params["pool_w"].astype(jnp.bfloat16),
        "pool_b": params["pool_b"],
    }


# ----------------------------------------------------------------------------
# Forward pass: embedding gathers in XLA, everything else in one pallas_call
# ----------------------------------------------------------------------------
def bert_forward(input_ids, attention_mask, token_type_ids, packed, cfg):
    B, S = input_ids.shape
    H, I = cfg.hidden_size, cfg.intermediate_size
    M = B * S
    L = cfg.num_layers

    # Classic BERT extended attention mask: (1 - mask) * -10000, additive.
    mask_add = (1.0 - attention_mask.astype(jnp.float32)) * -10000.0   # (B, S)

    # Embedding gathers stay in XLA (tiny gathers); sum/LN happens in-kernel.
    we = jnp.take(packed["word_emb"], input_ids.reshape(-1), axis=0)    # (M, H)
    te = jnp.take(packed["type_emb"], token_type_ids.reshape(-1), axis=0)
    pe = packed["pos_emb"][:S]                                          # (S, H)

    kernel = _make_bert_kernel(B, S, cfg.num_heads, cfg.head_dim)

    inputs = [
        we, te, pe, packed["emb_ln_g"], packed["emb_ln_b"], mask_add,
        packed["qkv_w"], packed["qkv_b"], packed["ao_w"], packed["ao_b"],
        packed["ln1_g"], packed["ln1_b"], packed["i_w"], packed["i_b"],
        packed["o_w"], packed["o_b"], packed["ln2_g"], packed["ln2_b"],
        packed["pool_w"], packed["pool_b"],
    ]
    in_specs = [
        _const_spec((M, H)), _const_spec((M, H)), _const_spec((S, H)),
        _const_spec((1, H)), _const_spec((1, H)), _const_spec((B, S)),
        _layer_spec((H, 3 * H)), _layer_spec((1, 3 * H)),
        _layer_spec((H, H)), _layer_spec((1, H)),
        _layer_spec((1, H)), _layer_spec((1, H)),
        _layer_spec((H, I)), _layer_spec((1, I)),
        _layer_spec((I, H)), _layer_spec((1, H)),
        _layer_spec((1, H)), _layer_spec((1, H)),
        _const_spec((H, H)), _const_spec((1, H)),
    ]
    out_shape = (jax.ShapeDtypeStruct((M, H), jnp.float32),
                 jax.ShapeDtypeStruct((B, H), jnp.float32))
    out_specs = (_const_spec((M, H)), _const_spec((B, H)))

    hidden, pooled = pl.pallas_call(
        kernel,
        grid=(L,),
        in_specs=in_specs,
        out_specs=out_specs,
        out_shape=out_shape,
        scratch_shapes=[pltpu.VMEM((M, H), jnp.float32)],   # layer-carried hidden
        compiler_params=pltpu.CompilerParams(
            dimension_semantics=("arbitrary",)),             # layers are sequential
    )(*inputs)

    return hidden.reshape(B, S, H), pooled


# ----------------------------------------------------------------------------
# Main
# ----------------------------------------------------------------------------
if __name__ == "__main__":
    cfg = Config()
    B, S = 2, 8

    key = jax.random.PRNGKey(0)
    k_ids, _ = jax.random.split(key)
    input_ids = jax.random.randint(k_ids, (B, S), 0, cfg.vocab_size, dtype=jnp.int32)
    token_type_ids = jnp.concatenate(
        [jnp.zeros((B, S // 2), jnp.int32), jnp.ones((B, S // 2), jnp.int32)], axis=1)
    attention_mask = jnp.array(
        [[1, 1, 1, 1, 1, 1, 1, 1],
         [1, 1, 1, 1, 1, 0, 0, 0]], dtype=jnp.int32)

    params = init_params(cfg, seed=0)
    packed = pack_params(params, cfg)

    fwd = jax.jit(functools.partial(bert_forward, cfg=cfg))
    last_hidden_state, pooler_output = fwd(
        input_ids, attention_mask, token_type_ids, packed)
    jax.block_until_ready((last_hidden_state, pooler_output))

    assert last_hidden_state.shape == (B, S, cfg.hidden_size)
    assert pooler_output.shape == (B, cfg.hidden_size)
    assert bool(jnp.all(jnp.isfinite(last_hidden_state)))
    assert bool(jnp.all(jnp.isfinite(pooler_output)))
    print("KERNEL_OK")
</pallas_src>

<mosaic_0001>
module attributes {stable_mosaic.version = 11 : i64} {
  func.func @kernel(%arg0: i32, %arg1: memref<16x32xf32, #tpu.memory_space<vmem>>, %arg2: memref<16x32xf32, #tpu.memory_space<vmem>>, %arg3: memref<8x32xf32, #tpu.memory_space<vmem>>, %arg4: memref<1x32xf32, #tpu.memory_space<vmem>>, %arg5: memref<1x32xf32, #tpu.memory_space<vmem>>, %arg6: memref<2x8xf32, #tpu.memory_space<vmem>>, %arg7: memref<1x32x96xbf16, #tpu.memory_space<vmem>>, %arg8: memref<1x1x96xf32, #tpu.memory_space<vmem>>, %arg9: memref<1x32x32xbf16, #tpu.memory_space<vmem>>, %arg10: memref<1x1x32xf32, #tpu.memory_space<vmem>>, %arg11: memref<1x1x32xf32, #tpu.memory_space<vmem>>, %arg12: memref<1x1x32xf32, #tpu.memory_space<vmem>>, %arg13: memref<1x32x64xbf16, #tpu.memory_space<vmem>>, %arg14: memref<1x1x64xf32, #tpu.memory_space<vmem>>, %arg15: memref<1x64x32xbf16, #tpu.memory_space<vmem>>, %arg16: memref<1x1x32xf32, #tpu.memory_space<vmem>>, %arg17: memref<1x1x32xf32, #tpu.memory_space<vmem>>, %arg18: memref<1x1x32xf32, #tpu.memory_space<vmem>>, %arg19: memref<32x32xbf16, #tpu.memory_space<vmem>>, %arg20: memref<1x32xf32, #tpu.memory_space<vmem>>, %arg21: memref<16x32xf32, #tpu.memory_space<vmem>>, %arg22: memref<2x32xf32, #tpu.memory_space<vmem>>, %arg23: memref<16x32xf32, #tpu.memory_space<vmem>>) attributes {dimension_semantics = [#tpu.dimension_semantics<arbitrary>], iteration_bounds = array<i64: 2>, scalar_prefetch = 0 : i64, scratch_operands = 1 : i64, tpu.core_type = #tpu.core_type<tc>, window_params = [{pipeline_mode = #tpu.pipeline_mode<synchronous>, transform_indices = @transform_0, window_bounds = array<i64: 16, 32>}, {pipeline_mode = #tpu.pipeline_mode<synchronous>, transform_indices = @transform_1, window_bounds = array<i64: 16, 32>}, {pipeline_mode = #tpu.pipeline_mode<synchronous>, transform_indices = @transform_2, window_bounds = array<i64: 8, 32>}, {pipeline_mode = #tpu.pipeline_mode<synchronous>, transform_indices = @transform_3, window_bounds = array<i64: 1, 32>}, {pipeline_mode = #tpu.pipeline_mode<synchronous>, transform_indices = @transform_4, window_bounds = array<i64: 1, 32>}, {pipeline_mode = #tpu.pipeline_mode<synchronous>, transform_indices = @transform_5, window_bounds = array<i64: 2, 8>}, {transform_indices = @transform_6, window_bounds = array<i64: 1, 32, 96>}, {transform_indices = @transform_7, window_bounds = array<i64: 1, 1, 96>}, {transform_indices = @transform_8, window_bounds = array<i64: 1, 32, 32>}, {transform_indices = @transform_9, window_bounds = array<i64: 1, 1, 32>}, {transform_indices = @transform_10, window_bounds = array<i64: 1, 1, 32>}, {transform_indices = @transform_11, window_bounds = array<i64: 1, 1, 32>}, {transform_indices = @transform_12, window_bounds = array<i64: 1, 32, 64>}, {transform_indices = @transform_13, window_bounds = array<i64: 1, 1, 64>}, {transform_indices = @transform_14, window_bounds = array<i64: 1, 64, 32>}, {transform_indices = @transform_15, window_bounds = array<i64: 1, 1, 32>}, {transform_indices = @transform_16, window_bounds = array<i64: 1, 1, 32>}, {transform_indices = @transform_17, window_bounds = array<i64: 1, 1, 32>}, {pipeline_mode = #tpu.pipeline_mode<synchronous>, transform_indices = @transform_18, window_bounds = array<i64: 32, 32>}, {pipeline_mode = #tpu.pipeline_mode<synchronous>, transform_indices = @transform_19, window_bounds = array<i64: 1, 32>}, {pipeline_mode = #tpu.pipeline_mode<synchronous>, transform_indices = @transform_20, window_bounds = array<i64: 16, 32>}, {pipeline_mode = #tpu.pipeline_mode<synchronous>, transform_indices = @transform_21, window_bounds = array<i64: 2, 32>}]} {
    %c0_i32 = arith.constant 0 : i32
    %0 = arith.cmpi eq, %arg0, %c0_i32 : i32
    %1 = arith.extui %0 : i1 to i32
    %c0_i32_0 = arith.constant 0 : i32
    %2 = arith.cmpi ne, %1, %c0_i32_0 : i32
    scf.if %2 {
      %c0_92 = arith.constant 0 : index
      %c0_93 = arith.constant 0 : index
      %283 = vector.load %arg3[%c0_92, %c0_93] : memref<8x32xf32, #tpu.memory_space<vmem>>, vector<8x32xf32>
      %284 = tpu.concatenate %283, %283 in 0 : vector<8x32xf32>, vector<8x32xf32> -> vector<16x32xf32>
      %c0_94 = arith.constant 0 : index
      %c0_95 = arith.constant 0 : index
      %285 = vector.load %arg1[%c0_94, %c0_95] : memref<16x32xf32, #tpu.memory_space<vmem>>, vector<16x32xf32>
      %c0_96 = arith.constant 0 : index
      %c0_97 = arith.constant 0 : index
      %286 = vector.load %arg2[%c0_96, %c0_97] : memref<16x32xf32, #tpu.memory_space<vmem>>, vector<16x32xf32>
      %287 = arith.addf %285, %286 : vector<16x32xf32>
      %288 = arith.addf %287, %284 : vector<16x32xf32>
      %c0_98 = arith.constant 0 : index
      %c0_99 = arith.constant 0 : index
      %289 = vector.load %arg4[%c0_98, %c0_99] : memref<1x32xf32, #tpu.memory_space<vmem>>, vector<1x32xf32>
      %c0_100 = arith.constant 0 : index
      %c0_101 = arith.constant 0 : index
      %290 = vector.load %arg5[%c0_100, %c0_101] : memref<1x32xf32, #tpu.memory_space<vmem>>, vector<1x32xf32>
      %cst_102 = arith.constant dense<0.000000e+00> : vector<16xf32>
      %291 = vector.multi_reduction <add>, %288, %cst_102 [1] : vector<16x32xf32> to vector<16xf32>
      %292 = vector.shape_cast %291 : vector<16xf32> to vector<16x1xf32>
      %cst_103 = arith.constant 3.200000e+01 : f32
      %293 = vector.broadcast %cst_103 : f32 to vector<16x1xf32>
      %294 = arith.divf %292, %293 : vector<16x1xf32>
      %295 = vector.broadcast %294 : vector<16x1xf32> to vector<16x32xf32>
      %296 = arith.subf %288, %295 : vector<16x32xf32>
      %297 = arith.mulf %296, %296 : vector<16x32xf32>
      %cst_104 = arith.constant dense<0.000000e+00> : vector<16xf32>
      %298 = vector.multi_reduction <add>, %297, %cst_104 [1] : vector<16x32xf32> to vector<16xf32>
      %299 = vector.shape_cast %298 : vector<16xf32> to vector<16x1xf32>
      %cst_105 = arith.constant 3.200000e+01 : f32
      %300 = vector.broadcast %cst_105 : f32 to vector<16x1xf32>
      %301 = arith.divf %299, %300 : vector<16x1xf32>
      %302 = vector.broadcast %294 : vector<16x1xf32> to vector<16x32xf32>
      %303 = arith.subf %288, %302 : vector<16x32xf32>
      %cst_106 = arith.constant 9.99999996E-13 : f32
      %304 = vector.broadcast %cst_106 : f32 to vector<16x1xf32>
      %305 = arith.addf %301, %304 : vector<16x1xf32>
      %306 = math.rsqrt %305 : vector<16x1xf32>
      %307 = vector.broadcast %306 : vector<16x1xf32> to vector<16x32xf32>
      %308 = arith.mulf %303, %307 : vector<16x32xf32>
      %309 = vector.broadcast %289 : vector<1x32xf32> to vector<16x32xf32>
      %310 = arith.mulf %308, %309 : vector<16x32xf32>
      %311 = vector.broadcast %290 : vector<1x32xf32> to vector<16x32xf32>
      %312 = arith.addf %310, %311 : vector<16x32xf32>
      %c0_107 = arith.constant 0 : index
      %c0_108 = arith.constant 0 : index
      %313 = vector.load %arg23[%c0_107, %c0_108] : memref<16x32xf32, #tpu.memory_space<vmem>>, vector<16x32xf32>
      tpu.vector_store %arg23[%c0_107, %c0_108], %312 {strides = array<i32>} : memref<16x32xf32, #tpu.memory_space<vmem>>, vector<16x32xf32>,
    } else {
    }
    %c0 = arith.constant 0 : index
    %c0_1 = arith.constant 0 : index
    %3 = vector.load %arg23[%c0, %c0_1] : memref<16x32xf32, #tpu.memory_space<vmem>>, vector<16x32xf32>
    %4 = arith.truncf %3 : vector<16x32xf32> to vector<16x32xbf16>
    %c0_2 = arith.constant 0 : index
    %c0_3 = arith.constant 0 : index
    %c0_4 = arith.constant 0 : index
    %5 = vector.load %arg7[%c0_2, %c0_3, %c0_4] : memref<1x32x96xbf16, #tpu.memory_space<vmem>>, vector<1x32x96xbf16>
    %6 = vector.shape_cast %5 : vector<1x32x96xbf16> to vector<32x96xbf16>
    %cst = arith.constant dense<0.000000e+00> : vector<16x96xf32>
    %7 = tpu.matmul %4, %6, %cst {dimension_numbers = #tpu.dot_dimension_numbers<[1], [0], [0], [1], [0, 0, 1, 1], [], []>} : vector<16x32xbf16>, vector<32x96xbf16>, vector<16x96xf32> -> vector<16x96xf32>
    %c0_5 = arith.constant 0 : index
    %c0_6 = arith.constant 0 : index
    %c0_7 = arith.constant 0 : index
    %8 = vector.load %arg8[%c0_5, %c0_6, %c0_7] : memref<1x1x96xf32, #tpu.memory_space<vmem>>, vector<1x1x96xf32>
    %9 = vector.shape_cast %8 : vector<1x1x96xf32> to vector<1x96xf32>
    %10 = vector.broadcast %9 : vector<1x96xf32> to vector<16x96xf32>
    %11 = arith.addf %7, %10 : vector<16x96xf32>
    %c0_8 = arith.constant 0 : index
    %c0_9 = arith.constant 0 : index
    %12 = vector.load %arg6[%c0_8, %c0_9] : memref<2x8xf32, #tpu.memory_space<vmem>>, vector<2x8xf32>
    %13 = vector.extract_strided_slice %11 {offsets = [0, 0], sizes = [8, 96], strides = [1, 1]} : vector<16x96xf32> to vector<8x96xf32>
    %14 = vector.extract_strided_slice %12 {offsets = [0, 0], sizes = [1, 8], strides = [1, 1]} : vector<2x8xf32> to vector<1x8xf32>
    %15 = vector.extract_strided_slice %13 {offsets = [0, 0], sizes = [8, 8], strides = [1, 1]} : vector<8x96xf32> to vector<8x8xf32>
    %16 = vector.extract_strided_slice %13 {offsets = [0, 32], sizes = [8, 8], strides = [1, 1]} : vector<8x96xf32> to vector<8x8xf32>
    %17 = vector.extract_strided_slice %13 {offsets = [0, 64], sizes = [8, 8], strides = [1, 1]} : vector<8x96xf32> to vector<8x8xf32>
    %18 = arith.truncf %15 : vector<8x8xf32> to vector<8x8xbf16>
    %19 = arith.truncf %16 : vector<8x8xf32> to vector<8x8xbf16>
    %cst_10 = arith.constant dense<0.000000e+00> : vector<8x8xf32>
    %20 = tpu.matmul %18, %19, %cst_10 {dimension_numbers = #tpu.dot_dimension_numbers<[1], [1], [0], [0], [0, 0, 1, 0], [], []>} : vector<8x8xbf16>, vector<8x8xbf16>, vector<8x8xf32> -> vector<8x8xf32>
    %21 = vector.broadcast %14 : vector<1x8xf32> to vector<8x8xf32>
    %22 = arith.addf %20, %21 : vector<8x8xf32>
    %cst_11 = arith.constant dense<0xFF800000> : vector<8xf32>
    %23 = vector.multi_reduction <maximumf>, %22, %cst_11 [1] : vector<8x8xf32> to vector<8xf32>
    %24 = vector.shape_cast %23 : vector<8xf32> to vector<8x1xf32>
    %25 = vector.broadcast %24 : vector<8x1xf32> to vector<8x8xf32>
    %26 = arith.subf %22, %25 : vector<8x8xf32>
    %27 = math.exp %26 : vector<8x8xf32>
    %cst_12 = arith.constant dense<0.000000e+00> : vector<8xf32>
    %28 = vector.multi_reduction <add>, %27, %cst_12 [1] : vector<8x8xf32> to vector<8xf32>
    %29 = vector.shape_cast %28 : vector<8xf32> to vector<8x1xf32>
    %30 = tpu.reciprocal %29 : vector<8x1xf32> -> vector<8x1xf32>
    %31 = vector.broadcast %30 : vector<8x1xf32> to vector<8x8xf32>
    %32 = arith.mulf %27, %31 : vector<8x8xf32>
    %33 = arith.truncf %32 : vector<8x8xf32> to vector<8x8xbf16>
    %34 = arith.truncf %17 : vector<8x8xf32> to vector<8x8xbf16>
    %cst_13 = arith.constant dense<0.000000e+00> : vector<8x8xf32>
    %35 = tpu.matmul %33, %34, %cst_13 {dimension_numbers = #tpu.dot_dimension_numbers<[1], [0], [0], [1], [0, 0, 1, 1], [], []>} : vector<8x8xbf16>, vector<8x8xbf16>, vector<8x8xf32> -> vector<8x8xf32>
    %36 = vector.extract_strided_slice %13 {offsets = [0, 8], sizes = [8, 8], strides = [1, 1]} : vector<8x96xf32> to vector<8x8xf32>
    %37 = vector.extract_strided_slice %13 {offsets = [0, 40], sizes = [8, 8], strides = [1, 1]} : vector<8x96xf32> to vector<8x8xf32>
    %38 = vector.extract_strided_slice %13 {offsets = [0, 72], sizes = [8, 8], strides = [1, 1]} : vector<8x96xf32> to vector<8x8xf32>
    %39 = arith.truncf %36 : vector<8x8xf32> to vector<8x8xbf16>
    %40 = arith.truncf %37 : vector<8x8xf32> to vector<8x8xbf16>
    %cst_14 = arith.constant dense<0.000000e+00> : vector<8x8xf32>
    %41 = tpu.matmul %39, %40, %cst_14 {dimension_numbers = #tpu.dot_dimension_numbers<[1], [1], [0], [0], [0, 0, 1, 0], [], []>} : vector<8x8xbf16>, vector<8x8xbf16>, vector<8x8xf32> -> vector<8x8xf32>
    %42 = vector.broadcast %14 : vector<1x8xf32> to vector<8x8xf32>
    %43 = arith.addf %41, %42 : vector<8x8xf32>
    %cst_15 = arith.constant dense<0xFF800000> : vector<8xf32>
    %44 = vector.multi_reduction <maximumf>, %43, %cst_15 [1] : vector<8x8xf32> to vector<8xf32>
    %45 = vector.shape_cast %44 : vector<8xf32> to vector<8x1xf32>
    %46 = vector.broadcast %45 : vector<8x1xf32> to vector<8x8xf32>
    %47 = arith.subf %43, %46 : vector<8x8xf32>
    %48 = math.exp %47 : vector<8x8xf32>
    %cst_16 = arith.constant dense<0.000000e+00> : vector<8xf32>
    %49 = vector.multi_reduction <add>, %48, %cst_16 [1] : vector<8x8xf32> to vector<8xf32>
    %50 = vector.shape_cast %49 : vector<8xf32> to vector<8x1xf32>
    %51 = tpu.reciprocal %50 : vector<8x1xf32> -> vector<8x1xf32>
    %52 = vector.broadcast %51 : vector<8x1xf32> to vector<8x8xf32>
    %53 = arith.mulf %48, %52 : vector<8x8xf32>
    %54 = arith.truncf %53 : vector<8x8xf32> to vector<8x8xbf16>
    %55 = arith.truncf %38 : vector<8x8xf32> to vector<8x8xbf16>
    %cst_17 = arith.constant dense<0.000000e+00> : vector<8x8xf32>
    %56 = tpu.matmul %54, %55, %cst_17 {dimension_numbers = #tpu.dot_dimension_numbers<[1], [0], [0], [1], [0, 0, 1, 1], [], []>} : vector<8x8xbf16>, vector<8x8xbf16>, vector<8x8xf32> -> vector<8x8xf32>
    %57 = vector.extract_strided_slice %13 {offsets = [0, 16], sizes = [8, 8], strides = [1, 1]} : vector<8x96xf32> to vector<8x8xf32>
    %58 = vector.extract_strided_slice %13 {offsets = [0, 48], sizes = [8, 8], strides = [1, 1]} : vector<8x96xf32> to vector<8x8xf32>
    %59 = vector.extract_strided_slice %13 {offsets = [0, 80], sizes = [8, 8], strides = [1, 1]} : vector<8x96xf32> to vector<8x8xf32>
    %60 = arith.truncf %57 : vector<8x8xf32> to vector<8x8xbf16>
    %61 = arith.truncf %58 : vector<8x8xf32> to vector<8x8xbf16>
    %cst_18 = arith.constant dense<0.000000e+00> : vector<8x8xf32>
    %62 = tpu.matmul %60, %61, %cst_18 {dimension_numbers = #tpu.dot_dimension_numbers<[1], [1], [0], [0], [0, 0, 1, 0], [], []>} : vector<8x8xbf16>, vector<8x8xbf16>, vector<8x8xf32> -> vector<8x8xf32>
    %63 = vector.broadcast %14 : vector<1x8xf32> to vector<8x8xf32>
    %64 = arith.addf %62, %63 : vector<8x8xf32>
    %cst_19 = arith.constant dense<0xFF800000> : vector<8xf32>
    %65 = vector.multi_reduction <maximumf>, %64, %cst_19 [1] : vector<8x8xf32> to vector<8xf32>
    %66 = vector.shape_cast %65 : vector<8xf32> to vector<8x1xf32>
    %67 = vector.broadcast %66 : vector<8x1xf32> to vector<8x8xf32>
    %68 = arith.subf %64, %67 : vector<8x8xf32>
    %69 = math.exp %68 : vector<8x8xf32>
    %cst_20 = arith.constant dense<0.000000e+00> : vector<8xf32>
    %70 = vector.multi_reduction <add>, %69, %cst_20 [1] : vector<8x8xf32> to vector<8xf32>
    %71 = vector.shape_cast %70 : vector<8xf32> to vector<8x1xf32>
    %72 = tpu.reciprocal %71 : vector<8x1xf32> -> vector<8x1xf32>
    %73 = vector.broadcast %72 : vector<8x1xf32> to vector<8x8xf32>
    %74 = arith.mulf %69, %73 : vector<8x8xf32>
    %75 = arith.truncf %74 : vector<8x8xf32> to vector<8x8xbf16>
    %76 = arith.truncf %59 : vector<8x8xf32> to vector<8x8xbf16>
    %cst_21 = arith.constant dense<0.000000e+00> : vector<8x8xf32>
    %77 = tpu.matmul %75, %76, %cst_21 {dimension_numbers = #tpu.dot_dimension_numbers<[1], [0], [0], [1], [0, 0, 1, 1], [], []>} : vector<8x8xbf16>, vector<8x8xbf16>, vector<8x8xf32> -> vector<8x8xf32>
    %78 = vector.extract_strided_slice %13 {offsets = [0, 24], sizes = [8, 8], strides = [1, 1]} : vector<8x96xf32> to vector<8x8xf32>
    %79 = vector.extract_strided_slice %13 {offsets = [0, 56], sizes = [8, 8], strides = [1, 1]} : vector<8x96xf32> to vector<8x8xf32>
    %80 = vector.extract_strided_slice %13 {offsets = [0, 88], sizes = [8, 8], strides = [1, 1]} : vector<8x96xf32> to vector<8x8xf32>
    %81 = arith.truncf %78 : vector<8x8xf32> to vector<8x8xbf16>
    %82 = arith.truncf %79 : vector<8x8xf32> to vector<8x8xbf16>
    %cst_22 = arith.constant dense<0.000000e+00> : vector<8x8xf32>
    %83 = tpu.matmul %81, %82, %cst_22 {dimension_numbers = #tpu.dot_dimension_numbers<[1], [1], [0], [0], [0, 0, 1, 0], [], []>} : vector<8x8xbf16>, vector<8x8xbf16>, vector<8x8xf32> -> vector<8x8xf32>
    %84 = vector.broadcast %14 : vector<1x8xf32> to vector<8x8xf32>
    %85 = arith.addf %83, %84 : vector<8x8xf32>
    %cst_23 = arith.constant dense<0xFF800000> : vector<8xf32>
    %86 = vector.multi_reduction <maximumf>, %85, %cst_23 [1] : vector<8x8xf32> to vector<8xf32>
    %87 = vector.shape_cast %86 : vector<8xf32> to vector<8x1xf32>
    %88 = vector.broadcast %87 : vector<8x1xf32> to vector<8x8xf32>
    %89 = arith.subf %85, %88 : vector<8x8xf32>
    %90 = math.exp %89 : vector<8x8xf32>
    %cst_24 = arith.constant dense<0.000000e+00> : vector<8xf32>
    %91 = vector.multi_reduction <add>, %90, %cst_24 [1] : vector<8x8xf32> to vector<8xf32>
    %92 = vector.shape_cast %91 : vector<8xf32> to vector<8x1xf32>
    %93 = tpu.reciprocal %92 : vector<8x1xf32> -> vector<8x1xf32>
    %94 = vector.broadcast %93 : vector<8x1xf32> to vector<8x8xf32>
    %95 = arith.mulf %90, %94 : vector<8x8xf32>
    %96 = arith.truncf %95 : vector<8x8xf32> to vector<8x8xbf16>
    %97 = arith.truncf %80 : vector<8x8xf32> to vector<8x8xbf16>
    %cst_25 = arith.constant dense<0.000000e+00> : vector<8x8xf32>
    %98 = tpu.matmul %96, %97, %cst_25 {dimension_numbers = #tpu.dot_dimension_numbers<[1], [0], [0], [1], [0, 0, 1, 1], [], []>} : vector<8x8xbf16>, vector<8x8xbf16>, vector<8x8xf32> -> vector<8x8xf32>
    %99 = tpu.concatenate %35, %56, %77, %98 in 1 : vector<8x8xf32>, vector<8x8xf32>, vector<8x8xf32>, vector<8x8xf32> -> vector<8x32xf32>
    %100 = vector.extract_strided_slice %11 {offsets = [8, 0], sizes = [8, 96], strides = [1, 1]} : vector<16x96xf32> to vector<8x96xf32>
    %101 = vector.extract_strided_slice %12 {offsets = [1, 0], sizes = [1, 8], strides = [1, 1]} : vector<2x8xf32> to vector<1x8xf32>
    %102 = vector.extract_strided_slice %100 {offsets = [0, 0], sizes = [8, 8], strides = [1, 1]} : vector<8x96xf32> to vector<8x8xf32>
    %103 = vector.extract_strided_slice %100 {offsets = [0, 32], sizes = [8, 8], strides = [1, 1]} : vector<8x96xf32> to vector<8x8xf32>
    %104 = vector.extract_strided_slice %100 {offsets = [0, 64], sizes = [8, 8], strides = [1, 1]} : vector<8x96xf32> to vector<8x8xf32>
    %105 = arith.truncf %102 : vector<8x8xf32> to vector<8x8xbf16>
    %106 = arith.truncf %103 : vector<8x8xf32> to vector<8x8xbf16>
    %cst_26 = arith.constant dense<0.000000e+00> : vector<8x8xf32>
    %107 = tpu.matmul %105, %106, %cst_26 {dimension_numbers = #tpu.dot_dimension_numbers<[1], [1], [0], [0], [0, 0, 1, 0], [], []>} : vector<8x8xbf16>, vector<8x8xbf16>, vector<8x8xf32> -> vector<8x8xf32>
    %108 = vector.broadcast %101 : vector<1x8xf32> to vector<8x8xf32>
    %109 = arith.addf %107, %108 : vector<8x8xf32>
    %cst_27 = arith.constant dense<0xFF800000> : vector<8xf32>
    %110 = vector.multi_reduction <maximumf>, %109, %cst_27 [1] : vector<8x8xf32> to vector<8xf32>
    %111 = vector.shape_cast %110 : vector<8xf32> to vector<8x1xf32>
    %112 = vector.broadcast %111 : vector<8x1xf32> to vector<8x8xf32>
    %113 = arith.subf %109, %112 : vector<8x8xf32>
    %114 = math.exp %113 : vector<8x8xf32>
    %cst_28 = arith.constant dense<0.000000e+00> : vector<8xf32>
    %115 = vector.multi_reduction <add>, %114, %cst_28 [1] : vector<8x8xf32> to vector<8xf32>
    %116 = vector.shape_cast %115 : vector<8xf32> to vector<8x1xf32>
    %117 = tpu.reciprocal %116 : vector<8x1xf32> -> vector<8x1xf32>
    %118 = vector.broadcast %117 : vector<8x1xf32> to vector<8x8xf32>
    %119 = arith.mulf %114, %118 : vector<8x8xf32>
    %120 = arith.truncf %119 : vector<8x8xf32> to vector<8x8xbf16>
    %121 = arith.truncf %104 : vector<8x8xf32> to vector<8x8xbf16>
    %cst_29 = arith.constant dense<0.000000e+00> : vector<8x8xf32>
    %122 = tpu.matmul %120, %121, %cst_29 {dimension_numbers = #tpu.dot_dimension_numbers<[1], [0], [0], [1], [0, 0, 1, 1], [], []>} : vector<8x8xbf16>, vector<8x8xbf16>, vector<8x8xf32> -> vector<8x8xf32>
    %123 = vector.extract_strided_slice %100 {offsets = [0, 8], sizes = [8, 8], strides = [1, 1]} : vector<8x96xf32> to vector<8x8xf32>
    %124 = vector.extract_strided_slice %100 {offsets = [0, 40], sizes = [8, 8], strides = [1, 1]} : vector<8x96xf32> to vector<8x8xf32>
    %125 = vector.extract_strided_slice %100 {offsets = [0, 72], sizes = [8, 8], strides = [1, 1]} : vector<8x96xf32> to vector<8x8xf32>
    %126 = arith.truncf %123 : vector<8x8xf32> to vector<8x8xbf16>
    %127 = arith.truncf %124 : vector<8x8xf32> to vector<8x8xbf16>
    %cst_30 = arith.constant dense<0.000000e+00> : vector<8x8xf32>
    %128 = tpu.matmul %126, %127, %cst_30 {dimension_numbers = #tpu.dot_dimension_numbers<[1], [1], [0], [0], [0, 0, 1, 0], [], []>} : vector<8x8xbf16>, vector<8x8xbf16>, vector<8x8xf32> -> vector<8x8xf32>
    %129 = vector.broadcast %101 : vector<1x8xf32> to vector<8x8xf32>
    %130 = arith.addf %128, %129 : vector<8x8xf32>
    %cst_31 = arith.constant dense<0xFF800000> : vector<8xf32>
    %131 = vector.multi_reduction <maximumf>, %130, %cst_31 [1] : vector<8x8xf32> to vector<8xf32>
    %132 = vector.shape_cast %131 : vector<8xf32> to vector<8x1xf32>
    %133 = vector.broadcast %132 : vector<8x1xf32> to vector<8x8xf32>
    %134 = arith.subf %130, %133 : vector<8x8xf32>
    %135 = math.exp %134 : vector<8x8xf32>
    %cst_32 = arith.constant dense<0.000000e+00> : vector<8xf32>
    %136 = vector.multi_reduction <add>, %135, %cst_32 [1] : vector<8x8xf32> to vector<8xf32>
    %137 = vector.shape_cast %136 : vector<8xf32> to vector<8x1xf32>
    %138 = tpu.reciprocal %137 : vector<8x1xf32> -> vector<8x1xf32>
    %139 = vector.broadcast %138 : vector<8x1xf32> to vector<8x8xf32>
    %140 = arith.mulf %135, %139 : vector<8x8xf32>
    %141 = arith.truncf %140 : vector<8x8xf32> to vector<8x8xbf16>
    %142 = arith.truncf %125 : vector<8x8xf32> to vector<8x8xbf16>
    %cst_33 = arith.constant dense<0.000000e+00> : vector<8x8xf32>
    %143 = tpu.matmul %141, %142, %cst_33 {dimension_numbers = #tpu.dot_dimension_numbers<[1], [0], [0], [1], [0, 0, 1, 1], [], []>} : vector<8x8xbf16>, vector<8x8xbf16>, vector<8x8xf32> -> vector<8x8xf32>
    %144 = vector.extract_strided_slice %100 {offsets = [0, 16], sizes = [8, 8], strides = [1, 1]} : vector<8x96xf32> to vector<8x8xf32>
    %145 = vector.extract_strided_slice %100 {offsets = [0, 48], sizes = [8, 8], strides = [1, 1]} : vector<8x96xf32> to vector<8x8xf32>
    %146 = vector.extract_strided_slice %100 {offsets = [0, 80], sizes = [8, 8], strides = [1, 1]} : vector<8x96xf32> to vector<8x8xf32>
    %147 = arith.truncf %144 : vector<8x8xf32> to vector<8x8xbf16>
    %148 = arith.truncf %145 : vector<8x8xf32> to vector<8x8xbf16>
    %cst_34 = arith.constant dense<0.000000e+00> : vector<8x8xf32>
    %149 = tpu.matmul %147, %148, %cst_34 {dimension_numbers = #tpu.dot_dimension_numbers<[1], [1], [0], [0], [0, 0, 1, 0], [], []>} : vector<8x8xbf16>, vector<8x8xbf16>, vector<8x8xf32> -> vector<8x8xf32>
    %150 = vector.broadcast %101 : vector<1x8xf32> to vector<8x8xf32>
    %151 = arith.addf %149, %150 : vector<8x8xf32>
    %cst_35 = arith.constant dense<0xFF800000> : vector<8xf32>
    %152 = vector.multi_reduction <maximumf>, %151, %cst_35 [1] : vector<8x8xf32> to vector<8xf32>
    %153 = vector.shape_cast %152 : vector<8xf32> to vector<8x1xf32>
    %154 = vector.broadcast %153 : vector<8x1xf32> to vector<8x8xf32>
    %155 = arith.subf %151, %154 : vector<8x8xf32>
    %156 = math.exp %155 : vector<8x8xf32>
    %cst_36 = arith.constant dense<0.000000e+00> : vector<8xf32>
    %157 = vector.multi_reduction <add>, %156, %cst_36 [1] : vector<8x8xf32> to vector<8xf32>
    %158 = vector.shape_cast %157 : vector<8xf32> to vector<8x1xf32>
    %159 = tpu.reciprocal %158 : vector<8x1xf32> -> vector<8x1xf32>
    %160 = vector.broadcast %159 : vector<8x1xf32> to vector<8x8xf32>
    %161 = arith.mulf %156, %160 : vector<8x8xf32>
    %162 = arith.truncf %161 : vector<8x8xf32> to vector<8x8xbf16>
    %163 = arith.truncf %146 : vector<8x8xf32> to vector<8x8xbf16>
    %cst_37 = arith.constant dense<0.000000e+00> : vector<8x8xf32>
    %164 = tpu.matmul %162, %163, %cst_37 {dimension_numbers = #tpu.dot_dimension_numbers<[1], [0], [0], [1], [0, 0, 1, 1], [], []>} : vector<8x8xbf16>, vector<8x8xbf16>, vector<8x8xf32> -> vector<8x8xf32>
    %165 = vector.extract_strided_slice %100 {offsets = [0, 24], sizes = [8, 8], strides = [1, 1]} : vector<8x96xf32> to vector<8x8xf32>
    %166 = vector.extract_strided_slice %100 {offsets = [0, 56], sizes = [8, 8], strides = [1, 1]} : vector<8x96xf32> to vector<8x8xf32>
    %167 = vector.extract_strided_slice %100 {offsets = [0, 88], sizes = [8, 8], strides = [1, 1]} : vector<8x96xf32> to vector<8x8xf32>
    %168 = arith.truncf %165 : vector<8x8xf32> to vector<8x8xbf16>
    %169 = arith.truncf %166 : vector<8x8xf32> to vector<8x8xbf16>
    %cst_38 = arith.constant dense<0.000000e+00> : vector<8x8xf32>
    %170 = tpu.matmul %168, %169, %cst_38 {dimension_numbers = #tpu.dot_dimension_numbers<[1], [1], [0], [0], [0, 0, 1, 0], [], []>} : vector<8x8xbf16>, vector<8x8xbf16>, vector<8x8xf32> -> vector<8x8xf32>
    %171 = vector.broadcast %101 : vector<1x8xf32> to vector<8x8xf32>
    %172 = arith.addf %170, %171 : vector<8x8xf32>
    %cst_39 = arith.constant dense<0xFF800000> : vector<8xf32>
    %173 = vector.multi_reduction <maximumf>, %172, %cst_39 [1] : vector<8x8xf32> to vector<8xf32>
    %174 = vector.shape_cast %173 : vector<8xf32> to vector<8x1xf32>
    %175 = vector.broadcast %174 : vector<8x1xf32> to vector<8x8xf32>
    %176 = arith.subf %172, %175 : vector<8x8xf32>
    %177 = math.exp %176 : vector<8x8xf32>
    %cst_40 = arith.constant dense<0.000000e+00> : vector<8xf32>
    %178 = vector.multi_reduction <add>, %177, %cst_40 [1] : vector<8x8xf32> to vector<8xf32>
    %179 = vector.shape_cast %178 : vector<8xf32> to vector<8x1xf32>
    %180 = tpu.reciprocal %179 : vector<8x1xf32> -> vector<8x1xf32>
    %181 = vector.broadcast %180 : vector<8x1xf32> to vector<8x8xf32>
    %182 = arith.mulf %177, %181 : vector<8x8xf32>
    %183 = arith.truncf %182 : vector<8x8xf32> to vector<8x8xbf16>
    %184 = arith.truncf %167 : vector<8x8xf32> to vector<8x8xbf16>
    %cst_41 = arith.constant dense<0.000000e+00> : vector<8x8xf32>
    %185 = tpu.matmul %183, %184, %cst_41 {dimension_numbers = #tpu.dot_dimension_numbers<[1], [0], [0], [1], [0, 0, 1, 1], [], []>} : vector<8x8xbf16>, vector<8x8xbf16>, vector<8x8xf32> -> vector<8x8xf32>
    %186 = tpu.concatenate %122, %143, %164, %185 in 1 : vector<8x8xf32>, vector<8x8xf32>, vector<8x8xf32>, vector<8x8xf32> -> vector<8x32xf32>
    %187 = tpu.concatenate %99, %186 in 0 : vector<8x32xf32>, vector<8x32xf32> -> vector<16x32xf32>
    %188 = arith.truncf %187 : vector<16x32xf32> to vector<16x32xbf16>
    %c0_42 = arith.constant 0 : index
    %c0_43 = arith.constant 0 : index
    %c0_44 = arith.constant 0 : index
    %189 = vector.load %arg9[%c0_42, %c0_43, %c0_44] : memref<1x32x32xbf16, #tpu.memory_space<vmem>>, vector<1x32x32xbf16>
    %190 = vector.shape_cast %189 : vector<1x32x32xbf16> to vector<32x32xbf16>
    %cst_45 = arith.constant dense<0.000000e+00> : vector<16x32xf32>
    %191 = tpu.matmul %188, %190, %cst_45 {dimension_numbers = #tpu.dot_dimension_numbers<[1], [0], [0], [1], [0, 0, 1, 1], [], []>} : vector<16x32xbf16>, vector<32x32xbf16>, vector<16x32xf32> -> vector<16x32xf32>
    %c0_46 = arith.constant 0 : index
    %c0_47 = arith.constant 0 : index
    %c0_48 = arith.constant 0 : index
    %192 = vector.load %arg10[%c0_46, %c0_47, %c0_48] : memref<1x1x32xf32, #tpu.memory_space<vmem>>, vector<1x1x32xf32>
    %193 = vector.shape_cast %192 : vector<1x1x32xf32> to vector<1x32xf32>
    %194 = vector.broadcast %193 : vector<1x32xf32> to vector<16x32xf32>
    %195 = arith.addf %191, %194 : vector<16x32xf32>
    %196 = arith.addf %195, %3 : vector<16x32xf32>
    %c0_49 = arith.constant 0 : index
    %c0_50 = arith.constant 0 : index
    %c0_51 = arith.constant 0 : index
    %197 = vector.load %arg11[%c0_49, %c0_50, %c0_51] : memref<1x1x32xf32, #tpu.memory_space<vmem>>, vector<1x1x32xf32>
    %198 = vector.shape_cast %197 : vector<1x1x32xf32> to vector<1x32xf32>
    %c0_52 = arith.constant 0 : index
    %c0_53 = arith.constant 0 : index
    %c0_54 = arith.constant 0 : index
    %199 = vector.load %arg12[%c0_52, %c0_53, %c0_54] : memref<1x1x32xf32, #tpu.memory_space<vmem>>, vector<1x1x32xf32>
    %200 = vector.shape_cast %199 : vector<1x1x32xf32> to vector<1x32xf32>
    %cst_55 = arith.constant dense<0.000000e+00> : vector<16xf32>
    %201 = vector.multi_reduction <add>, %196, %cst_55 [1] : vector<16x32xf32> to vector<16xf32>
    %202 = vector.shape_cast %201 : vector<16xf32> to vector<16x1xf32>
    %cst_56 = arith.constant 3.200000e+01 : f32
    %203 = vector.broadcast %cst_56 : f32 to vector<16x1xf32>
    %204 = arith.divf %202, %203 : vector<16x1xf32>
    %205 = vector.broadcast %204 : vector<16x1xf32> to vector<16x32xf32>
    %206 = arith.subf %196, %205 : vector<16x32xf32>
    %207 = arith.mulf %206, %206 : vector<16x32xf32>
    %cst_57 = arith.constant dense<0.000000e+00> : vector<16xf32>
    %208 = vector.multi_reduction <add>, %207, %cst_57 [1] : vector<16x32xf32> to vector<16xf32>
    %209 = vector.shape_cast %208 : vector<16xf32> to vector<16x1xf32>
    %cst_58 = arith.constant 3.200000e+01 : f32
    %210 = vector.broadcast %cst_58 : f32 to vector<16x1xf32>
    %211 = arith.divf %209, %210 : vector<16x1xf32>
    %212 = vector.broadcast %204 : vector<16x1xf32> to vector<16x32xf32>
    %213 = arith.subf %196, %212 : vector<16x32xf32>
    %cst_59 = arith.constant 9.99999996E-13 : f32
    %214 = vector.broadcast %cst_59 : f32 to vector<16x1xf32>
    %215 = arith.addf %211, %214 : vector<16x1xf32>
    %216 = math.rsqrt %215 : vector<16x1xf32>
    %217 = vector.broadcast %216 : vector<16x1xf32> to vector<16x32xf32>
    %218 = arith.mulf %213, %217 : vector<16x32xf32>
    %219 = vector.broadcast %198 : vector<1x32xf32> to vector<16x32xf32>
    %220 = arith.mulf %218, %219 : vector<16x32xf32>
    %221 = vector.broadcast %200 : vector<1x32xf32> to vector<16x32xf32>
    %222 = arith.addf %220, %221 : vector<16x32xf32>
    %223 = arith.truncf %222 : vector<16x32xf32> to vector<16x32xbf16>
    %c0_60 = arith.constant 0 : index
    %c0_61 = arith.constant 0 : index
    %c0_62 = arith.constant 0 : index
    %224 = vector.load %arg13[%c0_60, %c0_61, %c0_62] : memref<1x32x64xbf16, #tpu.memory_space<vmem>>, vector<1x32x64xbf16>
    %225 = vector.shape_cast %224 : vector<1x32x64xbf16> to vector<32x64xbf16>
    %cst_63 = arith.constant dense<0.000000e+00> : vector<16x64xf32>
    %226 = tpu.matmul %223, %225, %cst_63 {dimension_numbers = #tpu.dot_dimension_numbers<[1], [0], [0], [1], [0, 0, 1, 1], [], []>} : vector<16x32xbf16>, vector<32x64xbf16>, vector<16x64xf32> -> vector<16x64xf32>
    %c0_64 = arith.constant 0 : index
    %c0_65 = arith.constant 0 : index
    %c0_66 = arith.constant 0 : index
    %227 = vector.load %arg14[%c0_64, %c0_65, %c0_66] : memref<1x1x64xf32, #tpu.memory_space<vmem>>, vector<1x1x64xf32>
    %228 = vector.shape_cast %227 : vector<1x1x64xf32> to vector<1x64xf32>
    %229 = vector.broadcast %228 : vector<1x64xf32> to vector<16x64xf32>
    %230 = arith.addf %226, %229 : vector<16x64xf32>
    %cst_67 = arith.constant 5.000000e-01 : f32
    %231 = vector.broadcast %cst_67 : f32 to vector<16x64xf32>
    %232 = arith.mulf %231, %230 : vector<16x64xf32>
    %cst_68 = arith.constant 4.471500e-02 : f32
    %233 = vector.broadcast %cst_68 : f32 to vector<16x64xf32>
    %234 = arith.mulf %233, %230 : vector<16x64xf32>
    %235 = arith.mulf %234, %230 : vector<16x64xf32>
    %236 = arith.mulf %235, %230 : vector<16x64xf32>
    %237 = arith.addf %230, %236 : vector<16x64xf32>
    %cst_69 = arith.constant 0.797884583 : f32
    %238 = vector.broadcast %cst_69 : f32 to vector<16x64xf32>
    %239 = arith.mulf %238, %237 : vector<16x64xf32>
    %240 = math.tanh %239 : vector<16x64xf32>
    %cst_70 = arith.constant 1.000000e+00 : f32
    %241 = vector.broadcast %cst_70 : f32 to vector<16x64xf32>
    %242 = arith.addf %241, %240 : vector<16x64xf32>
    %243 = arith.mulf %232, %242 : vector<16x64xf32>
    %244 = arith.truncf %243 : vector<16x64xf32> to vector<16x64xbf16>
    %c0_71 = arith.constant 0 : index
    %c0_72 = arith.constant 0 : index
    %c0_73 = arith.constant 0 : index
    %245 = vector.load %arg15[%c0_71, %c0_72, %c0_73] : memref<1x64x32xbf16, #tpu.memory_space<vmem>>, vector<1x64x32xbf16>
    %246 = vector.shape_cast %245 : vector<1x64x32xbf16> to vector<64x32xbf16>
    %cst_74 = arith.constant dense<0.000000e+00> : vector<16x32xf32>
    %247 = tpu.matmul %244, %246, %cst_74 {dimension_numbers = #tpu.dot_dimension_numbers<[1], [0], [0], [1], [0, 0, 1, 1], [], []>} : vector<16x64xbf16>, vector<64x32xbf16>, vector<16x32xf32> -> vector<16x32xf32>
    %c0_75 = arith.constant 0 : index
    %c0_76 = arith.constant 0 : index
    %c0_77 = arith.constant 0 : index
    %248 = vector.load %arg16[%c0_75, %c0_76, %c0_77] : memref<1x1x32xf32, #tpu.memory_space<vmem>>, vector<1x1x32xf32>
    %249 = vector.shape_cast %248 : vector<1x1x32xf32> to vector<1x32xf32>
    %250 = vector.broadcast %249 : vector<1x32xf32> to vector<16x32xf32>
    %251 = arith.addf %247, %250 : vector<16x32xf32>
    %252 = arith.addf %251, %222 : vector<16x32xf32>
    %c0_78 = arith.constant 0 : index
    %c0_79 = arith.constant 0 : index
    %c0_80 = arith.constant 0 : index
    %253 = vector.load %arg17[%c0_78, %c0_79, %c0_80] : memref<1x1x32xf32, #tpu.memory_space<vmem>>, vector<1x1x32xf32>
    %254 = vector.shape_cast %253 : vector<1x1x32xf32> to vector<1x32xf32>
    %c0_81 = arith.constant 0 : index
    %c0_82 = arith.constant 0 : index
    %c0_83 = arith.constant 0 : index
    %255 = vector.load %arg18[%c0_81, %c0_82, %c0_83] : memref<1x1x32xf32, #tpu.memory_space<vmem>>, vector<1x1x32xf32>
    %256 = vector.shape_cast %255 : vector<1x1x32xf32> to vector<1x32xf32>
    %cst_84 = arith.constant dense<0.000000e+00> : vector<16xf32>
    %257 = vector.multi_reduction <add>, %252, %cst_84 [1] : vector<16x32xf32> to vector<16xf32>
    %258 = vector.shape_cast %257 : vector<16xf32> to vector<16x1xf32>
    %cst_85 = arith.constant 3.200000e+01 : f32
    %259 = vector.broadcast %cst_85 : f32 to vector<16x1xf32>
    %260 = arith.divf %258, %259 : vector<16x1xf32>
    %261 = vector.broadcast %260 : vector<16x1xf32> to vector<16x32xf32>
    %262 = arith.subf %252, %261 : vector<16x32xf32>
    %263 = arith.mulf %262, %262 : vector<16x32xf32>
    %cst_86 = arith.constant dense<0.000000e+00> : vector<16xf32>
    %264 = vector.multi_reduction <add>, %263, %cst_86 [1] : vector<16x32xf32> to vector<16xf32>
    %265 = vector.shape_cast %264 : vector<16xf32> to vector<16x1xf32>
    %cst_87 = arith.constant 3.200000e+01 : f32
    %266 = vector.broadcast %cst_87 : f32 to vector<16x1xf32>
    %267 = arith.divf %265, %266 : vector<16x1xf32>
    %268 = vector.broadcast %260 : vector<16x1xf32> to vector<16x32xf32>
    %269 = arith.subf %252, %268 : vector<16x32xf32>
    %cst_88 = arith.constant 9.99999996E-13 : f32
    %270 = vector.broadcast %cst_88 : f32 to vector<16x1xf32>
    %271 = arith.addf %267, %270 : vector<16x1xf32>
    %272 = math.rsqrt %271 : vector<16x1xf32>
    %273 = vector.broadcast %272 : vector<16x1xf32> to vector<16x32xf32>
    %274 = arith.mulf %269, %273 : vector<16x32xf32>
    %275 = vector.broadcast %254 : vector<1x32xf32> to vector<16x32xf32>
    %276 = arith.mulf %274, %275 : vector<16x32xf32>
    %277 = vector.broadcast %256 : vector<1x32xf32> to vector<16x32xf32>
    %278 = arith.addf %276, %277 : vector<16x32xf32>
    %c0_89 = arith.constant 0 : index
    %c0_90 = arith.constant 0 : index
    %279 = vector.load %arg23[%c0_89, %c0_90] : memref<16x32xf32, #tpu.memory_space<vmem>>, vector<16x32xf32>
    tpu.vector_store %arg23[%c0_89, %c0_90], %278 {strides = array<i32>} : memref<16x32xf32, #tpu.memory_space<vmem>>, vector<16x32xf32>,
    %c1_i32 = arith.constant 1 : i32
    %280 = arith.cmpi eq, %arg0, %c1_i32 : i32
    %281 = arith.extui %280 : i1 to i32
    %c0_i32_91 = arith.constant 0 : i32
    %282 = arith.cmpi ne, %281, %c0_i32_91 : i32
    scf.if %282 {
      %c0_92 = arith.constant 0 : index
      %c0_93 = arith.constant 0 : index
      %283 = vector.load %arg21[%c0_92, %c0_93] : memref<16x32xf32, #tpu.memory_space<vmem>>, vector<16x32xf32>
      tpu.vector_store %arg21[%c0_92, %c0_93], %278 {strides = array<i32>} : memref<16x32xf32, #tpu.memory_space<vmem>>, vector<16x32xf32>,
      %284 = vector.extract_strided_slice %278 {offsets = [0, 0], sizes = [1, 32], strides = [1, 1]} : vector<16x32xf32> to vector<1x32xf32>
      %285 = vector.extract_strided_slice %278 {offsets = [8, 0], sizes = [1, 32], strides = [1, 1]} : vector<16x32xf32> to vector<1x32xf32>
      %286 = tpu.concatenate %284, %285 in 0 : vector<1x32xf32>, vector<1x32xf32> -> vector<2x32xf32>
      %287 = arith.truncf %286 : vector<2x32xf32> to vector<2x32xbf16>
      %c0_94 = arith.constant 0 : index
      %c0_95 = arith.constant 0 : index
      %288 = vector.load %arg19[%c0_94, %c0_95] : memref<32x32xbf16, #tpu.memory_space<vmem>>, vector<32x32xbf16>
      %cst_96 = arith.constant dense<0.000000e+00> : vector<2x32xf32>
      %289 = tpu.matmul %287, %288, %cst_96 {dimension_numbers = #tpu.dot_dimension_numbers<[1], [0], [0], [1], [0, 0, 1, 1], [], []>} : vector<2x32xbf16>, vector<32x32xbf16>, vector<2x32xf32> -> vector<2x32xf32>
      %c0_97 = arith.constant 0 : index
      %c0_98 = arith.constant 0 : index
      %290 = vector.load %arg20[%c0_97, %c0_98] : memref<1x32xf32, #tpu.memory_space<vmem>>, vector<1x32xf32>
      %291 = vector.broadcast %290 : vector<1x32xf32> to vector<2x32xf32>
      %292 = arith.addf %289, %291 : vector<2x32xf32>
      %293 = math.tanh %292 : vector<2x32xf32>
      %c0_99 = arith.constant 0 : index
      %c0_100 = arith.constant 0 : index
      %294 = vector.load %arg22[%c0_99, %c0_100] : memref<2x32xf32, #tpu.memory_space<vmem>>, vector<2x32xf32>
      tpu.vector_store %arg22[%c0_99, %c0_100], %293 {strides = array<i32>} : memref<2x32xf32, #tpu.memory_space<vmem>>, vector<2x32xf32>,
    } else {
    }
    return
  }
  func.func @transform_0(%arg0: i32) -> (i32, i32) {
    %c0_i32 = arith.constant 0 : i32
    %c0_i32_0 = arith.constant 0 : i32
    %c0_i32_1 = arith.constant 0 : i32
    return %c0_i32, %c0_i32_0 : i32, i32
  }
  func.func @transform_1(%arg0: i32) -> (i32, i32) {
    %c0_i32 = arith.constant 0 : i32
    %c0_i32_0 = arith.constant 0 : i32
    %c0_i32_1 = arith.constant 0 : i32
    return %c0_i32, %c0_i32_0 : i32, i32
  }
  func.func @transform_2(%arg0: i32) -> (i32, i32) {
    %c0_i32 = arith.constant 0 : i32
    %c0_i32_0 = arith.constant 0 : i32
    %c0_i32_1 = arith.constant 0 : i32
    return %c0_i32, %c0_i32_0 : i32, i32
  }
  func.func @transform_3(%arg0: i32) -> (i32, i32) {
    %c0_i32 = arith.constant 0 : i32
    %c0_i32_0 = arith.constant 0 : i32
    %c0_i32_1 = arith.constant 0 : i32
    return %c0_i32, %c0_i32_0 : i32, i32
  }
  func.func @transform_4(%arg0: i32) -> (i32, i32) {
    %c0_i32 = arith.constant 0 : i32
    %c0_i32_0 = arith.constant 0 : i32
    %c0_i32_1 = arith.constant 0 : i32
    return %c0_i32, %c0_i32_0 : i32, i32
  }
  func.func @transform_5(%arg0: i32) -> (i32, i32) {
    %c0_i32 = arith.constant 0 : i32
    %c0_i32_0 = arith.constant 0 : i32
    %c0_i32_1 = arith.constant 0 : i32
    return %c0_i32, %c0_i32_0 : i32, i32
  }
  func.func @transform_6(%arg0: i32) -> (i32, i32, i32) {
    %c0_i32 = arith.constant 0 : i32
    %c0_i32_0 = arith.constant 0 : i32
    %c0_i32_1 = arith.constant 0 : i32
    return %arg0, %c0_i32, %c0_i32_0 : i32, i32, i32
  }
  func.func @transform_7(%arg0: i32) -> (i32, i32, i32) {
    %c0_i32 = arith.constant 0 : i32
    %c0_i32_0 = arith.constant 0 : i32
    %c0_i32_1 = arith.constant 0 : i32
    return %arg0, %c0_i32, %c0_i32_0 : i32, i32, i32
  }
  func.func @transform_8(%arg0: i32) -> (i32, i32, i32) {
    %c0_i32 = arith.constant 0 : i32
    %c0_i32_0 = arith.constant 0 : i32
    %c0_i32_1 = arith.constant 0 : i32
    return %arg0, %c0_i32, %c0_i32_0 : i32, i32, i32
  }
  func.func @transform_9(%arg0: i32) -> (i32, i32, i32) {
    %c0_i32 = arith.constant 0 : i32
    %c0_i32_0 = arith.constant 0 : i32
    %c0_i32_1 = arith.constant 0 : i32
    return %arg0, %c0_i32, %c0_i32_0 : i32, i32, i32
  }
  func.func @transform_10(%arg0: i32) -> (i32, i32, i32) {
    %c0_i32 = arith.constant 0 : i32
    %c0_i32_0 = arith.constant 0 : i32
    %c0_i32_1 = arith.constant 0 : i32
    return %arg0, %c0_i32, %c0_i32_0 : i32, i32, i32
  }
  func.func @transform_11(%arg0: i32) -> (i32, i32, i32) {
    %c0_i32 = arith.constant 0 : i32
    %c0_i32_0 = arith.constant 0 : i32
    %c0_i32_1 = arith.constant 0 : i32
    return %arg0, %c0_i32, %c0_i32_0 : i32, i32, i32
  }
  func.func @transform_12(%arg0: i32) -> (i32, i32, i32) {
    %c0_i32 = arith.constant 0 : i32
    %c0_i32_0 = arith.constant 0 : i32
    %c0_i32_1 = arith.constant 0 : i32
    return %arg0, %c0_i32, %c0_i32_0 : i32, i32, i32
  }
  func.func @transform_13(%arg0: i32) -> (i32, i32, i32) {
    %c0_i32 = arith.constant 0 : i32
    %c0_i32_0 = arith.constant 0 : i32
    %c0_i32_1 = arith.constant 0 : i32
    return %arg0, %c0_i32, %c0_i32_0 : i32, i32, i32
  }
  func.func @transform_14(%arg0: i32) -> (i32, i32, i32) {
    %c0_i32 = arith.constant 0 : i32
    %c0_i32_0 = arith.constant 0 : i32
    %c0_i32_1 = arith.constant 0 : i32
    return %arg0, %c0_i32, %c0_i32_0 : i32, i32, i32
  }
  func.func @transform_15(%arg0: i32) -> (i32, i32, i32) {
    %c0_i32 = arith.constant 0 : i32
    %c0_i32_0 = arith.constant 0 : i32
    %c0_i32_1 = arith.constant 0 : i32
    return %arg0, %c0_i32, %c0_i32_0 : i32, i32, i32
  }
  func.func @transform_16(%arg0: i32) -> (i32, i32, i32) {
    %c0_i32 = arith.constant 0 : i32
    %c0_i32_0 = arith.constant 0 : i32
    %c0_i32_1 = arith.constant 0 : i32
    return %arg0, %c0_i32, %c0_i32_0 : i32, i32, i32
  }
  func.func @transform_17(%arg0: i32) -> (i32, i32, i32) {
    %c0_i32 = arith.constant 0 : i32
    %c0_i32_0 = arith.constant 0 : i32
    %c0_i32_1 = arith.constant 0 : i32
    return %arg0, %c0_i32, %c0_i32_0 : i32, i32, i32
  }
  func.func @transform_18(%arg0: i32) -> (i32, i32) {
    %c0_i32 = arith.constant 0 : i32
    %c0_i32_0 = arith.constant 0 : i32
    %c0_i32_1 = arith.constant 0 : i32
    return %c0_i32, %c0_i32_0 : i32, i32
  }
  func.func @transform_19(%arg0: i32) -> (i32, i32) {
    %c0_i32 = arith.constant 0 : i32
    %c0_i32_0 = arith.constant 0 : i32
    %c0_i32_1 = arith.constant 0 : i32
    return %c0_i32, %c0_i32_0 : i32, i32
  }
  func.func @transform_20(%arg0: i32) -> (i32, i32) {
    %c0_i32 = arith.constant 0 : i32
    %c0_i32_0 = arith.constant 0 : i32
    %c0_i32_1 = arith.constant 0 : i32
    return %c0_i32, %c0_i32_0 : i32, i32
  }
  func.func @transform_21(%arg0: i32) -> (i32, i32) {
    %c0_i32 = arith.constant 0 : i32
    %c0_i32_0 = arith.constant 0 : i32
    %c0_i32_1 = arith.constant 0 : i32
    return %c0_i32, %c0_i32_0 : i32, i32
  }
}

</mosaic_0001>

<llo_original>
// kernel: bert_forward.1
$region0: #{bert_forward.1}
  #allocation0 [shape = 'u32[]', space=smem, size = 0x4, offset = 0x4, fixed_abs, tag = 'smem constant byte address 0x4 - core index']
  #allocation1 [shape = 'u32[144,128]{1,0:T(1,128)}', space=vmem, size = 0x12000, scoped, tag = 'internal scratch']
  #allocation2 [shape = 'f32[16,32]{1,0:T(8,128)}', space=vmem, size = 0x2000, scoped, tag = 'scratch operand']
  %s0 = inlined_call_operand.vmem [shape: f32[16,32], index: 0, kind: input, shape index: {}]
  %s1 = inlined_call_operand.vmem [shape: f32[16,32], index: 1, kind: input, shape index: {}]
  %s2 = inlined_call_operand.vmem [shape: f32[8,32], index: 2, kind: input, shape index: {}]
  %s3 = inlined_call_operand.vmem [shape: f32[1,32], index: 3, kind: input, shape index: {}]
  %s4 = inlined_call_operand.vmem [shape: f32[1,32], index: 4, kind: input, shape index: {}]
  %s5 = inlined_call_operand.vmem [shape: f32[2,8], index: 5, kind: input, shape index: {}]
  %s6 = inlined_call_operand.vmem [shape: bf16[2,32,96], index: 6, kind: input, shape index: {}]
  %s7 = inlined_call_operand.vmem [shape: f32[2,1,96], index: 7, kind: input, shape index: {}]
  %s8 = inlined_call_operand.vmem [shape: bf16[2,32,32], index: 8, kind: input, shape index: {}]
  %s9 = inlined_call_operand.vmem [shape: f32[2,1,32], index: 9, kind: input, shape index: {}]
  %s10 = inlined_call_operand.vmem [shape: f32[2,1,32], index: 10, kind: input, shape index: {}]
  %s11 = inlined_call_operand.vmem [shape: f32[2,1,32], index: 11, kind: input, shape index: {}]
  %s12 = inlined_call_operand.vmem [shape: bf16[2,32,64], index: 12, kind: input, shape index: {}]
  %s13 = inlined_call_operand.vmem [shape: f32[2,1,64], index: 13, kind: input, shape index: {}]
  %s14 = inlined_call_operand.vmem [shape: bf16[2,64,32], index: 14, kind: input, shape index: {}]
  %s15 = inlined_call_operand.vmem [shape: f32[2,1,32], index: 15, kind: input, shape index: {}]
  %s16 = inlined_call_operand.vmem [shape: f32[2,1,32], index: 16, kind: input, shape index: {}]
  %s17 = inlined_call_operand.vmem [shape: f32[2,1,32], index: 17, kind: input, shape index: {}]
  %s18 = inlined_call_operand.vmem [shape: bf16[32,32], index: 18, kind: input, shape index: {}]
  %s19 = inlined_call_operand.vmem [shape: f32[1,32], index: 19, kind: input, shape index: {}]
  %s20 = inlined_call_operand.hbm [shape: f32[16,32], index: 20, kind: output, shape index: {0}]
  %s21 = inlined_call_operand.hbm [shape: f32[2,32], index: 21, kind: output, shape index: {1}]
  %22 = xla_tuple %s20, %s21
  %s23 = sld [smem:[#allocation0]]
  $region129: #{bert_forward.1} parent=0
    _
  %s25 = ssub.s32 1, %s23
  %s26 = scalar_select 0, %s25, %s23
  $region1: #{bert_forward.1} parent=0
    #allocation3 [shape = 'u8[8192]{0}', space=vmem, size = 0x2000, scoped, tag = 'output window, operand 0, single buffered']
    #allocation4 [shape = 's32[2]{0}', space=sflag, size = 0x8, scoped, tag = 'scoped memory for bert_forward.1']
    #allocation5 [shape = 'u8[1024]{0}', space=vmem, size = 0x400, scoped, tag = 'output window, operand 1, single buffered']
    #allocation6 [shape = 's32[1]{0}', space=sflag, size = 0x4, scoped, tag = 'scoped memory for bert_forward.1']
    %27 = vsyncpa [#allocation4], 0
    %28 = vsyncpa [#allocation6], 0
    loop: start=0, step=1, limit=4
    $region2: #{bert_forward.1} parent=1 // loop_pre_header
      _
    $region3: #{bert_forward.1} parent=1 // loop_header
      %s30 = sphi 0, %s34
      %p31 = scmp.ge.s32.totalorder %s30, 4
      %s38 = sphi 0, %s38
      %s40 = sphi 0, %s38
      %s41 = sphi 0, %s40
      %s55 = sphi 0, %s41
      %s59 = sphi 0, %s59
      %s61 = sphi 0, %s59
      %s62 = sphi 0, %s61
      %s76 = sphi 0, %s62
      %s80 = sphi 0, %s80
      %s82 = sphi 0, %s80
      %s83 = sphi 0, %s82
      %s97 = sphi 0, %s83
      %s101 = sphi 0, %s101
      %s103 = sphi 0, %s101
      %s104 = sphi 0, %s103
      %s118 = sphi 0, %s104
      %s122 = sphi 0, %s122
      %s124 = sphi 0, %s122
      %s125 = sphi 0, %s124
      %s139 = sphi 0, %s125
      %s143 = sphi 0, %s143
      %s145 = sphi 0, %s143
      %s146 = sphi 0, %s145
      %s160 = sphi 0, %s146
      %s166 = sphi 0, %s168
      %s169 = sphi 0, %s166
      %s170 = sphi 0, %s169
      %s186 = sphi 0, %s170
      %s192 = sphi 0, %s194
      %s195 = sphi 0, %s192
      %s196 = sphi 0, %s195
      %s212 = sphi 0, %s196
      %s218 = sphi 0, %s220
      %s221 = sphi 0, %s218
      %s222 = sphi 0, %s221
      %s238 = sphi 0, %s222
      %s244 = sphi 0, %s246
      %s247 = sphi 0, %s244
      %s248 = sphi 0, %s247
      %s264 = sphi 0, %s248
      %s270 = sphi 0, %s272
      %s273 = sphi 0, %s270
      %s274 = sphi 0, %s273
      %s290 = sphi 0, %s274
      %s296 = sphi 0, %s298
      %s299 = sphi 0, %s296
      %s300 = sphi 0, %s299
      %s316 = sphi 0, %s300
      %s322 = sphi 0, %s324
      %s325 = sphi 0, %s322
      %s326 = sphi 0, %s325
      %s342 = sphi 0, %s326
      %s348 = sphi 0, %s350
      %s351 = sphi 0, %s348
      %s352 = sphi 0, %s351
      %s368 = sphi 0, %s352
      %s374 = sphi 0, %s376
      %s377 = sphi 0, %s374
      %s378 = sphi 0, %s377
      %s394 = sphi 0, %s378
      %s400 = sphi 0, %s402
      %s403 = sphi 0, %s400
      %s404 = sphi 0, %s403
      %s420 = sphi 0, %s404
      %s426 = sphi 0, %s428
      %s429 = sphi 0, %s426
      %s430 = sphi 0, %s429
      %s446 = sphi 0, %s430
      %s452 = sphi 0, %s454
      %s455 = sphi 0, %s452
      %s456 = sphi 0, %s455
      %s472 = sphi 0, %s456
      %s476 = sphi 0, %s476
      %s478 = sphi 0, %s476
      %s479 = sphi 0, %s478
      %s493 = sphi 0, %s479
      %s497 = sphi 0, %s497
      %s499 = sphi 0, %s497
      %s500 = sphi 0, %s499
      %s514 = sphi 0, %s500
      %s518 = sphi 0, %s518
      %s520 = sphi 0, %s518
      %s521 = sphi 0, %s520
      %s535 = sphi 0, %s521
      %s539 = sphi 0, %s539
      %s541 = sphi 0, %s539
      %s542 = sphi 0, %s541
      %s556 = sphi 0, %s542
    $region4: #{bert_forward.1} parent=1 // loop_header_branch
      %33 = sbr.rel (%p31) target = $region8
    $region5: #{bert_forward.1} parent=1 // loop_body
      %s35 = ssub.s32 %s30, 1
      %s36 = ssub.s32 %s30, 2
      %s37 = sadd.s32 %s30, 1
      %s39 = sadd.s32 %s38, 1
      %p42 = scmp.eq.s32.totalorder %s30, 1
      %p43 = scmp.ne.s32.totalorder %s38, %s40
      %p44 = scmp.eq.s32.totalorder %s30, 0
      %p45 = por %p43, %p44
      %p46 = scmp.ne.s32.totalorder %s38, %s40
      %p47 = scmp.eq.s32.totalorder %s35, 1
      %p48 = por %p46, %p47
      %p49 = scmp.ne.s32.totalorder %s40, %s41
      %p50 = scmp.eq.s32.totalorder %s35, 0
      %p51 = por %p49, %p50
      %p52 = scmp.ne.s32.totalorder %s40, %s41
      %p53 = scmp.eq.s32.totalorder %s36, 1
      %p54 = por %p52, %p53
      %p56 = scmp.ne.s32.totalorder %s41, %s55
      %p57 = scmp.eq.s32.totalorder %s36, 0
      %p58 = por %p56, %p57
      %s60 = sadd.s32 %s59, 1
      %p63 = scmp.eq.s32.totalorder %s30, 1
      %p64 = scmp.ne.s32.totalorder %s59, %s61
      %p65 = scmp.eq.s32.totalorder %s30, 0
      %p66 = por %p64, %p65
      %p67 = scmp.ne.s32.totalorder %s59, %s61
      %p68 = scmp.eq.s32.totalorder %s35, 1
      %p69 = por %p67, %p68
      %p70 = scmp.ne.s32.totalorder %s61, %s62
      %p71 = scmp.eq.s32.totalorder %s35, 0
      %p72 = por %p70, %p71
      %p73 = scmp.ne.s32.totalorder %s61, %s62
      %p74 = scmp.eq.s32.totalorder %s36, 1
      %p75 = por %p73, %p74
      %p77 = scmp.ne.s32.totalorder %s62, %s76
      %p78 = scmp.eq.s32.totalorder %s36, 0
      %p79 = por %p77, %p78
      %s81 = sadd.s32 %s80, 1
      %p84 = scmp.eq.s32.totalorder %s30, 1
      %p85 = scmp.ne.s32.totalorder %s80, %s82
      %p86 = scmp.eq.s32.totalorder %s30, 0
      %p87 = por %p85, %p86
      %p88 = scmp.ne.s32.totalorder %s80, %s82
      %p89 = scmp.eq.s32.totalorder %s35, 1
      %p90 = por %p88, %p89
      %p91 = scmp.ne.s32.totalorder %s82, %s83
      %p92 = scmp.eq.s32.totalorder %s35, 0
      %p93 = por %p91, %p92
      %p94 = scmp.ne.s32.totalorder %s82, %s83
      %p95 = scmp.eq.s32.totalorder %s36, 1
      %p96 = por %p94, %p95
      %p98 = scmp.ne.s32.totalorder %s83, %s97
      %p99 = scmp.eq.s32.totalorder %s36, 0
      %p100 = por %p98, %p99
      %s102 = sadd.s32 %s101, 1
      %p105 = scmp.eq.s32.totalorder %s30, 1
      %p106 = scmp.ne.s32.totalorder %s101, %s103
      %p107 = scmp.eq.s32.totalorder %s30, 0
      %p108 = por %p106, %p107
      %p109 = scmp.ne.s32.totalorder %s101, %s103
      %p110 = scmp.eq.s32.totalorder %s35, 1
      %p111 = por %p109, %p110
      %p112 = scmp.ne.s32.totalorder %s103, %s104
      %p113 = scmp.eq.s32.totalorder %s35, 0
      %p114 = por %p112, %p113
      %p115 = scmp.ne.s32.totalorder %s103, %s104
      %p116 = scmp.eq.s32.totalorder %s36, 1
      %p117 = por %p115, %p116
      %p119 = scmp.ne.s32.totalorder %s104, %s118
      %p120 = scmp.eq.s32.totalorder %s36, 0
      %p121 = por %p119, %p120
      %s123 = sadd.s32 %s122, 1
      %p126 = scmp.eq.s32.totalorder %s30, 1
      %p127 = scmp.ne.s32.totalorder %s122, %s124
      %p128 = scmp.eq.s32.totalorder %s30, 0
      %p129 = por %p127, %p128
      %p130 = scmp.ne.s32.totalorder %s122, %s124
      %p131 = scmp.eq.s32.totalorder %s35, 1
      %p132 = por %p130, %p131
      %p133 = scmp.ne.s32.totalorder %s124, %s125
      %p134 = scmp.eq.s32.totalorder %s35, 0
      %p135 = por %p133, %p134
      %p136 = scmp.ne.s32.totalorder %s124, %s125
      %p137 = scmp.eq.s32.totalorder %s36, 1
      %p138 = por %p136, %p137
      %p140 = scmp.ne.s32.totalorder %s125, %s139
      %p141 = scmp.eq.s32.totalorder %s36, 0
      %p142 = por %p140, %p141
      %s144 = sadd.s32 %s143, 1
      %p147 = scmp.eq.s32.totalorder %s30, 1
      %p148 = scmp.ne.s32.totalorder %s143, %s145
      %p149 = scmp.eq.s32.totalorder %s30, 0
      %p150 = por %p148, %p149
      %p151 = scmp.ne.s32.totalorder %s143, %s145
      %p152 = scmp.eq.s32.totalorder %s35, 1
      %p153 = por %p151, %p152
      %p154 = scmp.ne.s32.totalorder %s145, %s146
      %p155 = scmp.eq.s32.totalorder %s35, 0
      %p156 = por %p154, %p155
      %p157 = scmp.ne.s32.totalorder %s145, %s146
      %p158 = scmp.eq.s32.totalorder %s36, 1
      %p159 = por %p157, %p158
      %p161 = scmp.ne.s32.totalorder %s146, %s160
      %p162 = scmp.eq.s32.totalorder %s36, 0
      %p163 = por %p161, %p162
      %s164 = ssub.s32 %s30, %s37
      %p165 = scmp.eq.s32.totalorder %s164, 0
      %s167 = sadd.s32 %s166, 1
      %s168 = scalar_select %p165, %s166, %s167
      %p171 = pneg %p165
      %p172 = scmp.eq.s32.totalorder %s30, 1
      %p173 = por %p171, %p172
      %p174 = scmp.ne.s32.totalorder %s166, %s169
      %p175 = scmp.eq.s32.totalorder %s30, 0
      %p176 = por %p174, %p175
      %p177 = scmp.ne.s32.totalorder %s166, %s169
      %p178 = scmp.eq.s32.totalorder %s35, 1
      %p179 = por %p177, %p178
      %p180 = scmp.ne.s32.totalorder %s169, %s170
      %p181 = scmp.eq.s32.totalorder %s35, 0
      %p182 = por %p180, %p181
      %p183 = scmp.ne.s32.totalorder %s169, %s170
      %p184 = scmp.eq.s32.totalorder %s36, 1
      %p185 = por %p183, %p184
      %p187 = scmp.ne.s32.totalorder %s170, %s186
      %p188 = scmp.eq.s32.totalorder %s36, 0
      %p189 = por %p187, %p188
      %s190 = ssub.s32 %s30, %s37
      %p191 = scmp.eq.s32.totalorder %s190, 0
      %s193 = sadd.s32 %s192, 1
      %s194 = scalar_select %p191, %s192, %s193
      %p197 = pneg %p191
      %p198 = scmp.eq.s32.totalorder %s30, 1
      %p199 = por %p197, %p198
      %p200 = scmp.ne.s32.totalorder %s192, %s195
      %p201 = scmp.eq.s32.totalorder %s30, 0
      %p202 = por %p200, %p201
      %p203 = scmp.ne.s32.totalorder %s192, %s195
      %p204 = scmp.eq.s32.totalorder %s35, 1
      %p205 = por %p203, %p204
      %p206 = scmp.ne.s32.totalorder %s195, %s196
      %p207 = scmp.eq.s32.totalorder %s35, 0
      %p208 = por %p206, %p207
      %p209 = scmp.ne.s32.totalorder %s195, %s196
      %p210 = scmp.eq.s32.totalorder %s36, 1
      %p211 = por %p209, %p210
      %p213 = scmp.ne.s32.totalorder %s196, %s212
      %p214 = scmp.eq.s32.totalorder %s36, 0
      %p215 = por %p213, %p214
      %s216 = ssub.s32 %s30, %s37
      %p217 = scmp.eq.s32.totalorder %s216, 0
      %s219 = sadd.s32 %s218, 1
      %s220 = scalar_select %p217, %s218, %s219
      %p223 = pneg %p217
      %p224 = scmp.eq.s32.totalorder %s30, 1
      %p225 = por %p223, %p224
      %p226 = scmp.ne.s32.totalorder %s218, %s221
      %p227 = scmp.eq.s32.totalorder %s30, 0
      %p228 = por %p226, %p227
      %p229 = scmp.ne.s32.totalorder %s218, %s221
      %p230 = scmp.eq.s32.totalorder %s35, 1
      %p231 = por %p229, %p230
      %p232 = scmp.ne.s32.totalorder %s221, %s222
      %p233 = scmp.eq.s32.totalorder %s35, 0
      %p234 = por %p232, %p233
      %p235 = scmp.ne.s32.totalorder %s221, %s222
      %p236 = scmp.eq.s32.totalorder %s36, 1
      %p237 = por %p235, %p236
      %p239 = scmp.ne.s32.totalorder %s222, %s238
      %p240 = scmp.eq.s32.totalorder %s36, 0
      %p241 = por %p239, %p240
      %s242 = ssub.s32 %s30, %s37
      %p243 = scmp.eq.s32.totalorder %s242, 0
      %s245 = sadd.s32 %s244, 1
      %s246 = scalar_select %p243, %s244, %s245
      %p249 = pneg %p243
      %p250 = scmp.eq.s32.totalorder %s30, 1
      %p251 = por %p249, %p250
      %p252 = scmp.ne.s32.totalorder %s244, %s247
      %p253 = scmp.eq.s32.totalorder %s30, 0
      %p254 = por %p252, %p253
      %p255 = scmp.ne.s32.totalorder %s244, %s247
      %p256 = scmp.eq.s32.totalorder %s35, 1
      %p257 = por %p255, %p256
      %p258 = scmp.ne.s32.totalorder %s247, %s248
      %p259 = scmp.eq.s32.totalorder %s35, 0
      %p260 = por %p258, %p259
      %p261 = scmp.ne.s32.totalorder %s247, %s248
      %p262 = scmp.eq.s32.totalorder %s36, 1
      %p263 = por %p261, %p262
      %p265 = scmp.ne.s32.totalorder %s248, %s264
      %p266 = scmp.eq.s32.totalorder %s36, 0
      %p267 = por %p265, %p266
      %s268 = ssub.s32 %s30, %s37
      %p269 = scmp.eq.s32.totalorder %s268, 0
      %s271 = sadd.s32 %s270, 1
      %s272 = scalar_select %p269, %s270, %s271
      %p275 = pneg %p269
      %p276 = scmp.eq.s32.totalorder %s30, 1
      %p277 = por %p275, %p276
      %p278 = scmp.ne.s32.totalorder %s270, %s273
      %p279 = scmp.eq.s32.totalorder %s30, 0
      %p280 = por %p278, %p279
      %p281 = scmp.ne.s32.totalorder %s270, %s273
      %p282 = scmp.eq.s32.totalorder %s35, 1
      %p283 = por %p281, %p282
      %p284 = scmp.ne.s32.totalorder %s273, %s274
      %p285 = scmp.eq.s32.totalorder %s35, 0
      %p286 = por %p284, %p285
      %p287 = scmp.ne.s32.totalorder %s273, %s274
      %p288 = scmp.eq.s32.totalorder %s36, 1
      %p289 = por %p287, %p288
      %p291 = scmp.ne.s32.totalorder %s274, %s290
      %p292 = scmp.eq.s32.totalorder %s36, 0
      %p293 = por %p291, %p292
      %s294 = ssub.s32 %s30, %s37
      %p295 = scmp.eq.s32.totalorder %s294, 0
      %s297 = sadd.s32 %s296, 1
      %s298 = scalar_select %p295, %s296, %s297
      %p301 = pneg %p295
      %p302 = scmp.eq.s32.totalorder %s30, 1
      %p303 = por %p301, %p302
      %p304 = scmp.ne.s32.totalorder %s296, %s299
      %p305 = scmp.eq.s32.totalorder %s30, 0
      %p306 = por %p304, %p305
      %p307 = scmp.ne.s32.totalorder %s296, %s299
      %p308 = scmp.eq.s32.totalorder %s35, 1
      %p309 = por %p307, %p308
      %p310 = scmp.ne.s32.totalorder %s299, %s300
      %p311 = scmp.eq.s32.totalorder %s35, 0
      %p312 = por %p310, %p311
      %p313 = scmp.ne.s32.totalorder %s299, %s300
      %p314 = scmp.eq.s32.totalorder %s36, 1
      %p315 = por %p313, %p314
      %p317 = scmp.ne.s32.totalorder %s300, %s316
      %p318 = scmp.eq.s32.totalorder %s36, 0
      %p319 = por %p317, %p318
      %s320 = ssub.s32 %s30, %s37
      %p321 = scmp.eq.s32.totalorder %s320, 0
      %s323 = sadd.s32 %s322, 1
      %s324 = scalar_select %p321, %s322, %s323
      %p327 = pneg %p321
      %p328 = scmp.eq.s32.totalorder %s30, 1
      %p329 = por %p327, %p328
      %p330 = scmp.ne.s32.totalorder %s322, %s325
      %p331 = scmp.eq.s32.totalorder %s30, 0
      %p332 = por %p330, %p331
      %p333 = scmp.ne.s32.totalorder %s322, %s325
      %p334 = scmp.eq.s32.totalorder %s35, 1
      %p335 = por %p333, %p334
      %p336 = scmp.ne.s32.totalorder %s325, %s326
      %p337 = scmp.eq.s32.totalorder %s35, 0
      %p338 = por %p336, %p337
      %p339 = scmp.ne.s32.totalorder %s325, %s326
      %p340 = scmp.eq.s32.totalorder %s36, 1
      %p341 = por %p339, %p340
      %p343 = scmp.ne.s32.totalorder %s326, %s342
      %p344 = scmp.eq.s32.totalorder %s36, 0
      %p345 = por %p343, %p344
      %s346 = ssub.s32 %s30, %s37
      %p347 = scmp.eq.s32.totalorder %s346, 0
      %s349 = sadd.s32 %s348, 1
      %s350 = scalar_select %p347, %s348, %s349
      %p353 = pneg %p347
      %p354 = scmp.eq.s32.totalorder %s30, 1
      %p355 = por %p353, %p354
      %p356 = scmp.ne.s32.totalorder %s348, %s351
      %p357 = scmp.eq.s32.totalorder %s30, 0
      %p358 = por %p356, %p357
      %p359 = scmp.ne.s32.totalorder %s348, %s351
      %p360 = scmp.eq.s32.totalorder %s35, 1
      %p361 = por %p359, %p360
      %p362 = scmp.ne.s32.totalorder %s351, %s352
      %p363 = scmp.eq.s32.totalorder %s35, 0
      %p364 = por %p362, %p363
      %p365 = scmp.ne.s32.totalorder %s351, %s352
      %p366 = scmp.eq.s32.totalorder %s36, 1
      %p367 = por %p365, %p366
      %p369 = scmp.ne.s32.totalorder %s352, %s368
      %p370 = scmp.eq.s32.totalorder %s36, 0
      %p371 = por %p369, %p370
      %s372 = ssub.s32 %s30, %s37
      %p373 = scmp.eq.s32.totalorder %s372, 0
      %s375 = sadd.s32 %s374, 1
      %s376 = scalar_select %p373, %s374, %s375
      %p379 = pneg %p373
      %p380 = scmp.eq.s32.totalorder %s30, 1
      %p381 = por %p379, %p380
      %p382 = scmp.ne.s32.totalorder %s374, %s377
      %p383 = scmp.eq.s32.totalorder %s30, 0
      %p384 = por %p382, %p383
      %p385 = scmp.ne.s32.totalorder %s374, %s377
      %p386 = scmp.eq.s32.totalorder %s35, 1
      %p387 = por %p385, %p386
      %p388 = scmp.ne.s32.totalorder %s377, %s378
      %p389 = scmp.eq.s32.totalorder %s35, 0
      %p390 = por %p388, %p389
      %p391 = scmp.ne.s32.totalorder %s377, %s378
      %p392 = scmp.eq.s32.totalorder %s36, 1
      %p393 = por %p391, %p392
      %p395 = scmp.ne.s32.totalorder %s378, %s394
      %p396 = scmp.eq.s32.totalorder %s36, 0
      %p397 = por %p395, %p396
      %s398 = ssub.s32 %s30, %s37
      %p399 = scmp.eq.s32.totalorder %s398, 0
      %s401 = sadd.s32 %s400, 1
      %s402 = scalar_select %p399, %s400, %s401
      %p405 = pneg %p399
      %p406 = scmp.eq.s32.totalorder %s30, 1
      %p407 = por %p405, %p406
      %p408 = scmp.ne.s32.totalorder %s400, %s403
      %p409 = scmp.eq.s32.totalorder %s30, 0
      %p410 = por %p408, %p409
      %p411 = scmp.ne.s32.totalorder %s400, %s403
      %p412 = scmp.eq.s32.totalorder %s35, 1
      %p413 = por %p411, %p412
      %p414 = scmp.ne.s32.totalorder %s403, %s404
      %p415 = scmp.eq.s32.totalorder %s35, 0
      %p416 = por %p414, %p415
      %p417 = scmp.ne.s32.totalorder %s403, %s404
      %p418 = scmp.eq.s32.totalorder %s36, 1
      %p419 = por %p417, %p418
      %p421 = scmp.ne.s32.totalorder %s404, %s420
      %p422 = scmp.eq.s32.totalorder %s36, 0
      %p423 = por %p421, %p422
      %s424 = ssub.s32 %s30, %s37
      %p425 = scmp.eq.s32.totalorder %s424, 0
      %s427 = sadd.s32 %s426, 1
      %s428 = scalar_select %p425, %s426, %s427
      %p431 = pneg %p425
      %p432 = scmp.eq.s32.totalorder %s30, 1
      %p433 = por %p431, %p432
      %p434 = scmp.ne.s32.totalorder %s426, %s429
      %p435 = scmp.eq.s32.totalorder %s30, 0
      %p436 = por %p434, %p435
      %p437 = scmp.ne.s32.totalorder %s426, %s429
      %p438 = scmp.eq.s32.totalorder %s35, 1
      %p439 = por %p437, %p438
      %p440 = scmp.ne.s32.totalorder %s429, %s430
      %p441 = scmp.eq.s32.totalorder %s35, 0
      %p442 = por %p440, %p441
      %p443 = scmp.ne.s32.totalorder %s429, %s430
      %p444 = scmp.eq.s32.totalorder %s36, 1
      %p445 = por %p443, %p444
      %p447 = scmp.ne.s32.totalorder %s430, %s446
      %p448 = scmp.eq.s32.totalorder %s36, 0
      %p449 = por %p447, %p448
      %s450 = ssub.s32 %s30, %s37
      %p451 = scmp.eq.s32.totalorder %s450, 0
      %s453 = sadd.s32 %s452, 1
      %s454 = scalar_select %p451, %s452, %s453
      %p457 = pneg %p451
      %p458 = scmp.eq.s32.totalorder %s30, 1
      %p459 = por %p457, %p458
      %p460 = scmp.ne.s32.totalorder %s452, %s455
      %p461 = scmp.eq.s32.totalorder %s30, 0
      %p462 = por %p460, %p461
      %p463 = scmp.ne.s32.totalorder %s452, %s455
      %p464 = scmp.eq.s32.totalorder %s35, 1
      %p465 = por %p463, %p464
      %p466 = scmp.ne.s32.totalorder %s455, %s456
      %p467 = scmp.eq.s32.totalorder %s35, 0
      %p468 = por %p466, %p467
      %p469 = scmp.ne.s32.totalorder %s455, %s456
      %p470 = scmp.eq.s32.totalorder %s36, 1
      %p471 = por %p469, %p470
      %p473 = scmp.ne.s32.totalorder %s456, %s472
      %p474 = scmp.eq.s32.totalorder %s36, 0
      %p475 = por %p473, %p474
      %s477 = sadd.s32 %s476, 1
      %p480 = scmp.eq.s32.totalorder %s30, 1
      %p481 = scmp.ne.s32.totalorder %s476, %s478
      %p482 = scmp.eq.s32.totalorder %s30, 0
      %p483 = por %p481, %p482
      %p484 = scmp.ne.s32.totalorder %s476, %s478
      %p485 = scmp.eq.s32.totalorder %s35, 1
      %p486 = por %p484, %p485
      %p487 = scmp.ne.s32.totalorder %s478, %s479
      %p488 = scmp.eq.s32.totalorder %s35, 0
      %p489 = por %p487, %p488
      %p490 = scmp.ne.s32.totalorder %s478, %s479
      %p491 = scmp.eq.s32.totalorder %s36, 1
      %p492 = por %p490, %p491
      %p494 = scmp.ne.s32.totalorder %s479, %s493
      %p495 = scmp.eq.s32.totalorder %s36, 0
      %p496 = por %p494, %p495
      %s498 = sadd.s32 %s497, 1
      %p501 = scmp.eq.s32.totalorder %s30, 1
      %p502 = scmp.ne.s32.totalorder %s497, %s499
      %p503 = scmp.eq.s32.totalorder %s30, 0
      %p504 = por %p502, %p503
      %p505 = scmp.ne.s32.totalorder %s497, %s499
      %p506 = scmp.eq.s32.totalorder %s35, 1
      %p507 = por %p505, %p506
      %p508 = scmp.ne.s32.totalorder %s499, %s500
      %p509 = scmp.eq.s32.totalorder %s35, 0
      %p510 = por %p508, %p509
      %p511 = scmp.ne.s32.totalorder %s499, %s500
      %p512 = scmp.eq.s32.totalorder %s36, 1
      %p513 = por %p511, %p512
      %p515 = scmp.ne.s32.totalorder %s500, %s514
      %p516 = scmp.eq.s32.totalorder %s36, 0
      %p517 = por %p515, %p516
      %s519 = sadd.s32 %s518, 1
      %p522 = scmp.eq.s32.totalorder %s30, 1
      %p523 = scmp.ne.s32.totalorder %s518, %s520
      %p524 = scmp.eq.s32.totalorder %s30, 0
      %p525 = por %p523, %p524
      %p526 = scmp.ne.s32.totalorder %s518, %s520
      %p527 = scmp.eq.s32.totalorder %s35, 1
      %p528 = por %p526, %p527
      %p529 = scmp.ne.s32.totalorder %s520, %s521
      %p530 = scmp.eq.s32.totalorder %s35, 0
      %p531 = por %p529, %p530
      %p532 = scmp.ne.s32.totalorder %s520, %s521
      %p533 = scmp.eq.s32.totalorder %s36, 1
      %p534 = por %p532, %p533
      %p536 = scmp.ne.s32.totalorder %s521, %s535
      %p537 = scmp.eq.s32.totalorder %s36, 0
      %p538 = por %p536, %p537
      %s540 = sadd.s32 %s539, 1
      %p543 = scmp.eq.s32.totalorder %s30, 1
      %p544 = scmp.ne.s32.totalorder %s539, %s541
      %p545 = scmp.eq.s32.totalorder %s30, 0
      %p546 = por %p544, %p545
      %p547 = scmp.ne.s32.totalorder %s539, %s541
      %p548 = scmp.eq.s32.totalorder %s35, 1
      %p549 = por %p547, %p548
      %p550 = scmp.ne.s32.totalorder %s541, %s542
      %p551 = scmp.eq.s32.totalorder %s35, 0
      %p552 = por %p550, %p551
      %p553 = scmp.ne.s32.totalorder %s541, %s542
      %p554 = scmp.eq.s32.totalorder %s36, 1
      %p555 = por %p553, %p554
      %p557 = scmp.ne.s32.totalorder %s542, %s556
      %p558 = scmp.eq.s32.totalorder %s36, 0
      %p559 = por %p557, %p558
      %p560 = scmp.le.s32.totalorder 1, %s30
      %p561 = scmp.lt.s32.totalorder %s30, 3
      %p562 = pnand %p560, %p561
      %p563 = pneg %p562
      // Predicated region
      $region9: #{bert_forward.1} parent=5 // pred_check
        _
      $region10: #{bert_forward.1} parent=5 // pred_check_branch
        %565 = sbr.rel (%p562) target = $region12
      $region11: #{bert_forward.1} parent=5 // pred_region
        %s566 = ssub.s32 %s30, 1
        // Predicated region
        $region13: #{bert_forward.1} parent=11 // pred_check
          %p567 = pneg %p51
        $region14: #{bert_forward.1} parent=11 // pred_check_branch
          %569 = sbr.rel (%p567) target = $region16
        $region15: #{bert_forward.1} parent=11 // pred_region
          _
        $region16: #{bert_forward.1} parent=11 // pred_fallthru
          _
        // Predicated region
        $region17: #{bert_forward.1} parent=11 // pred_check
          %p570 = pneg %p72
        $region18: #{bert_forward.1} parent=11 // pred_check_branch
          %572 = sbr.rel (%p570) target = $region20
        $region19: #{bert_forward.1} parent=11 // pred_region
          _
        $region20: #{bert_forward.1} parent=11 // pred_fallthru
          _
        // Predicated region
        $region21: #{bert_forward.1} parent=11 // pred_check
          %p573 = pneg %p93
        $region22: #{bert_forward.1} parent=11 // pred_check_branch
          %575 = sbr.rel (%p573) target = $region24
        $region23: #{bert_forward.1} parent=11 // pred_region
          _
        $region24: #{bert_forward.1} parent=11 // pred_fallthru
          _
        // Predicated region
        $region25: #{bert_forward.1} parent=11 // pred_check
          %p576 = pneg %p114
        $region26: #{bert_forward.1} parent=11 // pred_check_branch
          %578 = sbr.rel (%p576) target = $region28
        $region27: #{bert_forward.1} parent=11 // pred_region
          _
        $region28: #{bert_forward.1} parent=11 // pred_fallthru
          _
        // Predicated region
        $region29: #{bert_forward.1} parent=11 // pred_check
          %p579 = pneg %p135
        $region30: #{bert_forward.1} parent=11 // pred_check_branch
          %581 = sbr.rel (%p579) target = $region32
        $region31: #{bert_forward.1} parent=11 // pred_region
          _
        $region32: #{bert_forward.1} parent=11 // pred_fallthru
          _
        // Predicated region
        $region33: #{bert_forward.1} parent=11 // pred_check
          %p582 = pneg %p156
        $region34: #{bert_forward.1} parent=11 // pred_check_branch
          %584 = sbr.rel (%p582) target = $region36
        $region35: #{bert_forward.1} parent=11 // pred_region
          _
        $region36: #{bert_forward.1} parent=11 // pred_fallthru
          _
        // Predicated region
        $region37: #{bert_forward.1} parent=11 // pred_check
          %p585 = pneg %p489
        $region38: #{bert_forward.1} parent=11 // pred_check_branch
          %587 = sbr.rel (%p585) target = $region40
        $region39: #{bert_forward.1} parent=11 // pred_region
          _
        $region40: #{bert_forward.1} parent=11 // pred_fallthru
          _
        // Predicated region
        $region41: #{bert_forward.1} parent=11 // pred_check
          %p588 = pneg %p510
        $region42: #{bert_forward.1} parent=11 // pred_check_branch
          %590 = sbr.rel (%p588) target = $region44
        $region43: #{bert_forward.1} parent=11 // pred_region
          _
        $region44: #{bert_forward.1} parent=11 // pred_fallthru
          _
      $region12: #{bert_forward.1} parent=5 // pred_fallthru
        _
      %p591 = scmp.lt.s32.totalorder %s30, 2
      // Predicated region
      $region45: #{bert_forward.1} parent=5 // pred_check
        %p592 = pneg %p591
      $region46: #{bert_forward.1} parent=5 // pred_check_branch
        %594 = sbr.rel (%p592) target = $region48
      $region47: #{bert_forward.1} parent=5 // pred_region
        // Predicated region
        $region49: #{bert_forward.1} parent=47 // pred_check
          %p595 = pneg %p176
        $region50: #{bert_forward.1} parent=47 // pred_check_branch
          %597 = sbr.rel (%p595) target = $region52
        $region51: #{bert_forward.1} parent=47 // pred_region
          %p598 = scmp.lt.s32.totalorder %s30, 1
          %s599 = scalar_select %p598, %s30, 1
          %s600 = smul.addr %s599, 4
          %s601 = smul.addr %s600, 4
          %s602 = scalar_lea.vmem %s6, %s601
        $region52: #{bert_forward.1} parent=47 // pred_fallthru
          _
        // Predicated region
        $region53: #{bert_forward.1} parent=47 // pred_check
          %p603 = pneg %p202
        $region54: #{bert_forward.1} parent=47 // pred_check_branch
          %605 = sbr.rel (%p603) target = $region56
        $region55: #{bert_forward.1} parent=47 // pred_region
          %p606 = scmp.lt.s32.totalorder %s30, 1
          %s607 = scalar_select %p606, %s30, 1
          %s608 = scalar_lea.vmem %s7, %s607
        $region56: #{bert_forward.1} parent=47 // pred_fallthru
          _
        // Predicated region
        $region57: #{bert_forward.1} parent=47 // pred_check
          %p609 = pneg %p228
        $region58: #{bert_forward.1} parent=47 // pred_check_branch
          %611 = sbr.rel (%p609) target = $region60
        $region59: #{bert_forward.1} parent=47 // pred_region
          %p612 = scmp.lt.s32.totalorder %s30, 1
          %s613 = scalar_select %p612, %s30, 1
          %s614 = smul.addr %s613, 4
          %s615 = smul.addr %s614, 4
          %s616 = scalar_lea.vmem %s8, %s615
        $region60: #{bert_forward.1} parent=47 // pred_fallthru
          _
        // Predicated region
        $region61: #{bert_forward.1} parent=47 // pred_check
          %p617 = pneg %p254
        $region62: #{bert_forward.1} parent=47 // pred_check_branch
          %619 = sbr.rel (%p617) target = $region64
        $region63: #{bert_forward.1} parent=47 // pred_region
          %p620 = scmp.lt.s32.totalorder %s30, 1
          %s621 = scalar_select %p620, %s30, 1
          %s622 = scalar_lea.vmem %s9, %s621
        $region64: #{bert_forward.1} parent=47 // pred_fallthru
          _
        // Predicated region
        $region65: #{bert_forward.1} parent=47 // pred_check
          %p623 = pneg %p280
        $region66: #{bert_forward.1} parent=47 // pred_check_branch
          %625 = sbr.rel (%p623) target = $region68
        $region67: #{bert_forward.1} parent=47 // pred_region
          %p626 = scmp.lt.s32.totalorder %s30, 1
          %s627 = scalar_select %p626, %s30, 1
          %s628 = scalar_lea.vmem %s10, %s627
        $region68: #{bert_forward.1} parent=47 // pred_fallthru
          _
        // Predicated region
        $region69: #{bert_forward.1} parent=47 // pred_check
          %p629 = pneg %p306
        $region70: #{bert_forward.1} parent=47 // pred_check_branch
          %631 = sbr.rel (%p629) target = $region72
        $region71: #{bert_forward.1} parent=47 // pred_region
          %p632 = scmp.lt.s32.totalorder %s30, 1
          %s633 = scalar_select %p632, %s30, 1
          %s634 = scalar_lea.vmem %s11, %s633
        $region72: #{bert_forward.1} parent=47 // pred_fallthru
          _
        // Predicated region
        $region73: #{bert_forward.1} parent=47 // pred_check
          %p635 = pneg %p332
        $region74: #{bert_forward.1} parent=47 // pred_check_branch
          %637 = sbr.rel (%p635) target = $region76
        $region75: #{bert_forward.1} parent=47 // pred_region
          %p638 = scmp.lt.s32.totalorder %s30, 1
          %s639 = scalar_select %p638, %s30, 1
          %s640 = smul.addr %s639, 4
          %s641 = smul.addr %s640, 4
          %s642 = scalar_lea.vmem %s12, %s641
        $region76: #{bert_forward.1} parent=47 // pred_fallthru
          _
        // Predicated region
        $region77: #{bert_forward.1} parent=47 // pred_check
          %p643 = pneg %p358
        $region78: #{bert_forward.1} parent=47 // pred_check_branch
          %645 = sbr.rel (%p643) target = $region80
        $region79: #{bert_forward.1} parent=47 // pred_region
          %p646 = scmp.lt.s32.totalorder %s30, 1
          %s647 = scalar_select %p646, %s30, 1
          %s648 = scalar_lea.vmem %s13, %s647
        $region80: #{bert_forward.1} parent=47 // pred_fallthru
          _
        // Predicated region
        $region81: #{bert_forward.1} parent=47 // pred_check
          %p649 = pneg %p384
        $region82: #{bert_forward.1} parent=47 // pred_check_branch
          %651 = sbr.rel (%p649) target = $region84
        $region83: #{bert_forward.1} parent=47 // pred_region
          %p652 = scmp.lt.s32.totalorder %s30, 1
          %s653 = scalar_select %p652, %s30, 1
          %s654 = smul.addr %s653, 8
          %s655 = smul.addr %s654, 4
          %s656 = scalar_lea.vmem %s14, %s655
        $region84: #{bert_forward.1} parent=47 // pred_fallthru
          _
        // Predicated region
        $region85: #{bert_forward.1} parent=47 // pred_check
          %p657 = pneg %p410
        $region86: #{bert_forward.1} parent=47 // pred_check_branch
          %659 = sbr.rel (%p657) target = $region88
        $region87: #{bert_forward.1} parent=47 // pred_region
          %p660 = scmp.lt.s32.totalorder %s30, 1
          %s661 = scalar_select %p660, %s30, 1
          %s662 = scalar_lea.vmem %s15, %s661
        $region88: #{bert_forward.1} parent=47 // pred_fallthru
          _
        // Predicated region
        $region89: #{bert_forward.1} parent=47 // pred_check
          %p663 = pneg %p436
        $region90: #{bert_forward.1} parent=47 // pred_check_branch
          %665 = sbr.rel (%p663) target = $region92
        $region91: #{bert_forward.1} parent=47 // pred_region
          %p666 = scmp.lt.s32.totalorder %s30, 1
          %s667 = scalar_select %p666, %s30, 1
          %s668 = scalar_lea.vmem %s16, %s667
        $region92: #{bert_forward.1} parent=47 // pred_fallthru
          _
        // Predicated region
        $region93: #{bert_forward.1} parent=47 // pred_check
          %p669 = pneg %p462
        $region94: #{bert_forward.1} parent=47 // pred_check_branch
          %671 = sbr.rel (%p669) target = $region96
        $region95: #{bert_forward.1} parent=47 // pred_region
          %p672 = scmp.lt.s32.totalorder %s30, 1
          %s673 = scalar_select %p672, %s30, 1
          %s674 = scalar_lea.vmem %s17, %s673
        $region96: #{bert_forward.1} parent=47 // pred_fallthru
          _
      $region48: #{bert_forward.1} parent=5 // pred_fallthru
        _
      %p675 = scmp.le.s32.totalorder 1, %s30
      %p676 = scmp.lt.s32.totalorder %s30, 3
      %p677 = pnand %p675, %p676
      %p678 = pneg %p677
      // Predicated region
      $region97: #{bert_forward.1} parent=5 // pred_check
        _
      $region98: #{bert_forward.1} parent=5 // pred_check_branch
        %680 = sbr.rel (%p677) target = $region100
      $region99: #{bert_forward.1} parent=5 // pred_region
        %s681 = ssub.s32 %s30, 1
        %p682 = pneg %p51
        %p683 = pneg %p48
        %p684 = pneg %p72
        %p685 = pneg %p69
        %p686 = pneg %p93
        %p687 = pneg %p90
        %p688 = pneg %p114
        %p689 = pneg %p111
        %p690 = pneg %p135
        %p691 = pneg %p132
        %p692 = pneg %p156
        %p693 = pneg %p153
        %p694 = scmp.lt.s32.totalorder %s35, 1
        %s695 = scalar_select %p694, %s35, 1
        %s696 = smul.addr %s695, 4
        %s697 = smul.addr %s696, 4
        %s698 = scalar_lea.vmem %s6, %s697
        %p699 = pneg %p182
        %p700 = pneg %p179
        %p701 = scmp.lt.s32.totalorder %s35, 1
        %s702 = scalar_select %p701, %s35, 1
        %s703 = scalar_lea.vmem %s7, %s702
        %p704 = pneg %p208
        %p705 = pneg %p205
        %p706 = scmp.lt.s32.totalorder %s35, 1
        %s707 = scalar_select %p706, %s35, 1
        %s708 = smul.addr %s707, 4
        %s709 = smul.addr %s708, 4
        %s710 = scalar_lea.vmem %s8, %s709
        %p711 = pneg %p234
        %p712 = pneg %p231
        %p713 = scmp.lt.s32.totalorder %s35, 1
        %s714 = scalar_select %p713, %s35, 1
        %s715 = scalar_lea.vmem %s9, %s714
        %p716 = pneg %p260
        %p717 = pneg %p257
        %p718 = scmp.lt.s32.totalorder %s35, 1
        %s719 = scalar_select %p718, %s35, 1
        %s720 = scalar_lea.vmem %s10, %s719
        %p721 = pneg %p286
        %p722 = pneg %p283
        %p723 = scmp.lt.s32.totalorder %s35, 1
        %s724 = scalar_select %p723, %s35, 1
        %s725 = scalar_lea.vmem %s11, %s724
        %p726 = pneg %p312
        %p727 = pneg %p309
        %p728 = scmp.lt.s32.totalorder %s35, 1
        %s729 = scalar_select %p728, %s35, 1
        %s730 = smul.addr %s729, 4
        %s731 = smul.addr %s730, 4
        %s732 = scalar_lea.vmem %s12, %s731
        %p733 = pneg %p338
        %p734 = pneg %p335
        %p735 = scmp.lt.s32.totalorder %s35, 1
        %s736 = scalar_select %p735, %s35, 1
        %s737 = scalar_lea.vmem %s13, %s736
        %p738 = pneg %p364
        %p739 = pneg %p361
        %p740 = scmp.lt.s32.totalorder %s35, 1
        %s741 = scalar_select %p740, %s35, 1
        %s742 = smul.addr %s741, 8
        %s743 = smul.addr %s742, 4
        %s744 = scalar_lea.vmem %s14, %s743
        %p745 = pneg %p390
        %p746 = pneg %p387
        %p747 = scmp.lt.s32.totalorder %s35, 1
        %s748 = scalar_select %p747, %s35, 1
        %s749 = scalar_lea.vmem %s15, %s748
        %p750 = pneg %p416
        %p751 = pneg %p413
        %p752 = scmp.lt.s32.totalorder %s35, 1
        %s753 = scalar_select %p752, %s35, 1
        %s754 = scalar_lea.vmem %s16, %s753
        %p755 = pneg %p442
        %p756 = pneg %p439
        %p757 = scmp.lt.s32.totalorder %s35, 1
        %s758 = scalar_select %p757, %s35, 1
        %s759 = scalar_lea.vmem %s17, %s758
        %p760 = pneg %p468
        %p761 = pneg %p465
        %p762 = pneg %p489
        %p763 = pneg %p486
        %p764 = pneg %p510
        %p765 = pneg %p507
        %p766 = pneg %p531
        %p767 = pneg %p528
        %p768 = pneg %p552
        %p769 = pneg %p549
        %p770 = scmp.lt.s32.totalorder %s35, 1
        %s771 = scalar_select %p770, %s35, 1
        %s772 = smul.addr %s771, 4
        %s773 = smul.addr %s772, 4
        %s774 = scalar_lea.vmem %s6, %s773
        %p775 = scmp.lt.s32.totalorder %s35, 1
        %s776 = scalar_select %p775, %s35, 1
        %s777 = scalar_lea.vmem %s7, %s776
        %p778 = scmp.lt.s32.totalorder %s35, 1
        %s779 = scalar_select %p778, %s35, 1
        %s780 = smul.addr %s779, 4
        %s781 = smul.addr %s780, 4
        %s782 = scalar_lea.vmem %s8, %s781
        %p783 = scmp.lt.s32.totalorder %s35, 1
        %s784 = scalar_select %p783, %s35, 1
        %s785 = scalar_lea.vmem %s9, %s784
        %p786 = scmp.lt.s32.totalorder %s35, 1
        %s787 = scalar_select %p786, %s35, 1
        %s788 = scalar_lea.vmem %s10, %s787
        %p789 = scmp.lt.s32.totalorder %s35, 1
        %s790 = scalar_select %p789, %s35, 1
        %s791 = scalar_lea.vmem %s11, %s790
        %p792 = scmp.lt.s32.totalorder %s35, 1
        %s793 = scalar_select %p792, %s35, 1
        %s794 = smul.addr %s793, 4
        %s795 = smul.addr %s794, 4
        %s796 = scalar_lea.vmem %s12, %s795
        %p797 = scmp.lt.s32.totalorder %s35, 1
        %s798 = scalar_select %p797, %s35, 1
        %s799 = scalar_lea.vmem %s13, %s798
        %p800 = scmp.lt.s32.totalorder %s35, 1
        %s801 = scalar_select %p800, %s35, 1
        %s802 = smul.addr %s801, 8
        %s803 = smul.addr %s802, 4
        %s804 = scalar_lea.vmem %s14, %s803
        %p805 = scmp.lt.s32.totalorder %s35, 1
        %s806 = scalar_select %p805, %s35, 1
        %s807 = scalar_lea.vmem %s15, %s806
        %p808 = scmp.lt.s32.totalorder %s35, 1
        %s809 = scalar_select %p808, %s35, 1
        %s810 = scalar_lea.vmem %s16, %s809
        %p811 = scmp.lt.s32.totalorder %s35, 1
        %s812 = scalar_select %p811, %s35, 1
        %s813 = scalar_lea.vmem %s17, %s812
        %p815 = scmp.eq.s32.totalorder %s35, 0
        // Predicated region
        $region101: #{bert_forward.1} parent=99 // pred_check
          %p816 = pneg %p815
        $region102: #{bert_forward.1} parent=99 // pred_check_branch
          %818 = sbr.rel (%p816) target = $region104
        $region103: #{bert_forward.1} parent=99 // pred_region
          %v819 = vld [vmem:[%s2] sm:$0xff]
          %v820 = vld [vmem:[%s0] sm:$0xff]
          %v821 = vld [vmem:[%s0 + $0x8] sm:$0xff]
          %v822 = vld [vmem:[%s1] sm:$0xff]
          %v823 = vld [vmem:[%s1 + $0x8] sm:$0xff]
          %v824 = vadd.f32 %v820, %v822
          %v825 = vadd.f32 %v821, %v823
          %v826 = vadd.f32 %v824, %v819
          %v827 = vadd.f32 %v825, %v819
          %v828 = vld [vmem:[%s3] sm:$0x1]
          %v829 = vld [vmem:[%s4] sm:$0x1]
          %vm830 = vcmask 261120
          %v831 = vsel %vm830, %v826, 0.0
          %832 = vadd.xlane.f32.xlu0 %v831
          %v833 = vpop.xlane.xlu0 %832
          %v834 = vsel %vm830, %v827, 0.0
          %835 = vadd.xlane.f32.xlu0 %v834
          %v836 = vpop.xlane.xlu0 %835
          %v837 = vrcp.pop 32.0
          %v838 = vmul.f32 %v833, %v837
          %v839 = vmul.f32 %v836, %v837
          %v840 = vsub.f32 %v826, %v838
          %v841 = vsub.f32 %v827, %v839
          %v842 = vmul.f32 %v840, %v840
          %v843 = vmul.f32 %v841, %v841
          %v844 = vsel %vm830, %v842, 0.0
          %845 = vadd.xlane.f32.xlu0 %v844
          %v846 = vpop.xlane.xlu0 %845
          %v847 = vsel %vm830, %v843, 0.0
          %848 = vadd.xlane.f32.xlu0 %v847
          %v849 = vpop.xlane.xlu0 %848
          %v850 = vmul.f32 %v846, %v837
          %v851 = vmul.f32 %v849, %v837
          %v852 = vadd.f32 %v850, 1e-12
          %v853 = vadd.f32 %v851, 1e-12
          %v854 = vrsqrt.pop %v852
          %v855 = vrsqrt.pop %v853
          %v856 = vmul.f32 %v840, %v854
          %v857 = vmul.f32 %v841, %v855
          %v859 = vlaneseq
          %v860 = vshrl.u32 %v859, 7
          %v861 = vsub.s32 0, %v860
          %v862 = vrot.slane %v828, %v861
          %v864 = vmul.f32 %v856, %v862
          %v865 = vmul.f32 %v857, %v862
          %v867 = vlaneseq
          %v868 = vshrl.u32 %v867, 7
          %v869 = vsub.s32 0, %v868
          %v870 = vrot.slane %v829, %v869
          %v872 = vadd.f32 %v864, %v870
          %v873 = vadd.f32 %v865, %v870
          %874 = vst.msk [vmem:[#allocation2] sm:$0xff] %vm830, %v872
          %875 = vst.msk [vmem:[#allocation2 + $0x8] sm:$0xff] %vm830, %v873
        $region104: #{bert_forward.1} parent=99 // pred_fallthru
          _
        %v876 = vld [vmem:[#allocation2] sm:$0xff]
        %v877 = vld [vmem:[#allocation2 + $0x8] sm:$0xff]
        %v878 = vpack.c.bf16 %v877, %v876
        %v879 = vld [vmem:[%s774] sm:$0xf]
        %v880 = vld [vmem:[%s774 + $0x4] sm:$0xf]
        %v881 = vld [vmem:[%s774 + $0x8] sm:$0xf]
        %v882 = vld [vmem:[%s774 + $0xc] sm:$0xf]
        %v883 = vld [vmem:[%s777] sm:$0x1]
        %v885 = vlaneseq
        %v886 = vshrl.u32 %v885, 7
        %v887 = vsub.s32 0, %v886
        %v888 = vrot.slane %v883, %v887
        %v894 = vunpack.c.l.b16 %v879
        %v895 = vunpack.c.l.b16 %v880
        %v896 = vunpack.c.l.b16 %v881
        %v897 = vunpack.c.l.b16 %v882
        %v898 = vpack.c.b16 %v895, %v894
        %v899 = vpack.c.b16 %v897, %v896
        %vm902 = vcmask 261120
        %v904 = vsel %vm902, %v878, 0
        %906 = vmatprep.subr.bf16.mxu0 0
        %907 = vmatpush1.bf16.msra.mxu0 %v898
        %908 = vmatprep.subr.bf16.mxu0 0
        %909 = vmatpush1.bf16.msra.mxu0 %v899
        %910 = vmatprep.subr.bf16.mxu0 0
        %911 = vmatpush1.bf16.msra.mxu0 0
        %912 = vmatprep.subr.bf16.mxu0 0
        %913 = vmatpush1.bf16.msra.mxu0 0
        %914 = vmatprep.subr.bf16.mxu0 0
        %915 = vmatpush1.bf16.msra.mxu0 0
        %916 = vmatprep.subr.bf16.mxu0 0
        %917 = vmatpush1.bf16.msra.mxu0 0
        %918 = vmatprep.subr.bf16.mxu0 0
        %919 = vmatpush1.bf16.msra.mxu0 0
        %920 = vmatprep.subr.bf16.mxu0 0
        %921 = vmatpush1.bf16.msra.mxu0 0
        %922 = vmatprep.subr.bf16.mxu0 0
        %923 = vmatpush1.bf16.msra.mxu0 0
        %924 = vmatprep.subr.bf16.mxu0 0
        %925 = vmatpush1.bf16.msra.mxu0 0
        %926 = vmatprep.subr.bf16.mxu0 0
        %927 = vmatpush1.bf16.msra.mxu0 0
        %928 = vmatprep.subr.bf16.mxu0 0
        %929 = vmatpush1.bf16.msra.mxu0 0
        %930 = vmatprep.subr.bf16.mxu0 0
        %931 = vmatpush1.bf16.msra.mxu0 0
        %932 = vmatprep.subr.bf16.mxu0 0
        %933 = vmatpush1.bf16.msra.mxu0 0
        %934 = vmatprep.subr.bf16.mxu0 0
        %935 = vmatpush1.bf16.msra.mxu0 0
        %936 = vmatprep.subr.bf16.mxu0 0
        %937 = vmatpush1.bf16.msra.mxu0 0
        %938 = vmatprep.mubr.bf16.mxu0 0
        %939 = vmatmul.mubr.bf16.gmra.mrb[0].mxu0 %v904
        %v940 = vpop.f32.mrb[0].mxu0
        %v941 = vadd.f32 %v888, %v940
        %v942 = vpop.f32.mrb[0].mxu0
        %v943 = vpop.f32.mrb[0].mxu0
        %v944 = vadd.f32 %v888, %v943
        %v945 = vpop.f32.mrb[0].mxu0
        %946 = vdwg.mxu0
        %v947 = vld [vmem:[%s5] sm:$0x3]
        %v948 = vpack.c.bf16 %v941, %v941
        %v949 = vlaneseq
        %v950 = vshrl.u32 %v949, 7
        %v951 = vsub.s32 0, %v950
        %v952 = vrot.slane %v947, %v951
        %954 = vrot.lane.b32.xlu0 %v948, 96
        %v955 = vpop.permute.xlu0 %954
        %vm956 = vcmask 64512
        %v958 = vsel %vm956, %v948, 0
        %v961 = vsel %vm956, %v955, 0
        %963 = vmatprep.subr.bf16.mxu0 0
        %964 = vmatpush1.bf16.xpose.msra.mxu0 %v961
        %965 = vmatprep.subr.bf16.mxu0 0
        %966 = vmatpush1.bf16.xpose.msra.mxu0 0
        %967 = vmatprep.subr.bf16.mxu0 0
        %968 = vmatpush1.bf16.xpose.msra.mxu0 0
        %969 = vmatprep.subr.bf16.mxu0 0
        %970 = vmatpush1.bf16.xpose.msra.mxu0 0
        %971 = vmatprep.subr.bf16.mxu0 0
        %972 = vmatpush1.bf16.xpose.msra.mxu0 0
        %973 = vmatprep.subr.bf16.mxu0 0
        %974 = vmatpush1.bf16.xpose.msra.mxu0 0
        %975 = vmatprep.subr.bf16.mxu0 0
        %976 = vmatpush1.bf16.xpose.msra.mxu0 0
        %977 = vmatprep.subr.bf16.mxu0 0
        %978 = vmatpush1.bf16.xpose.msra.mxu0 0
        %979 = vmatprep.subr.bf16.mxu0 0
        %980 = vmatpush1.bf16.xpose.msra.mxu0 0
        %981 = vmatprep.subr.bf16.mxu0 0
        %982 = vmatpush1.bf16.xpose.msra.mxu0 0
        %983 = vmatprep.subr.bf16.mxu0 0
        %984 = vmatpush1.bf16.xpose.msra.mxu0 0
        %985 = vmatprep.subr.bf16.mxu0 0
        %986 = vmatpush1.bf16.xpose.msra.mxu0 0
        %987 = vmatprep.subr.bf16.mxu0 0
        %988 = vmatpush1.bf16.xpose.msra.mxu0 0
        %989 = vmatprep.subr.bf16.mxu0 0
        %990 = vmatpush1.bf16.xpose.msra.mxu0 0
        %991 = vmatprep.subr.bf16.mxu0 0
        %992 = vmatpush1.bf16.xpose.msra.mxu0 0
        %993 = vmatprep.subr.bf16.mxu0 0
        %994 = vmatpush1.bf16.xpose.msra.mxu0 0
        %995 = vmatprep.mubr.bf16.mxu0 0
        %996 = vmatmul.mubr.bf16.gmra.mrb[0].mxu0 %v958
        %v997 = vpop.f32.mrb[0].mxu0
        %v998 = vadd.f32 %v952, %v997
        %v999 = vpop.f32.mrb[0].mxu0
        %v1000 = vpop.f32.mrb[0].mxu0
        %v1001 = vpop.f32.mrb[0].mxu0
        %1002 = vdwg.mxu0
        %v1003 = vsel %vm956, %v998, -inf
        %1004 = vmax.xlane.f32.xlu0 %v1003
        %v1005 = vpop.xlane.xlu0 %1004
        %v1006 = vsub.f32 %v998, %v1005
        %v1007 = vmul.f32 %v1006, 1.442695
        %v1008 = vpow.pop %v1007
        %v1009 = vsel %vm956, %v1008, 0.0
        %1010 = vadd.xlane.f32.xlu0 %v1009
        %v1011 = vpop.xlane.xlu0 %1010
        %v1012 = vrcp.pop %v1011
        %v1013 = vmul.f32 %v1008, %v1012
        %v1014 = vpack.c.bf16 %v1013, %v1013
        %1015 = vrot.lane.b32.xlu0 %v948, 64
        %v1016 = vpop.permute.xlu0 %1015
        %v1018 = vsel %vm956, %v1014, 0
        %vm1020 = vcmask 1043456
        %v1022 = vsel %vm1020, %v1016, 0
        %1024 = vmatprep.subr.bf16.mxu0 0
        %1025 = vmatpush1.bf16.msra.mxu0 %v1022
        %1026 = vmatprep.subr.bf16.mxu0 0
        %1027 = vmatpush1.bf16.msra.mxu0 0
        %1028 = vmatprep.subr.bf16.mxu0 0
        %1029 = vmatpush1.bf16.msra.mxu0 0
        %1030 = vmatprep.subr.bf16.mxu0 0
        %1031 = vmatpush1.bf16.msra.mxu0 0
        %1032 = vmatprep.subr.bf16.mxu0 0
        %1033 = vmatpush1.bf16.msra.mxu0 0
        %1034 = vmatprep.subr.bf16.mxu0 0
        %1035 = vmatpush1.bf16.msra.mxu0 0
        %1036 = vmatprep.subr.bf16.mxu0 0
        %1037 = vmatpush1.bf16.msra.mxu0 0
        %1038 = vmatprep.subr.bf16.mxu0 0
        %1039 = vmatpush1.bf16.msra.mxu0 0
        %1040 = vmatprep.subr.bf16.mxu0 0
        %1041 = vmatpush1.bf16.msra.mxu0 0
        %1042 = vmatprep.subr.bf16.mxu0 0
        %1043 = vmatpush1.bf16.msra.mxu0 0
        %1044 = vmatprep.subr.bf16.mxu0 0
        %1045 = vmatpush1.bf16.msra.mxu0 0
        %1046 = vmatprep.subr.bf16.mxu0 0
        %1047 = vmatpush1.bf16.msra.mxu0 0
        %1048 = vmatprep.subr.bf16.mxu0 0
        %1049 = vmatpush1.bf16.msra.mxu0 0
        %1050 = vmatprep.subr.bf16.mxu0 0
        %1051 = vmatpush1.bf16.msra.mxu0 0
        %1052 = vmatprep.subr.bf16.mxu0 0
        %1053 = vmatpush1.bf16.msra.mxu0 0
        %1054 = vmatprep.subr.bf16.mxu0 0
        %1055 = vmatpush1.bf16.msra.mxu0 0
        %1056 = vmatprep.mubr.bf16.mxu0 0
        %1057 = vmatmul.mubr.bf16.gmra.mrb[0].mxu0 %v1018
        %v1058 = vpop.f32.mrb[0].mxu0
        %v1059 = vadd.f32 0.0, %v1058
        %v1060 = vpop.f32.mrb[0].mxu0
        %v1061 = vpop.f32.mrb[0].mxu0
        %v1062 = vpop.f32.mrb[0].mxu0
        %1063 = vdwg.mxu0
        %1064 = vrot.lane.b32.xlu0 %v948, 120
        %v1065 = vpop.permute.xlu0 %1064
        %1066 = vrot.lane.b32.xlu0 %v948, 88
        %v1067 = vpop.permute.xlu0 %1066
        %v1069 = vsel %vm956, %v1065, 0
        %v1072 = vsel %vm956, %v1067, 0
        %1074 = vmatprep.subr.bf16.mxu0 0
        %1075 = vmatpush1.bf16.xpose.msra.mxu0 %v1072
        %1076 = vmatprep.subr.bf16.mxu0 0
        %1077 = vmatpush1.bf16.xpose.msra.mxu0 0
        %1078 = vmatprep.subr.bf16.mxu0 0
        %1079 = vmatpush1.bf16.xpose.msra.mxu0 0
        %1080 = vmatprep.subr.bf16.mxu0 0
        %1081 = vmatpush1.bf16.xpose.msra.mxu0 0
        %1082 = vmatprep.subr.bf16.mxu0 0
        %1083 = vmatpush1.bf16.xpose.msra.mxu0 0
        %1084 = vmatprep.subr.bf16.mxu0 0
        %1085 = vmatpush1.bf16.xpose.msra.mxu0 0
        %1086 = vmatprep.subr.bf16.mxu0 0
        %1087 = vmatpush1.bf16.xpose.msra.mxu0 0
        %1088 = vmatprep.subr.bf16.mxu0 0
        %1089 = vmatpush1.bf16.xpose.msra.mxu0 0
        %1090 = vmatprep.subr.bf16.mxu0 0
        %1091 = vmatpush1.bf16.xpose.msra.mxu0 0
        %1092 = vmatprep.subr.bf16.mxu0 0
        %1093 = vmatpush1.bf16.xpose.msra.mxu0 0
        %1094 = vmatprep.subr.bf16.mxu0 0
        %1095 = vmatpush1.bf16.xpose.msra.mxu0 0
        %1096 = vmatprep.subr.bf16.mxu0 0
        %1097 = vmatpush1.bf16.xpose.msra.mxu0 0
        %1098 = vmatprep.subr.bf16.mxu0 0
        %1099 = vmatpush1.bf16.xpose.msra.mxu0 0
        %1100 = vmatprep.subr.bf16.mxu0 0
        %1101 = vmatpush1.bf16.xpose.msra.mxu0 0
        %1102 = vmatprep.subr.bf16.mxu0 0
        %1103 = vmatpush1.bf16.xpose.msra.mxu0 0
        %1104 = vmatprep.subr.bf16.mxu0 0
        %1105 = vmatpush1.bf16.xpose.msra.mxu0 0
        %1106 = vmatprep.mubr.bf16.mxu0 0
        %1107 = vmatmul.mubr.bf16.gmra.mrb[0].mxu0 %v1069
        %v1108 = vpop.f32.mrb[0].mxu0
        %v1109 = vadd.f32 %v952, %v1108
        %v1110 = vpop.f32.mrb[0].mxu0
        %v1111 = vpop.f32.mrb[0].mxu0
        %v1112 = vpop.f32.mrb[0].mxu0
        %1113 = vdwg.mxu0
        %v1114 = vsel %vm956, %v1109, -inf
        %1115 = vmax.xlane.f32.xlu0 %v1114
        %v1116 = vpop.xlane.xlu0 %1115
        %v1117 = vsub.f32 %v1109, %v1116
        %v1118 = vmul.f32 %v1117, 1.442695
        %v1119 = vpow.pop %v1118
        %v1120 = vsel %vm956, %v1119, 0.0
        %1121 = vadd.xlane.f32.xlu0 %v1120
        %v1122 = vpop.xlane.xlu0 %1121
        %v1123 = vrcp.pop %v1122
        %v1124 = vmul.f32 %v1119, %v1123
        %v1125 = vpack.c.bf16 %v1124, %v1124
        %1126 = vrot.lane.b32.xlu0 %v948, 56
        %v1127 = vpop.permute.xlu0 %1126
        %v1129 = vsel %vm956, %v1125, 0
        %v1132 = vsel %vm1020, %v1127, 0
        %1134 = vmatprep.subr.bf16.mxu0 0
        %1135 = vmatpush1.bf16.msra.mxu0 %v1132
        %1136 = vmatprep.subr.bf16.mxu0 0
        %1137 = vmatpush1.bf16.msra.mxu0 0
        %1138 = vmatprep.subr.bf16.mxu0 0
        %1139 = vmatpush1.bf16.msra.mxu0 0
        %1140 = vmatprep.subr.bf16.mxu0 0
        %1141 = vmatpush1.bf16.msra.mxu0 0
        %1142 = vmatprep.subr.bf16.mxu0 0
        %1143 = vmatpush1.bf16.msra.mxu0 0
        %1144 = vmatprep.subr.bf16.mxu0 0
        %1145 = vmatpush1.bf16.msra.mxu0 0
        %1146 = vmatprep.subr.bf16.mxu0 0
        %1147 = vmatpush1.bf16.msra.mxu0 0
        %1148 = vmatprep.subr.bf16.mxu0 0
        %1149 = vmatpush1.bf16.msra.mxu0 0
        %1150 = vmatprep.subr.bf16.mxu0 0
        %1151 = vmatpush1.bf16.msra.mxu0 0
        %1152 = vmatprep.subr.bf16.mxu0 0
        %1153 = vmatpush1.bf16.msra.mxu0 0
        %1154 = vmatprep.subr.bf16.mxu0 0
        %1155 = vmatpush1.bf16.msra.mxu0 0
        %1156 = vmatprep.subr.bf16.mxu0 0
        %1157 = vmatpush1.bf16.msra.mxu0 0
        %1158 = vmatprep.subr.bf16.mxu0 0
        %1159 = vmatpush1.bf16.msra.mxu0 0
        %1160 = vmatprep.subr.bf16.mxu0 0
        %1161 = vmatpush1.bf16.msra.mxu0 0
        %1162 = vmatprep.subr.bf16.mxu0 0
        %1163 = vmatpush1.bf16.msra.mxu0 0
        %1164 = vmatprep.subr.bf16.mxu0 0
        %1165 = vmatpush1.bf16.msra.mxu0 0
        %1166 = vmatprep.mubr.bf16.mxu0 0
        %1167 = vmatmul.mubr.bf16.gmra.mrb[0].mxu0 %v1129
        %v1168 = vpop.f32.mrb[0].mxu0
        %v1169 = vadd.f32 0.0, %v1168
        %v1170 = vpop.f32.mrb[0].mxu0
        %v1171 = vpop.f32.mrb[0].mxu0
        %v1172 = vpop.f32.mrb[0].mxu0
        %1173 = vdwg.mxu0
        %1174 = vrot.lane.b32.xlu0 %v948, 112
        %v1175 = vpop.permute.xlu0 %1174
        %1176 = vrot.lane.b32.xlu0 %v948, 80
        %v1177 = vpop.permute.xlu0 %1176
        %v1179 = vsel %vm956, %v1175, 0
        %v1182 = vsel %vm956, %v1177, 0
        %1184 = vmatprep.subr.bf16.mxu0 0
        %1185 = vmatpush1.bf16.xpose.msra.mxu0 %v1182
        %1186 = vmatprep.subr.bf16.mxu0 0
        %1187 = vmatpush1.bf16.xpose.msra.mxu0 0
        %1188 = vmatprep.subr.bf16.mxu0 0
        %1189 = vmatpush1.bf16.xpose.msra.mxu0 0
        %1190 = vmatprep.subr.bf16.mxu0 0
        %1191 = vmatpush1.bf16.xpose.msra.mxu0 0
        %1192 = vmatprep.subr.bf16.mxu0 0
        %1193 = vmatpush1.bf16.xpose.msra.mxu0 0
        %1194 = vmatprep.subr.bf16.mxu0 0
        %1195 = vmatpush1.bf16.xpose.msra.mxu0 0
        %1196 = vmatprep.subr.bf16.mxu0 0
        %1197 = vmatpush1.bf16.xpose.msra.mxu0 0
        %1198 = vmatprep.subr.bf16.mxu0 0
        %1199 = vmatpush1.bf16.xpose.msra.mxu0 0
        %1200 = vmatprep.subr.bf16.mxu0 0
        %1201 = vmatpush1.bf16.xpose.msra.mxu0 0
        %1202 = vmatprep.subr.bf16.mxu0 0
        %1203 = vmatpush1.bf16.xpose.msra.mxu0 0
        %1204 = vmatprep.subr.bf16.mxu0 0
        %1205 = vmatpush1.bf16.xpose.msra.mxu0 0
        %1206 = vmatprep.subr.bf16.mxu0 0
        %1207 = vmatpush1.bf16.xpose.msra.mxu0 0
        %1208 = vmatprep.subr.bf16.mxu0 0
        %1209 = vmatpush1.bf16.xpose.msra.mxu0 0
        %1210 = vmatprep.subr.bf16.mxu0 0
        %1211 = vmatpush1.bf16.xpose.msra.mxu0 0
        %1212 = vmatprep.subr.bf16.mxu0 0
        %1213 = vmatpush1.bf16.xpose.msra.mxu0 0
        %1214 = vmatprep.subr.bf16.mxu0 0
        %1215 = vmatpush1.bf16.xpose.msra.mxu0 0
        %1216 = vmatprep.mubr.bf16.mxu0 0
        %1217 = vmatmul.mubr.bf16.gmra.mrb[0].mxu0 %v1179
        %v1218 = vpop.f32.mrb[0].mxu0
        %v1219 = vadd.f32 %v952, %v1218
        %v1220 = vpop.f32.mrb[0].mxu0
        %v1221 = vpop.f32.mrb[0].mxu0
        %v1222 = vpop.f32.mrb[0].mxu0
        %1223 = vdwg.mxu0
        %v1224 = vsel %vm956, %v1219, -inf
        %1225 = vmax.xlane.f32.xlu0 %v1224
        %v1226 = vpop.xlane.xlu0 %1225
        %v1227 = vsub.f32 %v1219, %v1226
        %v1228 = vmul.f32 %v1227, 1.442695
        %v1229 = vpow.pop %v1228
        %v1230 = vsel %vm956, %v1229, 0.0
        %1231 = vadd.xlane.f32.xlu0 %v1230
        %v1232 = vpop.xlane.xlu0 %1231
        %v1233 = vrcp.pop %v1232
        %v1234 = vmul.f32 %v1229, %v1233
        %v1235 = vpack.c.bf16 %v1234, %v1234
        %1236 = vrot.lane.b32.xlu0 %v948, 48
        %v1237 = vpop.permute.xlu0 %1236
        %v1239 = vsel %vm956, %v1235, 0
        %v1242 = vsel %vm1020, %v1237, 0
        %1244 = vmatprep.subr.bf16.mxu0 0
        %1245 = vmatpush1.bf16.msra.mxu0 %v1242
        %1246 = vmatprep.subr.bf16.mxu0 0
        %1247 = vmatpush1.bf16.msra.mxu0 0
        %1248 = vmatprep.subr.bf16.mxu0 0
        %1249 = vmatpush1.bf16.msra.mxu0 0
        %1250 = vmatprep.subr.bf16.mxu0 0
        %1251 = vmatpush1.bf16.msra.mxu0 0
        %1252 = vmatprep.subr.bf16.mxu0 0
        %1253 = vmatpush1.bf16.msra.mxu0 0
        %1254 = vmatprep.subr.bf16.mxu0 0
        %1255 = vmatpush1.bf16.msra.mxu0 0
        %1256 = vmatprep.subr.bf16.mxu0 0
        %1257 = vmatpush1.bf16.msra.mxu0 0
        %1258 = vmatprep.subr.bf16.mxu0 0
        %1259 = vmatpush1.bf16.msra.mxu0 0
        %1260 = vmatprep.subr.bf16.mxu0 0
        %1261 = vmatpush1.bf16.msra.mxu0 0
        %1262 = vmatprep.subr.bf16.mxu0 0
        %1263 = vmatpush1.bf16.msra.mxu0 0
        %1264 = vmatprep.subr.bf16.mxu0 0
        %1265 = vmatpush1.bf16.msra.mxu0 0
        %1266 = vmatprep.subr.bf16.mxu0 0
        %1267 = vmatpush1.bf16.msra.mxu0 0
        %1268 = vmatprep.subr.bf16.mxu0 0
        %1269 = vmatpush1.bf16.msra.mxu0 0
        %1270 = vmatprep.subr.bf16.mxu0 0
        %1271 = vmatpush1.bf16.msra.mxu0 0
        %1272 = vmatprep.subr.bf16.mxu0 0
        %1273 = vmatpush1.bf16.msra.mxu0 0
        %1274 = vmatprep.subr.bf16.mxu0 0
        %1275 = vmatpush1.bf16.msra.mxu0 0
        %1276 = vmatprep.mubr.bf16.mxu0 0
        %1277 = vmatmul.mubr.bf16.gmra.mrb[0].mxu0 %v1239
        %v1278 = vpop.f32.mrb[0].mxu0
        %v1279 = vadd.f32 0.0, %v1278
        %v1280 = vpop.f32.mrb[0].mxu0
        %v1281 = vpop.f32.mrb[0].mxu0
        %v1282 = vpop.f32.mrb[0].mxu0
        %1283 = vdwg.mxu0
        %1284 = vrot.lane.b32.xlu0 %v948, 104
        %v1285 = vpop.permute.xlu0 %1284
        %1286 = vrot.lane.b32.xlu0 %v948, 72
        %v1287 = vpop.permute.xlu0 %1286
        %v1289 = vsel %vm956, %v1285, 0
        %v1292 = vsel %vm956, %v1287, 0
        %1294 = vmatprep.subr.bf16.mxu0 0
        %1295 = vmatpush1.bf16.xpose.msra.mxu0 %v1292
        %1296 = vmatprep.subr.bf16.mxu0 0
        %1297 = vmatpush1.bf16.xpose.msra.mxu0 0
        %1298 = vmatprep.subr.bf16.mxu0 0
        %1299 = vmatpush1.bf16.xpose.msra.mxu0 0
        %1300 = vmatprep.subr.bf16.mxu0 0
        %1301 = vmatpush1.bf16.xpose.msra.mxu0 0
        %1302 = vmatprep.subr.bf16.mxu0 0
        %1303 = vmatpush1.bf16.xpose.msra.mxu0 0
        %1304 = vmatprep.subr.bf16.mxu0 0
        %1305 = vmatpush1.bf16.xpose.msra.mxu0 0
        %1306 = vmatprep.subr.bf16.mxu0 0
        %1307 = vmatpush1.bf16.xpose.msra.mxu0 0
        %1308 = vmatprep.subr.bf16.mxu0 0
        %1309 = vmatpush1.bf16.xpose.msra.mxu0 0
        %1310 = vmatprep.subr.bf16.mxu0 0
        %1311 = vmatpush1.bf16.xpose.msra.mxu0 0
        %1312 = vmatprep.subr.bf16.mxu0 0
        %1313 = vmatpush1.bf16.xpose.msra.mxu0 0
        %1314 = vmatprep.subr.bf16.mxu0 0
        %1315 = vmatpush1.bf16.xpose.msra.mxu0 0
        %1316 = vmatprep.subr.bf16.mxu0 0
        %1317 = vmatpush1.bf16.xpose.msra.mxu0 0
        %1318 = vmatprep.subr.bf16.mxu0 0
        %1319 = vmatpush1.bf16.xpose.msra.mxu0 0
        %1320 = vmatprep.subr.bf16.mxu0 0
        %1321 = vmatpush1.bf16.xpose.msra.mxu0 0
        %1322 = vmatprep.subr.bf16.mxu0 0
        %1323 = vmatpush1.bf16.xpose.msra.mxu0 0
        %1324 = vmatprep.subr.bf16.mxu0 0
        %1325 = vmatpush1.bf16.xpose.msra.mxu0 0
        %1326 = vmatprep.mubr.bf16.mxu0 0
        %1327 = vmatmul.mubr.bf16.gmra.mrb[0].mxu0 %v1289
        %v1328 = vpop.f32.mrb[0].mxu0
        %v1329 = vadd.f32 %v952, %v1328
        %v1330 = vpop.f32.mrb[0].mxu0
        %v1331 = vpop.f32.mrb[0].mxu0
        %v1332 = vpop.f32.mrb[0].mxu0
        %1333 = vdwg.mxu0
        %v1334 = vsel %vm956, %v1329, -inf
        %1335 = vmax.xlane.f32.xlu0 %v1334
        %v1336 = vpop.xlane.xlu0 %1335
        %v1337 = vsub.f32 %v1329, %v1336
        %v1338 = vmul.f32 %v1337, 1.442695
        %v1339 = vpow.pop %v1338
        %v1340 = vsel %vm956, %v1339, 0.0
        %1341 = vadd.xlane.f32.xlu0 %v1340
        %v1342 = vpop.xlane.xlu0 %1341
        %v1343 = vrcp.pop %v1342
        %v1344 = vmul.f32 %v1339, %v1343
        %v1345 = vpack.c.bf16 %v1344, %v1344
        %1346 = vrot.lane.b32.xlu0 %v948, 40
        %v1347 = vpop.permute.xlu0 %1346
        %v1349 = vsel %vm956, %v1345, 0
        %v1352 = vsel %vm1020, %v1347, 0
        %1354 = vmatprep.subr.bf16.mxu0 0
        %1355 = vmatpush1.bf16.msra.mxu0 %v1352
        %1356 = vmatprep.subr.bf16.mxu0 0
        %1357 = vmatpush1.bf16.msra.mxu0 0
        %1358 = vmatprep.subr.bf16.mxu0 0
        %1359 = vmatpush1.bf16.msra.mxu0 0
        %1360 = vmatprep.subr.bf16.mxu0 0
        %1361 = vmatpush1.bf16.msra.mxu0 0
        %1362 = vmatprep.subr.bf16.mxu0 0
        %1363 = vmatpush1.bf16.msra.mxu0 0
        %1364 = vmatprep.subr.bf16.mxu0 0
        %1365 = vmatpush1.bf16.msra.mxu0 0
        %1366 = vmatprep.subr.bf16.mxu0 0
        %1367 = vmatpush1.bf16.msra.mxu0 0
        %1368 = vmatprep.subr.bf16.mxu0 0
        %1369 = vmatpush1.bf16.msra.mxu0 0
        %1370 = vmatprep.subr.bf16.mxu0 0
        %1371 = vmatpush1.bf16.msra.mxu0 0
        %1372 = vmatprep.subr.bf16.mxu0 0
        %1373 = vmatpush1.bf16.msra.mxu0 0
        %1374 = vmatprep.subr.bf16.mxu0 0
        %1375 = vmatpush1.bf16.msra.mxu0 0
        %1376 = vmatprep.subr.bf16.mxu0 0
        %1377 = vmatpush1.bf16.msra.mxu0 0
        %1378 = vmatprep.subr.bf16.mxu0 0
        %1379 = vmatpush1.bf16.msra.mxu0 0
        %1380 = vmatprep.subr.bf16.mxu0 0
        %1381 = vmatpush1.bf16.msra.mxu0 0
        %1382 = vmatprep.subr.bf16.mxu0 0
        %1383 = vmatpush1.bf16.msra.mxu0 0
        %1384 = vmatprep.subr.bf16.mxu0 0
        %1385 = vmatpush1.bf16.msra.mxu0 0
        %1386 = vmatprep.mubr.bf16.mxu0 0
        %1387 = vmatmul.mubr.bf16.gmra.mrb[0].mxu0 %v1349
        %v1388 = vpop.f32.mrb[0].mxu0
        %v1389 = vadd.f32 0.0, %v1388
        %v1390 = vpop.f32.mrb[0].mxu0
        %v1391 = vpop.f32.mrb[0].mxu0
        %v1392 = vpop.f32.mrb[0].mxu0
        %1393 = vdwg.mxu0
        %1395 = vrot.lane.b32.xlu0 %v1169, 8
        %v1396 = vpop.permute.xlu0 %1395
        %1399 = vrot.lane.b32.xlu0 %v1279, 16
        %v1400 = vpop.permute.xlu0 %1399
        %1403 = vrot.lane.b32.xlu0 %v1389, 24
        %v1404 = vpop.permute.xlu0 %1403
        %v1406 = vsel %vm956, %v1059, %v1396
        %vm1407 = vcmask 130048
        %v1408 = vsel %vm1407, %v1406, %v1400
        %vm1409 = vcmask 195584
        %v1410 = vsel %vm1409, %v1408, %v1404
        %v1411 = vpack.c.bf16 %v944, %v944
        %v1412 = vlaneseq
        %v1413 = vshrl.u32 %v1412, 7
        %v1414 = vsub.s32 1, %v1413
        %v1415 = vrot.slane %v947, %v1414
        %1417 = vrot.lane.b32.xlu0 %v1411, 96
        %v1418 = vpop.permute.xlu0 %1417
        %v1420 = vsel %vm956, %v1411, 0
        %v1423 = vsel %vm956, %v1418, 0
        %1425 = vmatprep.subr.bf16.mxu0 0
        %1426 = vmatpush1.bf16.xpose.msra.mxu0 %v1423
        %1427 = vmatprep.subr.bf16.mxu0 0
        %1428 = vmatpush1.bf16.xpose.msra.mxu0 0
        %1429 = vmatprep.subr.bf16.mxu0 0
        %1430 = vmatpush1.bf16.xpose.msra.mxu0 0
        %1431 = vmatprep.subr.bf16.mxu0 0
        %1432 = vmatpush1.bf16.xpose.msra.mxu0 0
        %1433 = vmatprep.subr.bf16.mxu0 0
        %1434 = vmatpush1.bf16.xpose.msra.mxu0 0
        %1435 = vmatprep.subr.bf16.mxu0 0
        %1436 = vmatpush1.bf16.xpose.msra.mxu0 0
        %1437 = vmatprep.subr.bf16.mxu0 0
        %1438 = vmatpush1.bf16.xpose.msra.mxu0 0
        %1439 = vmatprep.subr.bf16.mxu0 0
        %1440 = vmatpush1.bf16.xpose.msra.mxu0 0
        %1441 = vmatprep.subr.bf16.mxu0 0
        %1442 = vmatpush1.bf16.xpose.msra.mxu0 0
        %1443 = vmatprep.subr.bf16.mxu0 0
        %1444 = vmatpush1.bf16.xpose.msra.mxu0 0
        %1445 = vmatprep.subr.bf16.mxu0 0
        %1446 = vmatpush1.bf16.xpose.msra.mxu0 0
        %1447 = vmatprep.subr.bf16.mxu0 0
        %1448 = vmatpush1.bf16.xpose.msra.mxu0 0
        %1449 = vmatprep.subr.bf16.mxu0 0
        %1450 = vmatpush1.bf16.xpose.msra.mxu0 0
        %1451 = vmatprep.subr.bf16.mxu0 0
        %1452 = vmatpush1.bf16.xpose.msra.mxu0 0
        %1453 = vmatprep.subr.bf16.mxu0 0
        %1454 = vmatpush1.bf16.xpose.msra.mxu0 0
        %1455 = vmatprep.subr.bf16.mxu0 0
        %1456 = vmatpush1.bf16.xpose.msra.mxu0 0
        %1457 = vmatprep.mubr.bf16.mxu0 0
        %1458 = vmatmul.mubr.bf16.gmra.mrb[0].mxu0 %v1420
        %v1459 = vpop.f32.mrb[0].mxu0
        %v1460 = vadd.f32 %v1415, %v1459
        %v1461 = vpop.f32.mrb[0].mxu0
        %v1462 = vpop.f32.mrb[0].mxu0
        %v1463 = vpop.f32.mrb[0].mxu0
        %1464 = vdwg.mxu0
        %v1465 = vsel %vm956, %v1460, -inf
        %1466 = vmax.xlane.f32.xlu0 %v1465
        %v1467 = vpop.xlane.xlu0 %1466
        %v1468 = vsub.f32 %v1460, %v1467
        %v1469 = vmul.f32 %v1468, 1.442695
        %v1470 = vpow.pop %v1469
        %v1471 = vsel %vm956, %v1470, 0.0
        %1472 = vadd.xlane.f32.xlu0 %v1471
        %v1473 = vpop.xlane.xlu0 %1472
        %v1474 = vrcp.pop %v1473
        %v1475 = vmul.f32 %v1470, %v1474
        %v1476 = vpack.c.bf16 %v1475, %v1475
        %1477 = vrot.lane.b32.xlu0 %v1411, 64
        %v1478 = vpop.permute.xlu0 %1477
        %v1480 = vsel %vm956, %v1476, 0
        %v1483 = vsel %vm1020, %v1478, 0
        %1485 = vmatprep.subr.bf16.mxu0 0
        %1486 = vmatpush1.bf16.msra.mxu0 %v1483
        %1487 = vmatprep.subr.bf16.mxu0 0
        %1488 = vmatpush1.bf16.msra.mxu0 0
        %1489 = vmatprep.subr.bf16.mxu0 0
        %1490 = vmatpush1.bf16.msra.mxu0 0
        %1491 = vmatprep.subr.bf16.mxu0 0
        %1492 = vmatpush1.bf16.msra.mxu0 0
        %1493 = vmatprep.subr.bf16.mxu0 0
        %1494 = vmatpush1.bf16.msra.mxu0 0
        %1495 = vmatprep.subr.bf16.mxu0 0
        %1496 = vmatpush1.bf16.msra.mxu0 0
        %1497 = vmatprep.subr.bf16.mxu0 0
        %1498 = vmatpush1.bf16.msra.mxu0 0
        %1499 = vmatprep.subr.bf16.mxu0 0
        %1500 = vmatpush1.bf16.msra.mxu0 0
        %1501 = vmatprep.subr.bf16.mxu0 0
        %1502 = vmatpush1.bf16.msra.mxu0 0
        %1503 = vmatprep.subr.bf16.mxu0 0
        %1504 = vmatpush1.bf16.msra.mxu0 0
        %1505 = vmatprep.subr.bf16.mxu0 0
        %1506 = vmatpush1.bf16.msra.mxu0 0
        %1507 = vmatprep.subr.bf16.mxu0 0
        %1508 = vmatpush1.bf16.msra.mxu0 0
        %1509 = vmatprep.subr.bf16.mxu0 0
        %1510 = vmatpush1.bf16.msra.mxu0 0
        %1511 = vmatprep.subr.bf16.mxu0 0
        %1512 = vmatpush1.bf16.msra.mxu0 0
        %1513 = vmatprep.subr.bf16.mxu0 0
        %1514 = vmatpush1.bf16.msra.mxu0 0
        %1515 = vmatprep.subr.bf16.mxu0 0
        %1516 = vmatpush1.bf16.msra.mxu0 0
        %1517 = vmatprep.mubr.bf16.mxu0 0
        %1518 = vmatmul.mubr.bf16.gmra.mrb[0].mxu0 %v1480
        %v1519 = vpop.f32.mrb[0].mxu0
        %v1520 = vadd.f32 0.0, %v1519
        %v1521 = vpop.f32.mrb[0].mxu0
        %v1522 = vpop.f32.mrb[0].mxu0
        %v1523 = vpop.f32.mrb[0].mxu0
        %1524 = vdwg.mxu0
        %1525 = vrot.lane.b32.xlu0 %v1411, 120
        %v1526 = vpop.permute.xlu0 %1525
        %1527 = vrot.lane.b32.xlu0 %v1411, 88
        %v1528 = vpop.permute.xlu0 %1527
        %v1530 = vsel %vm956, %v1526, 0
        %v1533 = vsel %vm956, %v1528, 0
        %1535 = vmatprep.subr.bf16.mxu0 0
        %1536 = vmatpush1.bf16.xpose.msra.mxu0 %v1533
        %1537 = vmatprep.subr.bf16.mxu0 0
        %1538 = vmatpush1.bf16.xpose.msra.mxu0 0
        %1539 = vmatprep.subr.bf16.mxu0 0
        %1540 = vmatpush1.bf16.xpose.msra.mxu0 0
        %1541 = vmatprep.subr.bf16.mxu0 0
        %1542 = vmatpush1.bf16.xpose.msra.mxu0 0
        %1543 = vmatprep.subr.bf16.mxu0 0
        %1544 = vmatpush1.bf16.xpose.msra.mxu0 0
        %1545 = vmatprep.subr.bf16.mxu0 0
        %1546 = vmatpush1.bf16.xpose.msra.mxu0 0
        %1547 = vmatprep.subr.bf16.mxu0 0
        %1548 = vmatpush1.bf16.xpose.msra.mxu0 0
        %1549 = vmatprep.subr.bf16.mxu0 0
        %1550 = vmatpush1.bf16.xpose.msra.mxu0 0
        %1551 = vmatprep.subr.bf16.mxu0 0
        %1552 = vmatpush1.bf16.xpose.msra.mxu0 0
        %1553 = vmatprep.subr.bf16.mxu0 0
        %1554 = vmatpush1.bf16.xpose.msra.mxu0 0
        %1555 = vmatprep.subr.bf16.mxu0 0
        %1556 = vmatpush1.bf16.xpose.msra.mxu0 0
        %1557 = vmatprep.subr.bf16.mxu0 0
        %1558 = vmatpush1.bf16.xpose.msra.mxu0 0
        %1559 = vmatprep.subr.bf16.mxu0 0
        %1560 = vmatpush1.bf16.xpose.msra.mxu0 0
        %1561 = vmatprep.subr.bf16.mxu0 0
        %1562 = vmatpush1.bf16.xpose.msra.mxu0 0
        %1563 = vmatprep.subr.bf16.mxu0 0
        %1564 = vmatpush1.bf16.xpose.msra.mxu0 0
        %1565 = vmatprep.subr.bf16.mxu0 0
        %1566 = vmatpush1.bf16.xpose.msra.mxu0 0
        %1567 = vmatprep.mubr.bf16.mxu0 0
        %1568 = vmatmul.mubr.bf16.gmra.mrb[0].mxu0 %v1530
        %v1569 = vpop.f32.mrb[0].mxu0
        %v1570 = vadd.f32 %v1415, %v1569
        %v1571 = vpop.f32.mrb[0].mxu0
        %v1572 = vpop.f32.mrb[0].mxu0
        %v1573 = vpop.f32.mrb[0].mxu0
        %1574 = vdwg.mxu0
        %v1575 = vsel %vm956, %v1570, -inf
        %1576 = vmax.xlane.f32.xlu0 %v1575
        %v1577 = vpop.xlane.xlu0 %1576
        %v1578 = vsub.f32 %v1570, %v1577
        %v1579 = vmul.f32 %v1578, 1.442695
        %v1580 = vpow.pop %v1579
        %v1581 = vsel %vm956, %v1580, 0.0
        %1582 = vadd.xlane.f32.xlu0 %v1581
        %v1583 = vpop.xlane.xlu0 %1582
        %v1584 = vrcp.pop %v1583
        %v1585 = vmul.f32 %v1580, %v1584
        %v1586 = vpack.c.bf16 %v1585, %v1585
        %1587 = vrot.lane.b32.xlu0 %v1411, 56
        %v1588 = vpop.permute.xlu0 %1587
        %v1590 = vsel %vm956, %v1586, 0
        %v1593 = vsel %vm1020, %v1588, 0
        %1595 = vmatprep.subr.bf16.mxu0 0
        %1596 = vmatpush1.bf16.msra.mxu0 %v1593
        %1597 = vmatprep.subr.bf16.mxu0 0
        %1598 = vmatpush1.bf16.msra.mxu0 0
        %1599 = vmatprep.subr.bf16.mxu0 0
        %1600 = vmatpush1.bf16.msra.mxu0 0
        %1601 = vmatprep.subr.bf16.mxu0 0
        %1602 = vmatpush1.bf16.msra.mxu0 0
        %1603 = vmatprep.subr.bf16.mxu0 0
        %1604 = vmatpush1.bf16.msra.mxu0 0
        %1605 = vmatprep.subr.bf16.mxu0 0
        %1606 = vmatpush1.bf16.msra.mxu0 0
        %1607 = vmatprep.subr.bf16.mxu0 0
        %1608 = vmatpush1.bf16.msra.mxu0 0
        %1609 = vmatprep.subr.bf16.mxu0 0
        %1610 = vmatpush1.bf16.msra.mxu0 0
        %1611 = vmatprep.subr.bf16.mxu0 0
        %1612 = vmatpush1.bf16.msra.mxu0 0
        %1613 = vmatprep.subr.bf16.mxu0 0
        %1614 = vmatpush1.bf16.msra.mxu0 0
        %1615 = vmatprep.subr.bf16.mxu0 0
        %1616 = vmatpush1.bf16.msra.mxu0 0
        %1617 = vmatprep.subr.bf16.mxu0 0
        %1618 = vmatpush1.bf16.msra.mxu0 0
        %1619 = vmatprep.subr.bf16.mxu0 0
        %1620 = vmatpush1.bf16.msra.mxu0 0
        %1621 = vmatprep.subr.bf16.mxu0 0
        %1622 = vmatpush1.bf16.msra.mxu0 0
        %1623 = vmatprep.subr.bf16.mxu0 0
        %1624 = vmatpush1.bf16.msra.mxu0 0
        %1625 = vmatprep.subr.bf16.mxu0 0
        %1626 = vmatpush1.bf16.msra.mxu0 0
        %1627 = vmatprep.mubr.bf16.mxu0 0
        %1628 = vmatmul.mubr.bf16.gmra.mrb[0].mxu0 %v1590
        %v1629 = vpop.f32.mrb[0].mxu0
        %v1630 = vadd.f32 0.0, %v1629
        %v1631 = vpop.f32.mrb[0].mxu0
        %v1632 = vpop.f32.mrb[0].mxu0
        %v1633 = vpop.f32.mrb[0].mxu0
        %1634 = vdwg.mxu0
        %1635 = vrot.lane.b32.xlu0 %v1411, 112
        %v1636 = vpop.permute.xlu0 %1635
        %1637 = vrot.lane.b32.xlu0 %v1411, 80
        %v1638 = vpop.permute.xlu0 %1637
        %v1640 = vsel %vm956, %v1636, 0
        %v1643 = vsel %vm956, %v1638, 0
        %1645 = vmatprep.subr.bf16.mxu0 0
        %1646 = vmatpush1.bf16.xpose.msra.mxu0 %v1643
        %1647 = vmatprep.subr.bf16.mxu0 0
        %1648 = vmatpush1.bf16.xpose.msra.mxu0 0
        %1649 = vmatprep.subr.bf16.mxu0 0
        %1650 = vmatpush1.bf16.xpose.msra.mxu0 0
        %1651 = vmatprep.subr.bf16.mxu0 0
        %1652 = vmatpush1.bf16.xpose.msra.mxu0 0
        %1653 = vmatprep.subr.bf16.mxu0 0
        %1654 = vmatpush1.bf16.xpose.msra.mxu0 0
        %1655 = vmatprep.subr.bf16.mxu0 0
        %1656 = vmatpush1.bf16.xpose.msra.mxu0 0
        %1657 = vmatprep.subr.bf16.mxu0 0
        %1658 = vmatpush1.bf16.xpose.msra.mxu0 0
        %1659 = vmatprep.subr.bf16.mxu0 0
        %1660 = vmatpush1.bf16.xpose.msra.mxu0 0
        %1661 = vmatprep.subr.bf16.mxu0 0
        %1662 = vmatpush1.bf16.xpose.msra.mxu0 0
        %1663 = vmatprep.subr.bf16.mxu0 0
        %1664 = vmatpush1.bf16.xpose.msra.mxu0 0
        %1665 = vmatprep.subr.bf16.mxu0 0
        %1666 = vmatpush1.bf16.xpose.msra.mxu0 0
        %1667 = vmatprep.subr.bf16.mxu0 0
        %1668 = vmatpush1.bf16.xpose.msra.mxu0 0
        %1669 = vmatprep.subr.bf16.mxu0 0
        %1670 = vmatpush1.bf16.xpose.msra.mxu0 0
        %1671 = vmatprep.subr.bf16.mxu0 0
        %1672 = vmatpush1.bf16.xpose.msra.mxu0 0
        %1673 = vmatprep.subr.bf16.mxu0 0
        %1674 = vmatpush1.bf16.xpose.msra.mxu0 0
        %1675 = vmatprep.subr.bf16.mxu0 0
        %1676 = vmatpush1.bf16.xpose.msra.mxu0 0
        %1677 = vmatprep.mubr.bf16.mxu0 0
        %1678 = vmatmul.mubr.bf16.gmra.mrb[0].mxu0 %v1640
        %v1679 = vpop.f32.mrb[0].mxu0
        %v1680 = vadd.f32 %v1415, %v1679
        %v1681 = vpop.f32.mrb[0].mxu0
        %v1682 = vpop.f32.mrb[0].mxu0
        %v1683 = vpop.f32.mrb[0].mxu0
        %1684 = vdwg.mxu0
        %v1685 = vsel %vm956, %v1680, -inf
        %1686 = vmax.xlane.f32.xlu0 %v1685
        %v1687 = vpop.xlane.xlu0 %1686
        %v1688 = vsub.f32 %v1680, %v1687
        %v1689 = vmul.f32 %v1688, 1.442695
        %v1690 = vpow.pop %v1689
        %v1691 = vsel %vm956, %v1690, 0.0
        %1692 = vadd.xlane.f32.xlu0 %v1691
        %v1693 = vpop.xlane.xlu0 %1692
        %v1694 = vrcp.pop %v1693
        %v1695 = vmul.f32 %v1690, %v1694
        %v1696 = vpack.c.bf16 %v1695, %v1695
        %1697 = vrot.lane.b32.xlu0 %v1411, 48
        %v1698 = vpop.permute.xlu0 %1697
        %v1700 = vsel %vm956, %v1696, 0
        %v1703 = vsel %vm1020, %v1698, 0
        %1705 = vmatprep.subr.bf16.mxu0 0
        %1706 = vmatpush1.bf16.msra.mxu0 %v1703
        %1707 = vmatprep.subr.bf16.mxu0 0
        %1708 = vmatpush1.bf16.msra.mxu0 0
        %1709 = vmatprep.subr.bf16.mxu0 0
        %1710 = vmatpush1.bf16.msra.mxu0 0
        %1711 = vmatprep.subr.bf16.mxu0 0
        %1712 = vmatpush1.bf16.msra.mxu0 0
        %1713 = vmatprep.subr.bf16.mxu0 0
        %1714 = vmatpush1.bf16.msra.mxu0 0
        %1715 = vmatprep.subr.bf16.mxu0 0
        %1716 = vmatpush1.bf16.msra.mxu0 0
        %1717 = vmatprep.subr.bf16.mxu0 0
        %1718 = vmatpush1.bf16.msra.mxu0 0
        %1719 = vmatprep.subr.bf16.mxu0 0
        %1720 = vmatpush1.bf16.msra.mxu0 0
        %1721 = vmatprep.subr.bf16.mxu0 0
        %1722 = vmatpush1.bf16.msra.mxu0 0
        %1723 = vmatprep.subr.bf16.mxu0 0
        %1724 = vmatpush1.bf16.msra.mxu0 0
        %1725 = vmatprep.subr.bf16.mxu0 0
        %1726 = vmatpush1.bf16.msra.mxu0 0
        %1727 = vmatprep.subr.bf16.mxu0 0
        %1728 = vmatpush1.bf16.msra.mxu0 0
        %1729 = vmatprep.subr.bf16.mxu0 0
        %1730 = vmatpush1.bf16.msra.mxu0 0
        %1731 = vmatprep.subr.bf16.mxu0 0
        %1732 = vmatpush1.bf16.msra.mxu0 0
        %1733 = vmatprep.subr.bf16.mxu0 0
        %1734 = vmatpush1.bf16.msra.mxu0 0
        %1735 = vmatprep.subr.bf16.mxu0 0
        %1736 = vmatpush1.bf16.msra.mxu0 0
        %1737 = vmatprep.mubr.bf16.mxu0 0
        %1738 = vmatmul.mubr.bf16.gmra.mrb[0].mxu0 %v1700
        %v1739 = vpop.f32.mrb[0].mxu0
        %v1740 = vadd.f32 0.0, %v1739
        %v1741 = vpop.f32.mrb[0].mxu0
        %v1742 = vpop.f32.mrb[0].mxu0
        %v1743 = vpop.f32.mrb[0].mxu0
        %1744 = vdwg.mxu0
        %1745 = vrot.lane.b32.xlu0 %v1411, 104
        %v1746 = vpop.permute.xlu0 %1745
        %1747 = vrot.lane.b32.xlu0 %v1411, 72
        %v1748 = vpop.permute.xlu0 %1747
        %v1750 = vsel %vm956, %v1746, 0
        %v1753 = vsel %vm956, %v1748, 0
        %1755 = vmatprep.subr.bf16.mxu0 0
        %1756 = vmatpush1.bf16.xpose.msra.mxu0 %v1753
        %1757 = vmatprep.subr.bf16.mxu0 0
        %1758 = vmatpush1.bf16.xpose.msra.mxu0 0
        %1759 = vmatprep.subr.bf16.mxu0 0
        %1760 = vmatpush1.bf16.xpose.msra.mxu0 0
        %1761 = vmatprep.subr.bf16.mxu0 0
        %1762 = vmatpush1.bf16.xpose.msra.mxu0 0
        %1763 = vmatprep.subr.bf16.mxu0 0
        %1764 = vmatpush1.bf16.xpose.msra.mxu0 0
        %1765 = vmatprep.subr.bf16.mxu0 0
        %1766 = vmatpush1.bf16.xpose.msra.mxu0 0
        %1767 = vmatprep.subr.bf16.mxu0 0
        %1768 = vmatpush1.bf16.xpose.msra.mxu0 0
        %1769 = vmatprep.subr.bf16.mxu0 0
        %1770 = vmatpush1.bf16.xpose.msra.mxu0 0
        %1771 = vmatprep.subr.bf16.mxu0 0
        %1772 = vmatpush1.bf16.xpose.msra.mxu0 0
        %1773 = vmatprep.subr.bf16.mxu0 0
        %1774 = vmatpush1.bf16.xpose.msra.mxu0 0
        %1775 = vmatprep.subr.bf16.mxu0 0
        %1776 = vmatpush1.bf16.xpose.msra.mxu0 0
        %1777 = vmatprep.subr.bf16.mxu0 0
        %1778 = vmatpush1.bf16.xpose.msra.mxu0 0
        %1779 = vmatprep.subr.bf16.mxu0 0
        %1780 = vmatpush1.bf16.xpose.msra.mxu0 0
        %1781 = vmatprep.subr.bf16.mxu0 0
        %1782 = vmatpush1.bf16.xpose.msra.mxu0 0
        %1783 = vmatprep.subr.bf16.mxu0 0
        %1784 = vmatpush1.bf16.xpose.msra.mxu0 0
        %1785 = vmatprep.subr.bf16.mxu0 0
        %1786 = vmatpush1.bf16.xpose.msra.mxu0 0
        %1787 = vmatprep.mubr.bf16.mxu0 0
        %1788 = vmatmul.mubr.bf16.gmra.mrb[0].mxu0 %v1750
        %v1789 = vpop.f32.mrb[0].mxu0
        %v1790 = vadd.f32 %v1415, %v1789
        %v1791 = vpop.f32.mrb[0].mxu0
        %v1792 = vpop.f32.mrb[0].mxu0
        %v1793 = vpop.f32.mrb[0].mxu0
        %1794 = vdwg.mxu0
        %v1795 = vsel %vm956, %v1790, -inf
        %1796 = vmax.xlane.f32.xlu0 %v1795
        %v1797 = vpop.xlane.xlu0 %1796
        %v1798 = vsub.f32 %v1790, %v1797
        %v1799 = vmul.f32 %v1798, 1.442695
        %v1800 = vpow.pop %v1799
        %v1801 = vsel %vm956, %v1800, 0.0
        %1802 = vadd.xlane.f32.xlu0 %v1801
        %v1803 = vpop.xlane.xlu0 %1802
        %v1804 = vrcp.pop %v1803
        %v1805 = vmul.f32 %v1800, %v1804
        %v1806 = vpack.c.bf16 %v1805, %v1805
        %1807 = vrot.lane.b32.xlu0 %v1411, 40
        %v1808 = vpop.permute.xlu0 %1807
        %v1810 = vsel %vm956, %v1806, 0
        %v1813 = vsel %vm1020, %v1808, 0
        %1815 = vmatprep.subr.bf16.mxu0 0
        %1816 = vmatpush1.bf16.msra.mxu0 %v1813
        %1817 = vmatprep.subr.bf16.mxu0 0
        %1818 = vmatpush1.bf16.msra.mxu0 0
        %1819 = vmatprep.subr.bf16.mxu0 0
        %1820 = vmatpush1.bf16.msra.mxu0 0
        %1821 = vmatprep.subr.bf16.mxu0 0
        %1822 = vmatpush1.bf16.msra.mxu0 0
        %1823 = vmatprep.subr.bf16.mxu0 0
        %1824 = vmatpush1.bf16.msra.mxu0 0
        %1825 = vmatprep.subr.bf16.mxu0 0
        %1826 = vmatpush1.bf16.msra.mxu0 0
        %1827 = vmatprep.subr.bf16.mxu0 0
        %1828 = vmatpush1.bf16.msra.mxu0 0
        %1829 = vmatprep.subr.bf16.mxu0 0
        %1830 = vmatpush1.bf16.msra.mxu0 0
        %1831 = vmatprep.subr.bf16.mxu0 0
        %1832 = vmatpush1.bf16.msra.mxu0 0
        %1833 = vmatprep.subr.bf16.mxu0 0
        %1834 = vmatpush1.bf16.msra.mxu0 0
        %1835 = vmatprep.subr.bf16.mxu0 0
        %1836 = vmatpush1.bf16.msra.mxu0 0
        %1837 = vmatprep.subr.bf16.mxu0 0
        %1838 = vmatpush1.bf16.msra.mxu0 0
        %1839 = vmatprep.subr.bf16.mxu0 0
        %1840 = vmatpush1.bf16.msra.mxu0 0
        %1841 = vmatprep.subr.bf16.mxu0 0
        %1842 = vmatpush1.bf16.msra.mxu0 0
        %1843 = vmatprep.subr.bf16.mxu0 0
        %1844 = vmatpush1.bf16.msra.mxu0 0
        %1845 = vmatprep.subr.bf16.mxu0 0
        %1846 = vmatpush1.bf16.msra.mxu0 0
        %1847 = vmatprep.mubr.bf16.mxu0 0
        %1848 = vmatmul.mubr.bf16.gmra.mrb[0].mxu0 %v1810
        %v1849 = vpop.f32.mrb[0].mxu0
        %v1850 = vadd.f32 0.0, %v1849
        %v1851 = vpop.f32.mrb[0].mxu0
        %v1852 = vpop.f32.mrb[0].mxu0
        %v1853 = vpop.f32.mrb[0].mxu0
        %1854 = vdwg.mxu0
        %1856 = vrot.lane.b32.xlu0 %v1630, 8
        %v1857 = vpop.permute.xlu0 %1856
        %1860 = vrot.lane.b32.xlu0 %v1740, 16
        %v1861 = vpop.permute.xlu0 %1860
        %1864 = vrot.lane.b32.xlu0 %v1850, 24
        %v1865 = vpop.permute.xlu0 %1864
        %v1867 = vsel %vm956, %v1520, %v1857
        %v1868 = vsel %vm1407, %v1867, %v1861
        %v1869 = vsel %vm1409, %v1868, %v1865
        %v1870 = vpack.c.bf16 %v1869, %v1410
        %v1871 = vld [vmem:[%s782] sm:$0xf]
        %v1872 = vld [vmem:[%s782 + $0x4] sm:$0xf]
        %v1873 = vld [vmem:[%s782 + $0x8] sm:$0xf]
        %v1874 = vld [vmem:[%s782 + $0xc] sm:$0xf]
        %v1875 = vld [vmem:[%s785] sm:$0x1]
        %v1877 = vlaneseq
        %v1878 = vshrl.u32 %v1877, 7
        %v1879 = vsub.s32 0, %v1878
        %v1880 = vrot.slane %v1875, %v1879
        %v1886 = vunpack.c.l.b16 %v1871
        %v1887 = vunpack.c.l.b16 %v1872
        %v1888 = vunpack.c.l.b16 %v1873
        %v1889 = vunpack.c.l.b16 %v1874
        %v1890 = vpack.c.b16 %v1887, %v1886
        %v1891 = vpack.c.b16 %v1889, %v1888
        %v1895 = vsel %vm902, %v1870, 0
        %1897 = vmatprep.subr.bf16.mxu0 0
        %1898 = vmatpush1.bf16.msra.mxu0 %v1890
        %1899 = vmatprep.subr.bf16.mxu0 0
        %1900 = vmatpush1.bf16.msra.mxu0 %v1891
        %1901 = vmatprep.subr.bf16.mxu0 0
        %1902 = vmatpush1.bf16.msra.mxu0 0
        %1903 = vmatprep.subr.bf16.mxu0 0
        %1904 = vmatpush1.bf16.msra.mxu0 0
        %1905 = vmatprep.subr.bf16.mxu0 0
        %1906 = vmatpush1.bf16.msra.mxu0 0
        %1907 = vmatprep.subr.bf16.mxu0 0
        %1908 = vmatpush1.bf16.msra.mxu0 0
        %1909 = vmatprep.subr.bf16.mxu0 0
        %1910 = vmatpush1.bf16.msra.mxu0 0
        %1911 = vmatprep.subr.bf16.mxu0 0
        %1912 = vmatpush1.bf16.msra.mxu0 0
        %1913 = vmatprep.subr.bf16.mxu0 0
        %1914 = vmatpush1.bf16.msra.mxu0 0
        %1915 = vmatprep.subr.bf16.mxu0 0
        %1916 = vmatpush1.bf16.msra.mxu0 0
        %1917 = vmatprep.subr.bf16.mxu0 0
        %1918 = vmatpush1.bf16.msra.mxu0 0
        %1919 = vmatprep.subr.bf16.mxu0 0
        %1920 = vmatpush1.bf16.msra.mxu0 0
        %1921 = vmatprep.subr.bf16.mxu0 0
        %1922 = vmatpush1.bf16.msra.mxu0 0
        %1923 = vmatprep.subr.bf16.mxu0 0
        %1924 = vmatpush1.bf16.msra.mxu0 0
        %1925 = vmatprep.subr.bf16.mxu0 0
        %1926 = vmatpush1.bf16.msra.mxu0 0
        %1927 = vmatprep.subr.bf16.mxu0 0
        %1928 = vmatpush1.bf16.msra.mxu0 0
        %1929 = vmatprep.mubr.bf16.mxu0 0
        %1930 = vmatmul.mubr.bf16.gmra.mrb[0].mxu0 %v1895
        %v1931 = vpop.f32.mrb[0].mxu0
        %v1932 = vadd.f32 %v1880, %v1931
        %v1933 = vpop.f32.mrb[0].mxu0
        %v1934 = vpop.f32.mrb[0].mxu0
        %v1935 = vadd.f32 %v1880, %v1934
        %v1936 = vpop.f32.mrb[0].mxu0
        %1937 = vdwg.mxu0
        %v1938 = vadd.f32 %v1932, %v876
        %v1939 = vadd.f32 %v1935, %v877
        %v1940 = vld [vmem:[%s788] sm:$0x1]
        %v1941 = vld [vmem:[%s791] sm:$0x1]
        %v1942 = vsel %vm902, %v1938, 0.0
        %1943 = vadd.xlane.f32.xlu0 %v1942
        %v1944 = vpop.xlane.xlu0 %1943
        %v1945 = vsel %vm902, %v1939, 0.0
        %1946 = vadd.xlane.f32.xlu0 %v1945
        %v1947 = vpop.xlane.xlu0 %1946
        %v1948 = vrcp.pop 32.0
        %v1949 = vmul.f32 %v1944, %v1948
        %v1950 = vmul.f32 %v1947, %v1948
        %v1951 = vsub.f32 %v1938, %v1949
        %v1952 = vsub.f32 %v1939, %v1950
        %v1953 = vmul.f32 %v1951, %v1951
        %v1954 = vmul.f32 %v1952, %v1952
        %v1955 = vsel %vm902, %v1953, 0.0
        %1956 = vadd.xlane.f32.xlu0 %v1955
        %v1957 = vpop.xlane.xlu0 %1956
        %v1958 = vsel %vm902, %v1954, 0.0
        %1959 = vadd.xlane.f32.xlu0 %v1958
        %v1960 = vpop.xlane.xlu0 %1959
        %v1961 = vmul.f32 %v1957, %v1948
        %v1962 = vmul.f32 %v1960, %v1948
        %v1963 = vadd.f32 %v1961, 1e-12
        %v1964 = vadd.f32 %v1962, 1e-12
        %v1965 = vrsqrt.pop %v1963
        %v1966 = vrsqrt.pop %v1964
        %v1967 = vmul.f32 %v1951, %v1965
        %v1968 = vmul.f32 %v1952, %v1966
        %v1970 = vlaneseq
        %v1971 = vshrl.u32 %v1970, 7
        %v1972 = vsub.s32 0, %v1971
        %v1973 = vrot.slane %v1940, %v1972
        %v1975 = vmul.f32 %v1967, %v1973
        %v1976 = vmul.f32 %v1968, %v1973
        %v1978 = vlaneseq
        %v1979 = vshrl.u32 %v1978, 7
        %v1980 = vsub.s32 0, %v1979
        %v1981 = vrot.slane %v1941, %v1980
        %v1983 = vadd.f32 %v1975, %v1981
        %v1984 = vadd.f32 %v1976, %v1981
        %v1985 = vpack.c.bf16 %v1984, %v1983
        %v1986 = vld [vmem:[%s796] sm:$0xf]
        %v1987 = vld [vmem:[%s796 + $0x4] sm:$0xf]
        %v1988 = vld [vmem:[%s796 + $0x8] sm:$0xf]
        %v1989 = vld [vmem:[%s796 + $0xc] sm:$0xf]
        %v1990 = vld [vmem:[%s799] sm:$0x1]
        %v1992 = vlaneseq
        %v1993 = vshrl.u32 %v1992, 7
        %v1994 = vsub.s32 0, %v1993
        %v1995 = vrot.slane %v1990, %v1994
        %v2001 = vunpack.c.l.b16 %v1986
        %v2002 = vunpack.c.l.b16 %v1987
        %v2003 = vunpack.c.l.b16 %v1988
        %v2004 = vunpack.c.l.b16 %v1989
        %v2005 = vpack.c.b16 %v2002, %v2001
        %v2006 = vpack.c.b16 %v2004, %v2003
        %v2010 = vsel %vm902, %v1985, 0
        %2012 = vmatprep.subr.bf16.mxu0 0
        %2013 = vmatpush1.bf16.msra.mxu0 %v2005
        %2014 = vmatprep.subr.bf16.mxu0 0
        %2015 = vmatpush1.bf16.msra.mxu0 %v2006
        %2016 = vmatprep.subr.bf16.mxu0 0
        %2017 = vmatpush1.bf16.msra.mxu0 0
        %2018 = vmatprep.subr.bf16.mxu0 0
        %2019 = vmatpush1.bf16.msra.mxu0 0
        %2020 = vmatprep.subr.bf16.mxu0 0
        %2021 = vmatpush1.bf16.msra.mxu0 0
        %2022 = vmatprep.subr.bf16.mxu0 0
        %2023 = vmatpush1.bf16.msra.mxu0 0
        %2024 = vmatprep.subr.bf16.mxu0 0
        %2025 = vmatpush1.bf16.msra.mxu0 0
        %2026 = vmatprep.subr.bf16.mxu0 0
        %2027 = vmatpush1.bf16.msra.mxu0 0
        %2028 = vmatprep.subr.bf16.mxu0 0
        %2029 = vmatpush1.bf16.msra.mxu0 0
        %2030 = vmatprep.subr.bf16.mxu0 0
        %2031 = vmatpush1.bf16.msra.mxu0 0
        %2032 = vmatprep.subr.bf16.mxu0 0
        %2033 = vmatpush1.bf16.msra.mxu0 0
        %2034 = vmatprep.subr.bf16.mxu0 0
        %2035 = vmatpush1.bf16.msra.mxu0 0
        %2036 = vmatprep.subr.bf16.mxu0 0
        %2037 = vmatpush1.bf16.msra.mxu0 0
        %2038 = vmatprep.subr.bf16.mxu0 0
        %2039 = vmatpush1.bf16.msra.mxu0 0
        %2040 = vmatprep.subr.bf16.mxu0 0
        %2041 = vmatpush1.bf16.msra.mxu0 0
        %2042 = vmatprep.subr.bf16.mxu0 0
        %2043 = vmatpush1.bf16.msra.mxu0 0
        %2044 = vmatprep.mubr.bf16.mxu0 0
        %2045 = vmatmul.mubr.bf16.gmra.mrb[0].mxu0 %v2010
        %v2046 = vpop.f32.mrb[0].mxu0
        %v2047 = vadd.f32 %v1995, %v2046
        %v2048 = vpop.f32.mrb[0].mxu0
        %v2049 = vpop.f32.mrb[0].mxu0
        %v2050 = vadd.f32 %v1995, %v2049
        %v2051 = vpop.f32.mrb[0].mxu0
        %2052 = vdwg.mxu0
        %v2053 = vmul.f32 %v2047, 0.5
        %v2054 = vmul.f32 %v2050, 0.5
        %v2055 = vmul.f32 %v2047, 0.044715
        %v2056 = vmul.f32 %v2050, 0.044715
        %v2057 = vmul.f32 %v2055, %v2047
        %v2058 = vmul.f32 %v2056, %v2050
        %v2059 = vmul.f32 %v2057, %v2047
        %v2060 = vmul.f32 %v2058, %v2050
        %v2061 = vadd.f32 %v2047, %v2059
        %v2062 = vadd.f32 %v2050, %v2060
        %v2063 = vmul.f32 %v2061, 0.7978846
        %v2064 = vmul.f32 %v2062, 0.7978846
        %v2065 = vtanh.pop %v2063
        %v2066 = vtanh.pop %v2064
        %v2067 = vadd.f32 %v2065, 1.0
        %v2068 = vadd.f32 %v2066, 1.0
        %v2069 = vmul.f32 %v2053, %v2067
        %v2070 = vmul.f32 %v2054, %v2068
        %v2071 = vpack.c.bf16 %v2070, %v2069
        %v2072 = vld [vmem:[%s804] sm:$0xf]
        %v2073 = vld [vmem:[%s804 + $0x4] sm:$0xf]
        %v2074 = vld [vmem:[%s804 + $0x8] sm:$0xf]
        %v2075 = vld [vmem:[%s804 + $0xc] sm:$0xf]
        %v2076 = vld [vmem:[%s804 + $0x10] sm:$0xf]
        %v2077 = vld [vmem:[%s804 + $0x14] sm:$0xf]
        %v2078 = vld [vmem:[%s804 + $0x18] sm:$0xf]
        %v2079 = vld [vmem:[%s804 + $0x1c] sm:$0xf]
        %v2080 = vld [vmem:[%s807] sm:$0x1]
        %v2082 = vlaneseq
        %v2083 = vshrl.u32 %v2082, 7
        %v2084 = vsub.s32 0, %v2083
        %v2085 = vrot.slane %v2080, %v2084
        %v2095 = vunpack.c.l.b16 %v2072
        %v2096 = vunpack.c.l.b16 %v2073
        %v2097 = vunpack.c.l.b16 %v2074
        %v2098 = vunpack.c.l.b16 %v2075
        %v2099 = vunpack.c.l.b16 %v2076
        %v2100 = vunpack.c.l.b16 %v2077
        %v2101 = vunpack.c.l.b16 %v2078
        %v2102 = vunpack.c.l.b16 %v2079
        %v2103 = vpack.c.b16 %v2096, %v2095
        %v2104 = vpack.c.b16 %v2098, %v2097
        %v2105 = vpack.c.b16 %v2100, %v2099
        %v2106 = vpack.c.b16 %v2102, %v2101
        %vm2111 = vcmask 523264
        %v2113 = vsel %vm2111, %v2071, 0
        %2115 = vmatprep.subr.bf16.mxu0 0
        %2116 = vmatpush1.bf16.msra.mxu0 %v2103
        %2117 = vmatprep.subr.bf16.mxu0 0
        %2118 = vmatpush1.bf16.msra.mxu0 %v2104
        %2119 = vmatprep.subr.bf16.mxu0 0
        %2120 = vmatpush1.bf16.msra.mxu0 %v2105
        %2121 = vmatprep.subr.bf16.mxu0 0
        %2122 = vmatpush1.bf16.msra.mxu0 %v2106
        %2123 = vmatprep.subr.bf16.mxu0 0
        %2124 = vmatpush1.bf16.msra.mxu0 0
        %2125 = vmatprep.subr.bf16.mxu0 0
        %2126 = vmatpush1.bf16.msra.mxu0 0
        %2127 = vmatprep.subr.bf16.mxu0 0
        %2128 = vmatpush1.bf16.msra.mxu0 0
        %2129 = vmatprep.subr.bf16.mxu0 0
        %2130 = vmatpush1.bf16.msra.mxu0 0
        %2131 = vmatprep.subr.bf16.mxu0 0
        %2132 = vmatpush1.bf16.msra.mxu0 0
        %2133 = vmatprep.subr.bf16.mxu0 0
        %2134 = vmatpush1.bf16.msra.mxu0 0
        %2135 = vmatprep.subr.bf16.mxu0 0
        %2136 = vmatpush1.bf16.msra.mxu0 0
        %2137 = vmatprep.subr.bf16.mxu0 0
        %2138 = vmatpush1.bf16.msra.mxu0 0
        %2139 = vmatprep.subr.bf16.mxu0 0
        %2140 = vmatpush1.bf16.msra.mxu0 0
        %2141 = vmatprep.subr.bf16.mxu0 0
        %2142 = vmatpush1.bf16.msra.mxu0 0
        %2143 = vmatprep.subr.bf16.mxu0 0
        %2144 = vmatpush1.bf16.msra.mxu0 0
        %2145 = vmatprep.subr.bf16.mxu0 0
        %2146 = vmatpush1.bf16.msra.mxu0 0
        %2147 = vmatprep.mubr.bf16.mxu0 0
        %2148 = vmatmul.mubr.bf16.gmra.mrb[0].mxu0 %v2113
        %v2149 = vpop.f32.mrb[0].mxu0
        %v2150 = vadd.f32 %v2085, %v2149
        %v2151 = vpop.f32.mrb[0].mxu0
        %v2152 = vpop.f32.mrb[0].mxu0
        %v2153 = vadd.f32 %v2085, %v2152
        %v2154 = vpop.f32.mrb[0].mxu0
        %2155 = vdwg.mxu0
        %v2156 = vadd.f32 %v2150, %v1983
        %v2157 = vadd.f32 %v2153, %v1984
        %v2158 = vld [vmem:[%s810] sm:$0x1]
        %v2159 = vld [vmem:[%s813] sm:$0x1]
        %v2160 = vsel %vm902, %v2156, 0.0
        %2161 = vadd.xlane.f32.xlu0 %v2160
        %v2162 = vpop.xlane.xlu0 %2161
        %v2163 = vsel %vm902, %v2157, 0.0
        %2164 = vadd.xlane.f32.xlu0 %v2163
        %v2165 = vpop.xlane.xlu0 %2164
        %v2166 = vmul.f32 %v2162, %v1948
        %v2167 = vmul.f32 %v2165, %v1948
        %v2168 = vsub.f32 %v2156, %v2166
        %v2169 = vsub.f32 %v2157, %v2167
        %v2170 = vmul.f32 %v2168, %v2168
        %v2171 = vmul.f32 %v2169, %v2169
        %v2172 = vsel %vm902, %v2170, 0.0
        %2173 = vadd.xlane.f32.xlu0 %v2172
        %v2174 = vpop.xlane.xlu0 %2173
        %v2175 = vsel %vm902, %v2171, 0.0
        %2176 = vadd.xlane.f32.xlu0 %v2175
        %v2177 = vpop.xlane.xlu0 %2176
        %v2178 = vmul.f32 %v2174, %v1948
        %v2179 = vmul.f32 %v2177, %v1948
        %v2180 = vadd.f32 %v2178, 1e-12
        %v2181 = vadd.f32 %v2179, 1e-12
        %v2182 = vrsqrt.pop %v2180
        %v2183 = vrsqrt.pop %v2181
        %v2184 = vmul.f32 %v2168, %v2182
        %v2185 = vmul.f32 %v2169, %v2183
        %v2187 = vlaneseq
        %v2188 = vshrl.u32 %v2187, 7
        %v2189 = vsub.s32 0, %v2188
        %v2190 = vrot.slane %v2158, %v2189
        %v2192 = vmul.f32 %v2184, %v2190
        %v2193 = vmul.f32 %v2185, %v2190
        %v2195 = vlaneseq
        %v2196 = vshrl.u32 %v2195, 7
        %v2197 = vsub.s32 0, %v2196
        %v2198 = vrot.slane %v2159, %v2197
        %v2200 = vadd.f32 %v2192, %v2198
        %v2201 = vadd.f32 %v2193, %v2198
        %2202 = vst.msk [vmem:[#allocation2] sm:$0xff] %vm902, %v2200
        %2203 = vst.msk [vmem:[#allocation2 + $0x8] sm:$0xff] %vm902, %v2201
        %p2204 = scmp.eq.s32.totalorder %s35, 1
        // Predicated region
        $region105: #{bert_forward.1} parent=99 // pred_check
          %p2205 = pneg %p2204
        $region106: #{bert_forward.1} parent=99 // pred_check_branch
          %2207 = sbr.rel (%p2205) target = $region108
        $region107: #{bert_forward.1} parent=99 // pred_region
          %2208 = vst.msk [vmem:[#allocation3] sm:$0xff] %vm902, %v2200
          %2209 = vst.msk [vmem:[#allocation3 + $0x8] sm:$0xff] %vm902, %v2201
          %v2211 = vrot.slane %v2201, 7
          %vm2213 = vcmask 1040384
          %v2214 = vsel %vm2213, %v2200, %v2211
          %v2215 = vpack.c.bf16 %v2214, %v2214
          %v2216 = vld [vmem:[%s18] sm:$0xf]
          %v2217 = vld [vmem:[%s18 + $0x4] sm:$0xf]
          %v2218 = vld [vmem:[%s18 + $0x8] sm:$0xf]
          %v2219 = vld [vmem:[%s18 + $0xc] sm:$0xf]
          %v2220 = vld [vmem:[%s19] sm:$0x1]
          %v2222 = vlaneseq
          %v2223 = vshrl.u32 %v2222, 7
          %v2224 = vsub.s32 0, %v2223
          %v2225 = vrot.slane %v2220, %v2224
          %v2231 = vunpack.c.l.b16 %v2216
          %v2232 = vunpack.c.l.b16 %v2217
          %v2233 = vunpack.c.l.b16 %v2218
          %v2234 = vunpack.c.l.b16 %v2219
          %v2235 = vpack.c.b16 %v2232, %v2231
          %v2236 = vpack.c.b16 %v2234, %v2233
          %v2240 = vsel %vm902, %v2215, 0
          %2242 = vmatprep.subr.bf16.mxu0 0
          %2243 = vmatpush1.bf16.msra.mxu0 %v2235
          %2244 = vmatprep.subr.bf16.mxu0 0
          %2245 = vmatpush1.bf16.msra.mxu0 %v2236
          %2246 = vmatprep.subr.bf16.mxu0 0
          %2247 = vmatpush1.bf16.msra.mxu0 0
          %2248 = vmatprep.subr.bf16.mxu0 0
          %2249 = vmatpush1.bf16.msra.mxu0 0
          %2250 = vmatprep.subr.bf16.mxu0 0
          %2251 = vmatpush1.bf16.msra.mxu0 0
          %2252 = vmatprep.subr.bf16.mxu0 0
          %2253 = vmatpush1.bf16.msra.mxu0 0
          %2254 = vmatprep.subr.bf16.mxu0 0
          %2255 = vmatpush1.bf16.msra.mxu0 0
          %2256 = vmatprep.subr.bf16.mxu0 0
          %2257 = vmatpush1.bf16.msra.mxu0 0
          %2258 = vmatprep.subr.bf16.mxu0 0
          %2259 = vmatpush1.bf16.msra.mxu0 0
          %2260 = vmatprep.subr.bf16.mxu0 0
          %2261 = vmatpush1.bf16.msra.mxu0 0
          %2262 = vmatprep.subr.bf16.mxu0 0
          %2263 = vmatpush1.bf16.msra.mxu0 0
          %2264 = vmatprep.subr.bf16.mxu0 0
          %2265 = vmatpush1.bf16.msra.mxu0 0
          %2266 = vmatprep.subr.bf16.mxu0 0
          %2267 = vmatpush1.bf16.msra.mxu0 0
          %2268 = vmatprep.subr.bf16.mxu0 0
          %2269 = vmatpush1.bf16.msra.mxu0 0
          %2270 = vmatprep.subr.bf16.mxu0 0
          %2271 = vmatpush1.bf16.msra.mxu0 0
          %2272 = vmatprep.subr.bf16.mxu0 0
          %2273 = vmatpush1.bf16.msra.mxu0 0
          %2274 = vmatprep.mubr.bf16.mxu0 0
          %2275 = vmatmul.mubr.bf16.gmra.mrb[0].mxu0 %v2240
          %v2276 = vpop.f32.mrb[0].mxu0
          %v2277 = vadd.f32 %v2225, %v2276
          %v2278 = vpop.f32.mrb[0].mxu0
          %v2279 = vpop.f32.mrb[0].mxu0
          %v2280 = vpop.f32.mrb[0].mxu0
          %2281 = vdwg.mxu0
          %v2282 = vtanh.pop %v2277
          %vm2283 = vcmask 254976
          %2284 = vst.msk [vmem:[#allocation5] sm:$0x3] %vm2283, %v2282
        $region108: #{bert_forward.1} parent=99 // pred_fallthru
          _
        // Predicated region
        $region109: #{bert_forward.1} parent=99 // pred_check
          %p2285 = pneg %p528
        $region110: #{bert_forward.1} parent=99 // pred_check_branch
          %2287 = sbr.rel (%p2285) target = $region112
        $region111: #{bert_forward.1} parent=99 // pred_region
          %s2289 = ssub.s32 256, 256
          %2290 = vsyncadd [#allocation4], %s2289
          %s2291 = sshll.u32 [#allocation3], 4
          %s2292 = int_to_ptr.vmem [resolvable:$true] %s2291
          %2297 = dma.vmem_to_hbm [thread:$0]  %s2292, 256, %s20, [#allocation4], 128, 128, 8
        $region112: #{bert_forward.1} parent=99 // pred_fallthru
          _
        // Predicated region
        $region113: #{bert_forward.1} parent=99 // pred_check
          %p2298 = pneg %p549
        $region114: #{bert_forward.1} parent=99 // pred_check_branch
          %2300 = sbr.rel (%p2298) target = $region116
        $region115: #{bert_forward.1} parent=99 // pred_region
          %s2302 = ssub.s32 32, 32
          %2303 = vsyncadd [#allocation6], %s2302
          %s2305 = sshll.u32 [#allocation5], 4
          %s2306 = int_to_ptr.vmem [resolvable:$true] %s2305
          %2308 = dma.vmem_to_hbm [thread:$0]  %s2306, 32, %s21, [#allocation6]
        $region116: #{bert_forward.1} parent=99 // pred_fallthru
          _
        // Predicated region
        $region117: #{bert_forward.1} parent=99 // pred_check
          %p2309 = pneg %p528
        $region118: #{bert_forward.1} parent=99 // pred_check_branch
          %2311 = sbr.rel (%p2309) target = $region120
        $region119: #{bert_forward.1} parent=99 // pred_region
          %2312 = dma.done [#allocation4], 256
        $region120: #{bert_forward.1} parent=99 // pred_fallthru
          _
        // Predicated region
        $region121: #{bert_forward.1} parent=99 // pred_check
          %p2313 = pneg %p549
        $region122: #{bert_forward.1} parent=99 // pred_check_branch
          %2315 = sbr.rel (%p2313) target = $region124
        $region123: #{bert_forward.1} parent=99 // pred_region
          %2316 = dma.done [#allocation6], 32
        $region124: #{bert_forward.1} parent=99 // pred_fallthru
          _
      $region100: #{bert_forward.1} parent=5 // pred_fallthru
        _
      %p2317 = scmp.le.s32.totalorder 2, %s30
      // Predicated region
      $region125: #{bert_forward.1} parent=5 // pred_check
        %p2318 = pneg %p2317
      $region126: #{bert_forward.1} parent=5 // pred_check_branch
        %2320 = sbr.rel (%p2318) target = $region128
      $region127: #{bert_forward.1} parent=5 // pred_region
        %s2321 = ssub.s32 %s30, 2
      $region128: #{bert_forward.1} parent=5 // pred_fallthru
        _
    $region6: #{bert_forward.1} parent=1 // loop_footer
      %s34 = sadd.s32 1, %s30
    $region7: #{bert_forward.1} parent=1 // loop_footer_branch
      %29 = sbr.rel target = $region3
    $region8: #{bert_forward.1} parent=1 // loop_exit
      _
    %2322 = vsyncpa [#allocation4], 1
    %s2323 = scalar_lea.sflag [#allocation4], 1
    %2324 = vsyncpa %s2323, 1
    %2325 = vsyncpa [#allocation6], 1

</llo_original>
